<compile_context>
chip_gen: v7x
topology: tpu7x:2x2x1
jax: 0.10.0
libtpu: 0.0.40
codegen_flags: <defaults>
</compile_context>

<pallas_src>
import jax
import jax.numpy as jnp
from jax.experimental import pallas as pl
from jax.experimental.pallas import tpu as pltpu

# ---------------- small synthetic config (consistent with the module) -------
HIDDEN = 32          # hidden_size
INTER = 64           # intermediate_size
LAYERS = 2           # num_hidden_layers
HEADS = 4            # num_attention_heads
CHANNELS = 3         # num_channels
IMAGE = 16           # image_size
PATCH = 4            # patch_size
EPS = 1e-6           # layer_norm_eps
HEAD_DIM = HIDDEN // HEADS
SCALE = HEAD_DIM ** (-0.5)
NPATCH = (IMAGE // PATCH) ** 2           # 16 patches == seq_len per image
PATCH_DIM = CHANNELS * PATCH * PATCH     # 48
BATCH = 2

BF16 = jnp.bfloat16


# ---------------- in-kernel math helpers ------------------------------------
def _layernorm(x, w, b, eps):
    mu = jnp.mean(x, axis=-1, keepdims=True)
    var = jnp.mean((x - mu) ** 2, axis=-1, keepdims=True)
    return (x - mu) * jax.lax.rsqrt(var + eps) * w + b


def _gelu_tanh(x):
    c = 0.7978845608028654  # sqrt(2/pi)
    return 0.5 * x * (1.0 + jnp.tanh(c * (x + 0.044715 * x * x * x)))


# ---------------- fused Pallas kernel ----------------------------------------
def fused_vit_kernel(
    patch_ref,      # (1, S, C*P*P) bf16   -- this image's patches
    w_embed_ref,    # (C*P*P, D)    bf16
    bias_pos_ref,   # (S, D)        f32    -- conv bias + positional embedding
    attnw_ref,      # (L, 4D, D)    bf16   -- rows [0:3D) = wqkv^T (q rows pre-scaled), [3D:4D) = wo
    bqkv_ref,       # (L, 3D, 1)    f32    -- fused qkv bias, feature-major column
    mlpw_ref,       # (L, 2D, INTER) bf16  -- rows [0:D) = fc1w, [D:2D) = fc2w^T
    fc1b_ref,       # (L, 1, INTER) f32
    vec_ref,        # (6L+2, D)     f32    -- per layer [ln1w,ln1b,bo,ln2w,ln2b,fc2b], then post_w, post_b
    o_ref,          # (1, S, D)     f32
):
    vec = vec_ref[...]                                   # (6L+2, D), 2 vregs
    row = lambda i: vec[i:i + 1]                         # (1, D) static row slice

    # ---- patch embedding for this image: (S, C*P*P) @ (C*P*P, D) ------------
    x = (
        jnp.dot(patch_ref[0], w_embed_ref[...],
                preferred_element_type=jnp.float32)
        + bias_pos_ref[...]
    )                                                     # (S, D) f32 residual

    # ---- encoder layers: static unroll, all weights VMEM-resident -----------
    for l in range(LAYERS):
        base = 6 * l
        # -------- self-attention block --------
        xn = _layernorm(x, row(base + 0), row(base + 1), EPS)

        attnw_l = attnw_ref[l]                            # (4D, D) bf16
        wqkv_t = attnw_l[0:3 * HIDDEN]                    # (3D, D)  feature-major
        wo = attnw_l[3 * HIDDEN:4 * HIDDEN]               # (D, D)   (in, out)

        # Fused q|k|v projection, feature-major: qkv_t[f, s] = sum_d W[f,d] xn[s,d]
        qkv_t = (
            jnp.einsum("fd,sd->fs", wqkv_t, xn.astype(BF16),
                       preferred_element_type=jnp.float32)
            + bqkv_ref[l]                                 # (3D, 1) lane-broadcast
        )                                                 # (3D, S) f32

        ctx_rows = []
        for h in range(HEADS):                            # static unroll (4)
            lo = h * HEAD_DIM
            # aligned sublane slices -- no masked lane selects
            q_t = qkv_t[lo:lo + HEAD_DIM]                                   # (hd, S)
            k_t = qkv_t[HIDDEN + lo:HIDDEN + lo + HEAD_DIM]                 # (hd, S)
            v_t = qkv_t[2 * HIDDEN + lo:2 * HIDDEN + lo + HEAD_DIM]         # (hd, S)

            # scores: scale already folded into the q weights/bias
            s = jnp.dot(q_t.T.astype(BF16), k_t.astype(BF16),
                        preferred_element_type=jnp.float32)                 # (S, S)
            s = s - jnp.max(s, axis=-1, keepdims=True)    # stable softmax (f32)
            p = jnp.exp(s)
            p = p * pl.reciprocal(jnp.sum(p, axis=-1, keepdims=True),
                                  approx=True)
            # ctx_t[d, q] = sum_k v_t[d, k] * p[q, k]   (A @ B^T form)
            ctx_rows.append(
                jnp.einsum("dk,qk->dq", v_t.astype(BF16), p.astype(BF16),
                           preferred_element_type=jnp.float32))             # (hd, S)

        ctx_t = jnp.concatenate(ctx_rows, axis=0)          # (D, S) sublane concat
        # ONE full-width (K = D) output projection
        attn = jnp.dot(ctx_t.T.astype(BF16), wo,
                       preferred_element_type=jnp.float32)                  # (S, D)
        x = x + attn + row(base + 2)

        # -------- MLP block --------
        xn2 = _layernorm(x, row(base + 3), row(base + 4), EPS)
        mlpw_l = mlpw_ref[l]                               # (2D, INTER) bf16
        fc1w = mlpw_l[0:HIDDEN]                            # (D, INTER)
        fc2w_t = mlpw_l[HIDDEN:2 * HIDDEN]                 # (D, INTER) = fc2w^T

        h1 = (jnp.dot(xn2.astype(BF16), fc1w,
                      preferred_element_type=jnp.float32)
              + fc1b_ref[l])
        h1 = _gelu_tanh(h1)
        x = x + (jnp.einsum("si,oi->so", h1.astype(BF16), fc2w_t,
                            preferred_element_type=jnp.float32)
                 + row(base + 5))

    # ---- post layernorm ----
    o_ref[0] = _layernorm(x, row(6 * LAYERS), row(6 * LAYERS + 1), EPS)


# ---------------- wrappers ----------------------------------------------------
def extract_patches(pixel_values):
    # NCHW -> (B, N_patches, C*P*P); flatten order (c, ph, pw) matches
    # Conv2d weight.reshape(D, -1).  Pure data movement (im2col) stays outside
    # the kernel.
    B, C, H, W = pixel_values.shape
    gh, gw = H // PATCH, W // PATCH
    p = pixel_values.reshape(B, C, gh, PATCH, gw, PATCH)
    p = jnp.transpose(p, (0, 2, 4, 1, 3, 5))
    return p.reshape(B, gh * gw, C * PATCH * PATCH)


def _stack(layers, name):
    return jnp.stack([lp[name] for lp in layers])


def pack_params(params):
    """Trace-time packing of per-layer params into a few stacked arrays."""
    layers = params["layers"]

    # Fused q|k|v weight (softmax scale folded into q), stored feature-major,
    # with the out-projection weight appended: (L, 4D, D).
    wqkv = jnp.concatenate([_stack(layers, "wq") * SCALE,
                            _stack(layers, "wk"),
                            _stack(layers, "wv")], axis=-1)       # (L, D, 3D)
    wqkv_t = jnp.transpose(wqkv, (0, 2, 1))                       # (L, 3D, D)
    attnw = jnp.concatenate([wqkv_t, _stack(layers, "wo")], axis=1)

    bqkv = jnp.concatenate([_stack(layers, "bq") * SCALE,
                            _stack(layers, "bk"),
                            _stack(layers, "bv")], axis=-1)       # (L, 1, 3D)
    bqkv_t = jnp.transpose(bqkv, (0, 2, 1))                       # (L, 3D, 1)

    # MLP weights: fc1 as-is, fc2 transposed so both are (D, INTER): (L, 2D, INTER)
    mlpw = jnp.concatenate([_stack(layers, "fc1w"),
                            jnp.transpose(_stack(layers, "fc2w"), (0, 2, 1))],
                           axis=1)
    fc1b = _stack(layers, "fc1b")                                 # (L, 1, INTER)

    # All (1, D) vectors in one table: per layer [ln1w, ln1b, bo, ln2w, ln2b, fc2b],
    # then post_w, post_b.
    vec = jnp.concatenate(
        [jnp.concatenate([lp["ln1w"], lp["ln1b"], lp["bo"],
                          lp["ln2w"], lp["ln2b"], lp["fc2b"]], axis=0)
         for lp in layers]
        + [params["post_w"], params["post_b"]], axis=0)           # (6L+2, D)

    return (params["w_patch"].astype(BF16),
            (params["b_patch"] + params["pos"]).astype(jnp.float32),  # (S, D)
            attnw.astype(BF16),
            bqkv_t.astype(jnp.float32),
            mlpw.astype(BF16),
            fc1b.astype(jnp.float32),
            vec.astype(jnp.float32))


def siglip_vision_transformer(pixel_values, params):
    B = pixel_values.shape[0]
    patches = extract_patches(pixel_values).astype(BF16)          # (B, S, C*P*P)
    w_embed, bias_pos, attnw, bqkv_t, mlpw, fc1b, vec = pack_params(params)

    out = pl.pallas_call(
        fused_vit_kernel,
        out_shape=jax.ShapeDtypeStruct((B, NPATCH, HIDDEN), jnp.float32),
        grid=(B,),
        in_specs=[
            pl.BlockSpec((1, NPATCH, PATCH_DIM), lambda b: (b, 0, 0)),
            pl.BlockSpec((PATCH_DIM, HIDDEN), lambda b: (0, 0)),
            pl.BlockSpec((NPATCH, HIDDEN), lambda b: (0, 0)),
            pl.BlockSpec((LAYERS, 4 * HIDDEN, HIDDEN), lambda b: (0, 0, 0)),
            pl.BlockSpec((LAYERS, 3 * HIDDEN, 1), lambda b: (0, 0, 0)),
            pl.BlockSpec((LAYERS, 2 * HIDDEN, INTER), lambda b: (0, 0, 0)),
            pl.BlockSpec((LAYERS, 1, INTER), lambda b: (0, 0, 0)),
            pl.BlockSpec((6 * LAYERS + 2, HIDDEN), lambda b: (0, 0)),
        ],
        out_specs=pl.BlockSpec((1, NPATCH, HIDDEN), lambda b: (b, 0, 0)),
        compiler_params=pltpu.CompilerParams(
            dimension_semantics=("parallel",)),
    )(patches, w_embed, bias_pos, attnw, bqkv_t, mlpw, fc1b, vec)
    return out                                                    # (B, S, D)


# ---------------- deterministic parameter init --------------------------------
def init_params(key):
    keys = jax.random.split(key, 8 + 10 * LAYERS)
    it = iter(keys)
    s = 0.05

    def nrm(shape):
        return (s * jax.random.normal(next(it), shape)).astype(jnp.float32)

    params = {
        # Conv2d weight (D, C, P, P) folded to (C*P*P, D) matmul weight.
        "w_patch": nrm((HIDDEN, CHANNELS, PATCH, PATCH)).reshape(HIDDEN, -1).T,
        "b_patch": nrm((1, HIDDEN)),
        "pos": nrm((NPATCH, HIDDEN)),
        "post_w": jnp.ones((1, HIDDEN), jnp.float32),
        "post_b": jnp.zeros((1, HIDDEN), jnp.float32),
        "layers": [],
    }
    for _ in range(LAYERS):
        lp = {
            "ln1w": jnp.ones((1, HIDDEN), jnp.float32),
            "ln1b": jnp.zeros((1, HIDDEN), jnp.float32),
            # nn.Linear weight is (out, in); stored transposed as (in, out).
            "wq": nrm((HIDDEN, HIDDEN)), "bq": nrm((1, HIDDEN)),
            "wk": nrm((HIDDEN, HIDDEN)), "bk": nrm((1, HIDDEN)),
            "wv": nrm((HIDDEN, HIDDEN)), "bv": nrm((1, HIDDEN)),
            "wo": nrm((HIDDEN, HIDDEN)), "bo": nrm((1, HIDDEN)),
            "ln2w": jnp.ones((1, HIDDEN), jnp.float32),
            "ln2b": jnp.zeros((1, HIDDEN), jnp.float32),
            "fc1w": nrm((HIDDEN, INTER)), "fc1b": nrm((1, INTER)),
            "fc2w": nrm((INTER, HIDDEN)), "fc2b": nrm((1, HIDDEN)),
        }
        params["layers"].append(lp)
    return params


# ---------------- plain-JAX f32 reference (for correctness check) -------------
def reference(pixel_values, params):
    def ln(x, w, b):
        mu = jnp.mean(x, -1, keepdims=True)
        var = jnp.mean((x - mu) ** 2, -1, keepdims=True)
        return (x - mu) / jnp.sqrt(var + EPS) * w + b

    x = extract_patches(pixel_values) @ params["w_patch"] + params["b_patch"] + params["pos"]
    B, S, _ = x.shape
    for lp in params["layers"]:
        r = x
        xn = ln(x, lp["ln1w"], lp["ln1b"])
        q = (xn @ lp["wq"] + lp["bq"]).reshape(B, S, HEADS, HEAD_DIM).transpose(0, 2, 1, 3)
        k = (xn @ lp["wk"] + lp["bk"]).reshape(B, S, HEADS, HEAD_DIM).transpose(0, 2, 1, 3)
        v = (xn @ lp["wv"] + lp["bv"]).reshape(B, S, HEADS, HEAD_DIM).transpose(0, 2, 1, 3)
        sc = jnp.einsum("bhqd,bhkd->bhqk", q, k) * SCALE
        p = jax.nn.softmax(sc, axis=-1)
        o = jnp.einsum("bhqk,bhkd->bhqd", p, v).transpose(0, 2, 1, 3).reshape(B, S, HIDDEN)
        x = r + (o @ lp["wo"] + lp["bo"])
        r = x
        xn2 = ln(x, lp["ln2w"], lp["ln2b"])
        h1 = jax.nn.gelu(xn2 @ lp["fc1w"] + lp["fc1b"], approximate=True)
        x = r + (h1 @ lp["fc2w"] + lp["fc2b"])
    return ln(x, params["post_w"], params["post_b"])


# ---------------- main ---------------------------------------------------------
if __name__ == "__main__":
    key = jax.random.PRNGKey(0)
    k_px, k_par = jax.random.split(key)
    pixel_values = jax.random.normal(
        k_px, (BATCH, CHANNELS, IMAGE, IMAGE), dtype=jnp.float32
    )
    params = init_params(k_par)

    fwd = jax.jit(siglip_vision_transformer)
    out = jax.block_until_ready(fwd(pixel_values, params))
    assert out.shape == (BATCH, NPATCH, HIDDEN), out.shape

    ref = jax.block_until_ready(reference(pixel_values, params))
    # bf16 MXU operands (f32 accumulation) + approx EUP reciprocal give ~1%
    # relative deviation from the f32 reference; 5e-2 still catches real bugs
    # (a wrong transpose / missing bias is O(0.1-1)).
    if not jnp.allclose(out, ref, atol=5e-2, rtol=5e-2):
        err = float(jnp.max(jnp.abs(out - ref)))
        raise AssertionError(f"Pallas output does not match reference (max abs err {err})")
    print("KERNEL_OK")
</pallas_src>

<mosaic_0001>
module attributes {stable_mosaic.version = 11 : i64} {
  func.func @fused_vit_kernel(%arg0: i32, %arg1: memref<1x16x48xbf16, #tpu.memory_space<vmem>>, %arg2: memref<48x32xbf16, #tpu.memory_space<vmem>>, %arg3: memref<16x32xf32, #tpu.memory_space<vmem>>, %arg4: memref<2x128x32xbf16, #tpu.memory_space<vmem>>, %arg5: memref<2x96x1xf32, #tpu.memory_space<vmem>>, %arg6: memref<2x64x64xbf16, #tpu.memory_space<vmem>>, %arg7: memref<2x1x64xf32, #tpu.memory_space<vmem>>, %arg8: memref<14x32xf32, #tpu.memory_space<vmem>>, %arg9: memref<1x16x32xf32, #tpu.memory_space<vmem>>) attributes {dimension_semantics = [#tpu.dimension_semantics<parallel>], iteration_bounds = array<i64: 2>, scalar_prefetch = 0 : i64, scratch_operands = 0 : i64, tpu.core_type = #tpu.core_type<tc>, window_params = [{transform_indices = @transform_0, window_bounds = array<i64: 1, 16, 48>}, {pipeline_mode = #tpu.pipeline_mode<synchronous>, transform_indices = @transform_1, window_bounds = array<i64: 48, 32>}, {pipeline_mode = #tpu.pipeline_mode<synchronous>, transform_indices = @transform_2, window_bounds = array<i64: 16, 32>}, {pipeline_mode = #tpu.pipeline_mode<synchronous>, transform_indices = @transform_3, window_bounds = array<i64: 2, 128, 32>}, {pipeline_mode = #tpu.pipeline_mode<synchronous>, transform_indices = @transform_4, window_bounds = array<i64: 2, 96, 1>}, {pipeline_mode = #tpu.pipeline_mode<synchronous>, transform_indices = @transform_5, window_bounds = array<i64: 2, 64, 64>}, {pipeline_mode = #tpu.pipeline_mode<synchronous>, transform_indices = @transform_6, window_bounds = array<i64: 2, 1, 64>}, {pipeline_mode = #tpu.pipeline_mode<synchronous>, transform_indices = @transform_7, window_bounds = array<i64: 14, 32>}, {transform_indices = @transform_8, window_bounds = array<i64: 1, 16, 32>}]} {
    %c0 = arith.constant 0 : index
    %c0_0 = arith.constant 0 : index
    %0 = vector.load %arg8[%c0, %c0_0] : memref<14x32xf32, #tpu.memory_space<vmem>>, vector<14x32xf32>
    %c0_1 = arith.constant 0 : index
    %c0_2 = arith.constant 0 : index
    %c0_3 = arith.constant 0 : index
    %1 = vector.load %arg1[%c0_1, %c0_2, %c0_3] : memref<1x16x48xbf16, #tpu.memory_space<vmem>>, vector<1x16x48xbf16>
    %2 = vector.shape_cast %1 : vector<1x16x48xbf16> to vector<16x48xbf16>
    %c0_4 = arith.constant 0 : index
    %c0_5 = arith.constant 0 : index
    %3 = vector.load %arg2[%c0_4, %c0_5] : memref<48x32xbf16, #tpu.memory_space<vmem>>, vector<48x32xbf16>
    %cst = arith.constant dense<0.000000e+00> : vector<16x32xf32>
    %4 = tpu.matmul %2, %3, %cst {dimension_numbers = #tpu.dot_dimension_numbers<[1], [0], [0], [1], [0, 0, 1, 1], [], []>} : vector<16x48xbf16>, vector<48x32xbf16>, vector<16x32xf32> -> vector<16x32xf32>
    %c0_6 = arith.constant 0 : index
    %c0_7 = arith.constant 0 : index
    %5 = vector.load %arg3[%c0_6, %c0_7] : memref<16x32xf32, #tpu.memory_space<vmem>>, vector<16x32xf32>
    %6 = arith.addf %4, %5 : vector<16x32xf32>
    %7 = vector.extract_strided_slice %0 {offsets = [0, 0], sizes = [1, 32], strides = [1, 1]} : vector<14x32xf32> to vector<1x32xf32>
    %8 = vector.extract_strided_slice %0 {offsets = [1, 0], sizes = [1, 32], strides = [1, 1]} : vector<14x32xf32> to vector<1x32xf32>
    %cst_8 = arith.constant dense<0.000000e+00> : vector<16xf32>
    %9 = vector.multi_reduction <add>, %6, %cst_8 [1] : vector<16x32xf32> to vector<16xf32>
    %10 = vector.shape_cast %9 : vector<16xf32> to vector<16x1xf32>
    %cst_9 = arith.constant 3.200000e+01 : f32
    %11 = vector.broadcast %cst_9 : f32 to vector<16x1xf32>
    %12 = arith.divf %10, %11 : vector<16x1xf32>
    %13 = vector.broadcast %12 : vector<16x1xf32> to vector<16x32xf32>
    %14 = arith.subf %6, %13 : vector<16x32xf32>
    %15 = arith.mulf %14, %14 : vector<16x32xf32>
    %cst_10 = arith.constant dense<0.000000e+00> : vector<16xf32>
    %16 = vector.multi_reduction <add>, %15, %cst_10 [1] : vector<16x32xf32> to vector<16xf32>
    %17 = vector.shape_cast %16 : vector<16xf32> to vector<16x1xf32>
    %cst_11 = arith.constant 3.200000e+01 : f32
    %18 = vector.broadcast %cst_11 : f32 to vector<16x1xf32>
    %19 = arith.divf %17, %18 : vector<16x1xf32>
    %20 = vector.broadcast %12 : vector<16x1xf32> to vector<16x32xf32>
    %21 = arith.subf %6, %20 : vector<16x32xf32>
    %cst_12 = arith.constant 9.99999997E-7 : f32
    %22 = vector.broadcast %cst_12 : f32 to vector<16x1xf32>
    %23 = arith.addf %19, %22 : vector<16x1xf32>
    %24 = math.rsqrt %23 : vector<16x1xf32>
    %25 = vector.broadcast %24 : vector<16x1xf32> to vector<16x32xf32>
    %26 = arith.mulf %21, %25 : vector<16x32xf32>
    %27 = vector.broadcast %7 : vector<1x32xf32> to vector<16x32xf32>
    %28 = arith.mulf %26, %27 : vector<16x32xf32>
    %29 = vector.broadcast %8 : vector<1x32xf32> to vector<16x32xf32>
    %30 = arith.addf %28, %29 : vector<16x32xf32>
    %c0_13 = arith.constant 0 : index
    %c0_14 = arith.constant 0 : index
    %c0_15 = arith.constant 0 : index
    %31 = vector.load %arg4[%c0_13, %c0_14, %c0_15] : memref<2x128x32xbf16, #tpu.memory_space<vmem>>, vector<1x128x32xbf16>
    %32 = vector.shape_cast %31 : vector<1x128x32xbf16> to vector<128x32xbf16>
    %33 = vector.extract_strided_slice %32 {offsets = [0, 0], sizes = [96, 32], strides = [1, 1]} : vector<128x32xbf16> to vector<96x32xbf16>
    %34 = vector.extract_strided_slice %32 {offsets = [96, 0], sizes = [32, 32], strides = [1, 1]} : vector<128x32xbf16> to vector<32x32xbf16>
    %35 = arith.truncf %30 : vector<16x32xf32> to vector<16x32xbf16>
    "tpu.trace_start"() <{level = 10 : i32, message = "fd,sd->fs"}> : () -> ()
    %cst_16 = arith.constant dense<0.000000e+00> : vector<96x16xf32>
    %36 = tpu.matmul %33, %35, %cst_16 {dimension_numbers = #tpu.dot_dimension_numbers<[1], [1], [0], [0], [0, 0, 1, 0], [], []>} : vector<96x32xbf16>, vector<16x32xbf16>, vector<96x16xf32> -> vector<96x16xf32>
    "tpu.trace_stop"() : () -> ()
    %c0_17 = arith.constant 0 : index
    %c0_18 = arith.constant 0 : index
    %c0_19 = arith.constant 0 : index
    %37 = vector.load %arg5[%c0_17, %c0_18, %c0_19] : memref<2x96x1xf32, #tpu.memory_space<vmem>>, vector<1x96x1xf32>
    %38 = vector.shape_cast %37 : vector<1x96x1xf32> to vector<96x1xf32>
    %39 = vector.broadcast %38 : vector<96x1xf32> to vector<96x16xf32>
    %40 = arith.addf %36, %39 : vector<96x16xf32>
    %41 = vector.extract_strided_slice %40 {offsets = [0, 0], sizes = [8, 16], strides = [1, 1]} : vector<96x16xf32> to vector<8x16xf32>
    %42 = vector.extract_strided_slice %40 {offsets = [32, 0], sizes = [8, 16], strides = [1, 1]} : vector<96x16xf32> to vector<8x16xf32>
    %43 = vector.extract_strided_slice %40 {offsets = [64, 0], sizes = [8, 16], strides = [1, 1]} : vector<96x16xf32> to vector<8x16xf32>
    %44 = tpu.transpose %41, [1, 0] : vector<8x16xf32> -> vector<16x8xf32>
    %45 = arith.truncf %44 : vector<16x8xf32> to vector<16x8xbf16>
    %46 = arith.truncf %42 : vector<8x16xf32> to vector<8x16xbf16>
    %cst_20 = arith.constant dense<0.000000e+00> : vector<16x16xf32>
    %47 = tpu.matmul %45, %46, %cst_20 {dimension_numbers = #tpu.dot_dimension_numbers<[1], [0], [0], [1], [0, 0, 1, 1], [], []>} : vector<16x8xbf16>, vector<8x16xbf16>, vector<16x16xf32> -> vector<16x16xf32>
    %cst_21 = arith.constant dense<0xFF800000> : vector<16xf32>
    %48 = vector.multi_reduction <maximumf>, %47, %cst_21 [1] : vector<16x16xf32> to vector<16xf32>
    %49 = vector.shape_cast %48 : vector<16xf32> to vector<16x1xf32>
    %50 = vector.broadcast %49 : vector<16x1xf32> to vector<16x16xf32>
    %51 = arith.subf %47, %50 : vector<16x16xf32>
    %52 = math.exp %51 : vector<16x16xf32>
    %cst_22 = arith.constant dense<0.000000e+00> : vector<16xf32>
    %53 = vector.multi_reduction <add>, %52, %cst_22 [1] : vector<16x16xf32> to vector<16xf32>
    %54 = vector.shape_cast %53 : vector<16xf32> to vector<16x1xf32>
    %55 = tpu.reciprocal %54 {approx = true} : vector<16x1xf32> -> vector<16x1xf32>
    %56 = vector.broadcast %55 : vector<16x1xf32> to vector<16x16xf32>
    %57 = arith.mulf %52, %56 : vector<16x16xf32>
    %58 = arith.truncf %43 : vector<8x16xf32> to vector<8x16xbf16>
    %59 = arith.truncf %57 : vector<16x16xf32> to vector<16x16xbf16>
    "tpu.trace_start"() <{level = 10 : i32, message = "dk,qk->dq"}> : () -> ()
    %cst_23 = arith.constant dense<0.000000e+00> : vector<8x16xf32>
    %60 = tpu.matmul %58, %59, %cst_23 {dimension_numbers = #tpu.dot_dimension_numbers<[1], [1], [0], [0], [0, 0, 1, 0], [], []>} : vector<8x16xbf16>, vector<16x16xbf16>, vector<8x16xf32> -> vector<8x16xf32>
    "tpu.trace_stop"() : () -> ()
    %61 = vector.extract_strided_slice %40 {offsets = [8, 0], sizes = [8, 16], strides = [1, 1]} : vector<96x16xf32> to vector<8x16xf32>
    %62 = vector.extract_strided_slice %40 {offsets = [40, 0], sizes = [8, 16], strides = [1, 1]} : vector<96x16xf32> to vector<8x16xf32>
    %63 = vector.extract_strided_slice %40 {offsets = [72, 0], sizes = [8, 16], strides = [1, 1]} : vector<96x16xf32> to vector<8x16xf32>
    %64 = tpu.transpose %61, [1, 0] : vector<8x16xf32> -> vector<16x8xf32>
    %65 = arith.truncf %64 : vector<16x8xf32> to vector<16x8xbf16>
    %66 = arith.truncf %62 : vector<8x16xf32> to vector<8x16xbf16>
    %cst_24 = arith.constant dense<0.000000e+00> : vector<16x16xf32>
    %67 = tpu.matmul %65, %66, %cst_24 {dimension_numbers = #tpu.dot_dimension_numbers<[1], [0], [0], [1], [0, 0, 1, 1], [], []>} : vector<16x8xbf16>, vector<8x16xbf16>, vector<16x16xf32> -> vector<16x16xf32>
    %cst_25 = arith.constant dense<0xFF800000> : vector<16xf32>
    %68 = vector.multi_reduction <maximumf>, %67, %cst_25 [1] : vector<16x16xf32> to vector<16xf32>
    %69 = vector.shape_cast %68 : vector<16xf32> to vector<16x1xf32>
    %70 = vector.broadcast %69 : vector<16x1xf32> to vector<16x16xf32>
    %71 = arith.subf %67, %70 : vector<16x16xf32>
    %72 = math.exp %71 : vector<16x16xf32>
    %cst_26 = arith.constant dense<0.000000e+00> : vector<16xf32>
    %73 = vector.multi_reduction <add>, %72, %cst_26 [1] : vector<16x16xf32> to vector<16xf32>
    %74 = vector.shape_cast %73 : vector<16xf32> to vector<16x1xf32>
    %75 = tpu.reciprocal %74 {approx = true} : vector<16x1xf32> -> vector<16x1xf32>
    %76 = vector.broadcast %75 : vector<16x1xf32> to vector<16x16xf32>
    %77 = arith.mulf %72, %76 : vector<16x16xf32>
    %78 = arith.truncf %63 : vector<8x16xf32> to vector<8x16xbf16>
    %79 = arith.truncf %77 : vector<16x16xf32> to vector<16x16xbf16>
    "tpu.trace_start"() <{level = 10 : i32, message = "dk,qk->dq"}> : () -> ()
    %cst_27 = arith.constant dense<0.000000e+00> : vector<8x16xf32>
    %80 = tpu.matmul %78, %79, %cst_27 {dimension_numbers = #tpu.dot_dimension_numbers<[1], [1], [0], [0], [0, 0, 1, 0], [], []>} : vector<8x16xbf16>, vector<16x16xbf16>, vector<8x16xf32> -> vector<8x16xf32>
    "tpu.trace_stop"() : () -> ()
    %81 = vector.extract_strided_slice %40 {offsets = [16, 0], sizes = [8, 16], strides = [1, 1]} : vector<96x16xf32> to vector<8x16xf32>
    %82 = vector.extract_strided_slice %40 {offsets = [48, 0], sizes = [8, 16], strides = [1, 1]} : vector<96x16xf32> to vector<8x16xf32>
    %83 = vector.extract_strided_slice %40 {offsets = [80, 0], sizes = [8, 16], strides = [1, 1]} : vector<96x16xf32> to vector<8x16xf32>
    %84 = tpu.transpose %81, [1, 0] : vector<8x16xf32> -> vector<16x8xf32>
    %85 = arith.truncf %84 : vector<16x8xf32> to vector<16x8xbf16>
    %86 = arith.truncf %82 : vector<8x16xf32> to vector<8x16xbf16>
    %cst_28 = arith.constant dense<0.000000e+00> : vector<16x16xf32>
    %87 = tpu.matmul %85, %86, %cst_28 {dimension_numbers = #tpu.dot_dimension_numbers<[1], [0], [0], [1], [0, 0, 1, 1], [], []>} : vector<16x8xbf16>, vector<8x16xbf16>, vector<16x16xf32> -> vector<16x16xf32>
    %cst_29 = arith.constant dense<0xFF800000> : vector<16xf32>
    %88 = vector.multi_reduction <maximumf>, %87, %cst_29 [1] : vector<16x16xf32> to vector<16xf32>
    %89 = vector.shape_cast %88 : vector<16xf32> to vector<16x1xf32>
    %90 = vector.broadcast %89 : vector<16x1xf32> to vector<16x16xf32>
    %91 = arith.subf %87, %90 : vector<16x16xf32>
    %92 = math.exp %91 : vector<16x16xf32>
    %cst_30 = arith.constant dense<0.000000e+00> : vector<16xf32>
    %93 = vector.multi_reduction <add>, %92, %cst_30 [1] : vector<16x16xf32> to vector<16xf32>
    %94 = vector.shape_cast %93 : vector<16xf32> to vector<16x1xf32>
    %95 = tpu.reciprocal %94 {approx = true} : vector<16x1xf32> -> vector<16x1xf32>
    %96 = vector.broadcast %95 : vector<16x1xf32> to vector<16x16xf32>
    %97 = arith.mulf %92, %96 : vector<16x16xf32>
    %98 = arith.truncf %83 : vector<8x16xf32> to vector<8x16xbf16>
    %99 = arith.truncf %97 : vector<16x16xf32> to vector<16x16xbf16>
    "tpu.trace_start"() <{level = 10 : i32, message = "dk,qk->dq"}> : () -> ()
    %cst_31 = arith.constant dense<0.000000e+00> : vector<8x16xf32>
    %100 = tpu.matmul %98, %99, %cst_31 {dimension_numbers = #tpu.dot_dimension_numbers<[1], [1], [0], [0], [0, 0, 1, 0], [], []>} : vector<8x16xbf16>, vector<16x16xbf16>, vector<8x16xf32> -> vector<8x16xf32>
    "tpu.trace_stop"() : () -> ()
    %101 = vector.extract_strided_slice %40 {offsets = [24, 0], sizes = [8, 16], strides = [1, 1]} : vector<96x16xf32> to vector<8x16xf32>
    %102 = vector.extract_strided_slice %40 {offsets = [56, 0], sizes = [8, 16], strides = [1, 1]} : vector<96x16xf32> to vector<8x16xf32>
    %103 = vector.extract_strided_slice %40 {offsets = [88, 0], sizes = [8, 16], strides = [1, 1]} : vector<96x16xf32> to vector<8x16xf32>
    %104 = tpu.transpose %101, [1, 0] : vector<8x16xf32> -> vector<16x8xf32>
    %105 = arith.truncf %104 : vector<16x8xf32> to vector<16x8xbf16>
    %106 = arith.truncf %102 : vector<8x16xf32> to vector<8x16xbf16>
    %cst_32 = arith.constant dense<0.000000e+00> : vector<16x16xf32>
    %107 = tpu.matmul %105, %106, %cst_32 {dimension_numbers = #tpu.dot_dimension_numbers<[1], [0], [0], [1], [0, 0, 1, 1], [], []>} : vector<16x8xbf16>, vector<8x16xbf16>, vector<16x16xf32> -> vector<16x16xf32>
    %cst_33 = arith.constant dense<0xFF800000> : vector<16xf32>
    %108 = vector.multi_reduction <maximumf>, %107, %cst_33 [1] : vector<16x16xf32> to vector<16xf32>
    %109 = vector.shape_cast %108 : vector<16xf32> to vector<16x1xf32>
    %110 = vector.broadcast %109 : vector<16x1xf32> to vector<16x16xf32>
    %111 = arith.subf %107, %110 : vector<16x16xf32>
    %112 = math.exp %111 : vector<16x16xf32>
    %cst_34 = arith.constant dense<0.000000e+00> : vector<16xf32>
    %113 = vector.multi_reduction <add>, %112, %cst_34 [1] : vector<16x16xf32> to vector<16xf32>
    %114 = vector.shape_cast %113 : vector<16xf32> to vector<16x1xf32>
    %115 = tpu.reciprocal %114 {approx = true} : vector<16x1xf32> -> vector<16x1xf32>
    %116 = vector.broadcast %115 : vector<16x1xf32> to vector<16x16xf32>
    %117 = arith.mulf %112, %116 : vector<16x16xf32>
    %118 = arith.truncf %103 : vector<8x16xf32> to vector<8x16xbf16>
    %119 = arith.truncf %117 : vector<16x16xf32> to vector<16x16xbf16>
    "tpu.trace_start"() <{level = 10 : i32, message = "dk,qk->dq"}> : () -> ()
    %cst_35 = arith.constant dense<0.000000e+00> : vector<8x16xf32>
    %120 = tpu.matmul %118, %119, %cst_35 {dimension_numbers = #tpu.dot_dimension_numbers<[1], [1], [0], [0], [0, 0, 1, 0], [], []>} : vector<8x16xbf16>, vector<16x16xbf16>, vector<8x16xf32> -> vector<8x16xf32>
    "tpu.trace_stop"() : () -> ()
    %121 = tpu.concatenate %60, %80, %100, %120 in 0 : vector<8x16xf32>, vector<8x16xf32>, vector<8x16xf32>, vector<8x16xf32> -> vector<32x16xf32>
    %122 = tpu.transpose %121, [1, 0] : vector<32x16xf32> -> vector<16x32xf32>
    %123 = arith.truncf %122 : vector<16x32xf32> to vector<16x32xbf16>
    %cst_36 = arith.constant dense<0.000000e+00> : vector<16x32xf32>
    %124 = tpu.matmul %123, %34, %cst_36 {dimension_numbers = #tpu.dot_dimension_numbers<[1], [0], [0], [1], [0, 0, 1, 1], [], []>} : vector<16x32xbf16>, vector<32x32xbf16>, vector<16x32xf32> -> vector<16x32xf32>
    %125 = arith.addf %6, %124 : vector<16x32xf32>
    %126 = vector.extract_strided_slice %0 {offsets = [2, 0], sizes = [1, 32], strides = [1, 1]} : vector<14x32xf32> to vector<1x32xf32>
    %127 = vector.broadcast %126 : vector<1x32xf32> to vector<16x32xf32>
    %128 = arith.addf %125, %127 : vector<16x32xf32>
    %129 = vector.extract_strided_slice %0 {offsets = [3, 0], sizes = [1, 32], strides = [1, 1]} : vector<14x32xf32> to vector<1x32xf32>
    %130 = vector.extract_strided_slice %0 {offsets = [4, 0], sizes = [1, 32], strides = [1, 1]} : vector<14x32xf32> to vector<1x32xf32>
    %cst_37 = arith.constant dense<0.000000e+00> : vector<16xf32>
    %131 = vector.multi_reduction <add>, %128, %cst_37 [1] : vector<16x32xf32> to vector<16xf32>
    %132 = vector.shape_cast %131 : vector<16xf32> to vector<16x1xf32>
    %cst_38 = arith.constant 3.200000e+01 : f32
    %133 = vector.broadcast %cst_38 : f32 to vector<16x1xf32>
    %134 = arith.divf %132, %133 : vector<16x1xf32>
    %135 = vector.broadcast %134 : vector<16x1xf32> to vector<16x32xf32>
    %136 = arith.subf %128, %135 : vector<16x32xf32>
    %137 = arith.mulf %136, %136 : vector<16x32xf32>
    %cst_39 = arith.constant dense<0.000000e+00> : vector<16xf32>
    %138 = vector.multi_reduction <add>, %137, %cst_39 [1] : vector<16x32xf32> to vector<16xf32>
    %139 = vector.shape_cast %138 : vector<16xf32> to vector<16x1xf32>
    %cst_40 = arith.constant 3.200000e+01 : f32
    %140 = vector.broadcast %cst_40 : f32 to vector<16x1xf32>
    %141 = arith.divf %139, %140 : vector<16x1xf32>
    %142 = vector.broadcast %134 : vector<16x1xf32> to vector<16x32xf32>
    %143 = arith.subf %128, %142 : vector<16x32xf32>
    %cst_41 = arith.constant 9.99999997E-7 : f32
    %144 = vector.broadcast %cst_41 : f32 to vector<16x1xf32>
    %145 = arith.addf %141, %144 : vector<16x1xf32>
    %146 = math.rsqrt %145 : vector<16x1xf32>
    %147 = vector.broadcast %146 : vector<16x1xf32> to vector<16x32xf32>
    %148 = arith.mulf %143, %147 : vector<16x32xf32>
    %149 = vector.broadcast %129 : vector<1x32xf32> to vector<16x32xf32>
    %150 = arith.mulf %148, %149 : vector<16x32xf32>
    %151 = vector.broadcast %130 : vector<1x32xf32> to vector<16x32xf32>
    %152 = arith.addf %150, %151 : vector<16x32xf32>
    %c0_42 = arith.constant 0 : index
    %c0_43 = arith.constant 0 : index
    %c0_44 = arith.constant 0 : index
    %153 = vector.load %arg6[%c0_42, %c0_43, %c0_44] : memref<2x64x64xbf16, #tpu.memory_space<vmem>>, vector<1x64x64xbf16>
    %154 = vector.shape_cast %153 : vector<1x64x64xbf16> to vector<64x64xbf16>
    %155 = vector.extract_strided_slice %154 {offsets = [0, 0], sizes = [32, 64], strides = [1, 1]} : vector<64x64xbf16> to vector<32x64xbf16>
    %156 = vector.extract_strided_slice %154 {offsets = [32, 0], sizes = [32, 64], strides = [1, 1]} : vector<64x64xbf16> to vector<32x64xbf16>
    %157 = arith.truncf %152 : vector<16x32xf32> to vector<16x32xbf16>
    %cst_45 = arith.constant dense<0.000000e+00> : vector<16x64xf32>
    %158 = tpu.matmul %157, %155, %cst_45 {dimension_numbers = #tpu.dot_dimension_numbers<[1], [0], [0], [1], [0, 0, 1, 1], [], []>} : vector<16x32xbf16>, vector<32x64xbf16>, vector<16x64xf32> -> vector<16x64xf32>
    %c0_46 = arith.constant 0 : index
    %c0_47 = arith.constant 0 : index
    %c0_48 = arith.constant 0 : index
    %159 = vector.load %arg7[%c0_46, %c0_47, %c0_48] : memref<2x1x64xf32, #tpu.memory_space<vmem>>, vector<1x1x64xf32>
    %160 = vector.shape_cast %159 : vector<1x1x64xf32> to vector<1x64xf32>
    %161 = vector.broadcast %160 : vector<1x64xf32> to vector<16x64xf32>
    %162 = arith.addf %158, %161 : vector<16x64xf32>
    %cst_49 = arith.constant 5.000000e-01 : f32
    %163 = vector.broadcast %cst_49 : f32 to vector<16x64xf32>
    %164 = arith.mulf %163, %162 : vector<16x64xf32>
    %cst_50 = arith.constant 4.471500e-02 : f32
    %165 = vector.broadcast %cst_50 : f32 to vector<16x64xf32>
    %166 = arith.mulf %165, %162 : vector<16x64xf32>
    %167 = arith.mulf %166, %162 : vector<16x64xf32>
    %168 = arith.mulf %167, %162 : vector<16x64xf32>
    %169 = arith.addf %162, %168 : vector<16x64xf32>
    %cst_51 = arith.constant 0.797884583 : f32
    %170 = vector.broadcast %cst_51 : f32 to vector<16x64xf32>
    %171 = arith.mulf %170, %169 : vector<16x64xf32>
    %172 = math.tanh %171 : vector<16x64xf32>
    %cst_52 = arith.constant 1.000000e+00 : f32
    %173 = vector.broadcast %cst_52 : f32 to vector<16x64xf32>
    %174 = arith.addf %173, %172 : vector<16x64xf32>
    %175 = arith.mulf %164, %174 : vector<16x64xf32>
    %176 = arith.truncf %175 : vector<16x64xf32> to vector<16x64xbf16>
    "tpu.trace_start"() <{level = 10 : i32, message = "si,oi->so"}> : () -> ()
    %cst_53 = arith.constant dense<0.000000e+00> : vector<16x32xf32>
    %177 = tpu.matmul %176, %156, %cst_53 {dimension_numbers = #tpu.dot_dimension_numbers<[1], [1], [0], [0], [0, 0, 1, 0], [], []>} : vector<16x64xbf16>, vector<32x64xbf16>, vector<16x32xf32> -> vector<16x32xf32>
    "tpu.trace_stop"() : () -> ()
    %178 = vector.extract_strided_slice %0 {offsets = [5, 0], sizes = [1, 32], strides = [1, 1]} : vector<14x32xf32> to vector<1x32xf32>
    %179 = vector.broadcast %178 : vector<1x32xf32> to vector<16x32xf32>
    %180 = arith.addf %177, %179 : vector<16x32xf32>
    %181 = arith.addf %128, %180 : vector<16x32xf32>
    %182 = vector.extract_strided_slice %0 {offsets = [6, 0], sizes = [1, 32], strides = [1, 1]} : vector<14x32xf32> to vector<1x32xf32>
    %183 = vector.extract_strided_slice %0 {offsets = [7, 0], sizes = [1, 32], strides = [1, 1]} : vector<14x32xf32> to vector<1x32xf32>
    %cst_54 = arith.constant dense<0.000000e+00> : vector<16xf32>
    %184 = vector.multi_reduction <add>, %181, %cst_54 [1] : vector<16x32xf32> to vector<16xf32>
    %185 = vector.shape_cast %184 : vector<16xf32> to vector<16x1xf32>
    %cst_55 = arith.constant 3.200000e+01 : f32
    %186 = vector.broadcast %cst_55 : f32 to vector<16x1xf32>
    %187 = arith.divf %185, %186 : vector<16x1xf32>
    %188 = vector.broadcast %187 : vector<16x1xf32> to vector<16x32xf32>
    %189 = arith.subf %181, %188 : vector<16x32xf32>
    %190 = arith.mulf %189, %189 : vector<16x32xf32>
    %cst_56 = arith.constant dense<0.000000e+00> : vector<16xf32>
    %191 = vector.multi_reduction <add>, %190, %cst_56 [1] : vector<16x32xf32> to vector<16xf32>
    %192 = vector.shape_cast %191 : vector<16xf32> to vector<16x1xf32>
    %cst_57 = arith.constant 3.200000e+01 : f32
    %193 = vector.broadcast %cst_57 : f32 to vector<16x1xf32>
    %194 = arith.divf %192, %193 : vector<16x1xf32>
    %195 = vector.broadcast %187 : vector<16x1xf32> to vector<16x32xf32>
    %196 = arith.subf %181, %195 : vector<16x32xf32>
    %cst_58 = arith.constant 9.99999997E-7 : f32
    %197 = vector.broadcast %cst_58 : f32 to vector<16x1xf32>
    %198 = arith.addf %194, %197 : vector<16x1xf32>
    %199 = math.rsqrt %198 : vector<16x1xf32>
    %200 = vector.broadcast %199 : vector<16x1xf32> to vector<16x32xf32>
    %201 = arith.mulf %196, %200 : vector<16x32xf32>
    %202 = vector.broadcast %182 : vector<1x32xf32> to vector<16x32xf32>
    %203 = arith.mulf %201, %202 : vector<16x32xf32>
    %204 = vector.broadcast %183 : vector<1x32xf32> to vector<16x32xf32>
    %205 = arith.addf %203, %204 : vector<16x32xf32>
    %c1 = arith.constant 1 : index
    %c0_59 = arith.constant 0 : index
    %c0_60 = arith.constant 0 : index
    %206 = vector.load %arg4[%c1, %c0_59, %c0_60] : memref<2x128x32xbf16, #tpu.memory_space<vmem>>, vector<1x128x32xbf16>
    %207 = vector.shape_cast %206 : vector<1x128x32xbf16> to vector<128x32xbf16>
    %208 = vector.extract_strided_slice %207 {offsets = [0, 0], sizes = [96, 32], strides = [1, 1]} : vector<128x32xbf16> to vector<96x32xbf16>
    %209 = vector.extract_strided_slice %207 {offsets = [96, 0], sizes = [32, 32], strides = [1, 1]} : vector<128x32xbf16> to vector<32x32xbf16>
    %210 = arith.truncf %205 : vector<16x32xf32> to vector<16x32xbf16>
    "tpu.trace_start"() <{level = 10 : i32, message = "fd,sd->fs"}> : () -> ()
    %cst_61 = arith.constant dense<0.000000e+00> : vector<96x16xf32>
    %211 = tpu.matmul %208, %210, %cst_61 {dimension_numbers = #tpu.dot_dimension_numbers<[1], [1], [0], [0], [0, 0, 1, 0], [], []>} : vector<96x32xbf16>, vector<16x32xbf16>, vector<96x16xf32> -> vector<96x16xf32>
    "tpu.trace_stop"() : () -> ()
    %c1_62 = arith.constant 1 : index
    %c0_63 = arith.constant 0 : index
    %c0_64 = arith.constant 0 : index
    %212 = vector.load %arg5[%c1_62, %c0_63, %c0_64] : memref<2x96x1xf32, #tpu.memory_space<vmem>>, vector<1x96x1xf32>
    %213 = vector.shape_cast %212 : vector<1x96x1xf32> to vector<96x1xf32>
    %214 = vector.broadcast %213 : vector<96x1xf32> to vector<96x16xf32>
    %215 = arith.addf %211, %214 : vector<96x16xf32>
    %216 = vector.extract_strided_slice %215 {offsets = [0, 0], sizes = [8, 16], strides = [1, 1]} : vector<96x16xf32> to vector<8x16xf32>
    %217 = vector.extract_strided_slice %215 {offsets = [32, 0], sizes = [8, 16], strides = [1, 1]} : vector<96x16xf32> to vector<8x16xf32>
    %218 = vector.extract_strided_slice %215 {offsets = [64, 0], sizes = [8, 16], strides = [1, 1]} : vector<96x16xf32> to vector<8x16xf32>
    %219 = tpu.transpose %216, [1, 0] : vector<8x16xf32> -> vector<16x8xf32>
    %220 = arith.truncf %219 : vector<16x8xf32> to vector<16x8xbf16>
    %221 = arith.truncf %217 : vector<8x16xf32> to vector<8x16xbf16>
    %cst_65 = arith.constant dense<0.000000e+00> : vector<16x16xf32>
    %222 = tpu.matmul %220, %221, %cst_65 {dimension_numbers = #tpu.dot_dimension_numbers<[1], [0], [0], [1], [0, 0, 1, 1], [], []>} : vector<16x8xbf16>, vector<8x16xbf16>, vector<16x16xf32> -> vector<16x16xf32>
    %cst_66 = arith.constant dense<0xFF800000> : vector<16xf32>
    %223 = vector.multi_reduction <maximumf>, %222, %cst_66 [1] : vector<16x16xf32> to vector<16xf32>
    %224 = vector.shape_cast %223 : vector<16xf32> to vector<16x1xf32>
    %225 = vector.broadcast %224 : vector<16x1xf32> to vector<16x16xf32>
    %226 = arith.subf %222, %225 : vector<16x16xf32>
    %227 = math.exp %226 : vector<16x16xf32>
    %cst_67 = arith.constant dense<0.000000e+00> : vector<16xf32>
    %228 = vector.multi_reduction <add>, %227, %cst_67 [1] : vector<16x16xf32> to vector<16xf32>
    %229 = vector.shape_cast %228 : vector<16xf32> to vector<16x1xf32>
    %230 = tpu.reciprocal %229 {approx = true} : vector<16x1xf32> -> vector<16x1xf32>
    %231 = vector.broadcast %230 : vector<16x1xf32> to vector<16x16xf32>
    %232 = arith.mulf %227, %231 : vector<16x16xf32>
    %233 = arith.truncf %218 : vector<8x16xf32> to vector<8x16xbf16>
    %234 = arith.truncf %232 : vector<16x16xf32> to vector<16x16xbf16>
    "tpu.trace_start"() <{level = 10 : i32, message = "dk,qk->dq"}> : () -> ()
    %cst_68 = arith.constant dense<0.000000e+00> : vector<8x16xf32>
    %235 = tpu.matmul %233, %234, %cst_68 {dimension_numbers = #tpu.dot_dimension_numbers<[1], [1], [0], [0], [0, 0, 1, 0], [], []>} : vector<8x16xbf16>, vector<16x16xbf16>, vector<8x16xf32> -> vector<8x16xf32>
    "tpu.trace_stop"() : () -> ()
    %236 = vector.extract_strided_slice %215 {offsets = [8, 0], sizes = [8, 16], strides = [1, 1]} : vector<96x16xf32> to vector<8x16xf32>
    %237 = vector.extract_strided_slice %215 {offsets = [40, 0], sizes = [8, 16], strides = [1, 1]} : vector<96x16xf32> to vector<8x16xf32>
    %238 = vector.extract_strided_slice %215 {offsets = [72, 0], sizes = [8, 16], strides = [1, 1]} : vector<96x16xf32> to vector<8x16xf32>
    %239 = tpu.transpose %236, [1, 0] : vector<8x16xf32> -> vector<16x8xf32>
    %240 = arith.truncf %239 : vector<16x8xf32> to vector<16x8xbf16>
    %241 = arith.truncf %237 : vector<8x16xf32> to vector<8x16xbf16>
    %cst_69 = arith.constant dense<0.000000e+00> : vector<16x16xf32>
    %242 = tpu.matmul %240, %241, %cst_69 {dimension_numbers = #tpu.dot_dimension_numbers<[1], [0], [0], [1], [0, 0, 1, 1], [], []>} : vector<16x8xbf16>, vector<8x16xbf16>, vector<16x16xf32> -> vector<16x16xf32>
    %cst_70 = arith.constant dense<0xFF800000> : vector<16xf32>
    %243 = vector.multi_reduction <maximumf>, %242, %cst_70 [1] : vector<16x16xf32> to vector<16xf32>
    %244 = vector.shape_cast %243 : vector<16xf32> to vector<16x1xf32>
    %245 = vector.broadcast %244 : vector<16x1xf32> to vector<16x16xf32>
    %246 = arith.subf %242, %245 : vector<16x16xf32>
    %247 = math.exp %246 : vector<16x16xf32>
    %cst_71 = arith.constant dense<0.000000e+00> : vector<16xf32>
    %248 = vector.multi_reduction <add>, %247, %cst_71 [1] : vector<16x16xf32> to vector<16xf32>
    %249 = vector.shape_cast %248 : vector<16xf32> to vector<16x1xf32>
    %250 = tpu.reciprocal %249 {approx = true} : vector<16x1xf32> -> vector<16x1xf32>
    %251 = vector.broadcast %250 : vector<16x1xf32> to vector<16x16xf32>
    %252 = arith.mulf %247, %251 : vector<16x16xf32>
    %253 = arith.truncf %238 : vector<8x16xf32> to vector<8x16xbf16>
    %254 = arith.truncf %252 : vector<16x16xf32> to vector<16x16xbf16>
    "tpu.trace_start"() <{level = 10 : i32, message = "dk,qk->dq"}> : () -> ()
    %cst_72 = arith.constant dense<0.000000e+00> : vector<8x16xf32>
    %255 = tpu.matmul %253, %254, %cst_72 {dimension_numbers = #tpu.dot_dimension_numbers<[1], [1], [0], [0], [0, 0, 1, 0], [], []>} : vector<8x16xbf16>, vector<16x16xbf16>, vector<8x16xf32> -> vector<8x16xf32>
    "tpu.trace_stop"() : () -> ()
    %256 = vector.extract_strided_slice %215 {offsets = [16, 0], sizes = [8, 16], strides = [1, 1]} : vector<96x16xf32> to vector<8x16xf32>
    %257 = vector.extract_strided_slice %215 {offsets = [48, 0], sizes = [8, 16], strides = [1, 1]} : vector<96x16xf32> to vector<8x16xf32>
    %258 = vector.extract_strided_slice %215 {offsets = [80, 0], sizes = [8, 16], strides = [1, 1]} : vector<96x16xf32> to vector<8x16xf32>
    %259 = tpu.transpose %256, [1, 0] : vector<8x16xf32> -> vector<16x8xf32>
    %260 = arith.truncf %259 : vector<16x8xf32> to vector<16x8xbf16>
    %261 = arith.truncf %257 : vector<8x16xf32> to vector<8x16xbf16>
    %cst_73 = arith.constant dense<0.000000e+00> : vector<16x16xf32>
    %262 = tpu.matmul %260, %261, %cst_73 {dimension_numbers = #tpu.dot_dimension_numbers<[1], [0], [0], [1], [0, 0, 1, 1], [], []>} : vector<16x8xbf16>, vector<8x16xbf16>, vector<16x16xf32> -> vector<16x16xf32>
    %cst_74 = arith.constant dense<0xFF800000> : vector<16xf32>
    %263 = vector.multi_reduction <maximumf>, %262, %cst_74 [1] : vector<16x16xf32> to vector<16xf32>
    %264 = vector.shape_cast %263 : vector<16xf32> to vector<16x1xf32>
    %265 = vector.broadcast %264 : vector<16x1xf32> to vector<16x16xf32>
    %266 = arith.subf %262, %265 : vector<16x16xf32>
    %267 = math.exp %266 : vector<16x16xf32>
    %cst_75 = arith.constant dense<0.000000e+00> : vector<16xf32>
    %268 = vector.multi_reduction <add>, %267, %cst_75 [1] : vector<16x16xf32> to vector<16xf32>
    %269 = vector.shape_cast %268 : vector<16xf32> to vector<16x1xf32>
    %270 = tpu.reciprocal %269 {approx = true} : vector<16x1xf32> -> vector<16x1xf32>
    %271 = vector.broadcast %270 : vector<16x1xf32> to vector<16x16xf32>
    %272 = arith.mulf %267, %271 : vector<16x16xf32>
    %273 = arith.truncf %258 : vector<8x16xf32> to vector<8x16xbf16>
    %274 = arith.truncf %272 : vector<16x16xf32> to vector<16x16xbf16>
    "tpu.trace_start"() <{level = 10 : i32, message = "dk,qk->dq"}> : () -> ()
    %cst_76 = arith.constant dense<0.000000e+00> : vector<8x16xf32>
    %275 = tpu.matmul %273, %274, %cst_76 {dimension_numbers = #tpu.dot_dimension_numbers<[1], [1], [0], [0], [0, 0, 1, 0], [], []>} : vector<8x16xbf16>, vector<16x16xbf16>, vector<8x16xf32> -> vector<8x16xf32>
    "tpu.trace_stop"() : () -> ()
    %276 = vector.extract_strided_slice %215 {offsets = [24, 0], sizes = [8, 16], strides = [1, 1]} : vector<96x16xf32> to vector<8x16xf32>
    %277 = vector.extract_strided_slice %215 {offsets = [56, 0], sizes = [8, 16], strides = [1, 1]} : vector<96x16xf32> to vector<8x16xf32>
    %278 = vector.extract_strided_slice %215 {offsets = [88, 0], sizes = [8, 16], strides = [1, 1]} : vector<96x16xf32> to vector<8x16xf32>
    %279 = tpu.transpose %276, [1, 0] : vector<8x16xf32> -> vector<16x8xf32>
    %280 = arith.truncf %279 : vector<16x8xf32> to vector<16x8xbf16>
    %281 = arith.truncf %277 : vector<8x16xf32> to vector<8x16xbf16>
    %cst_77 = arith.constant dense<0.000000e+00> : vector<16x16xf32>
    %282 = tpu.matmul %280, %281, %cst_77 {dimension_numbers = #tpu.dot_dimension_numbers<[1], [0], [0], [1], [0, 0, 1, 1], [], []>} : vector<16x8xbf16>, vector<8x16xbf16>, vector<16x16xf32> -> vector<16x16xf32>
    %cst_78 = arith.constant dense<0xFF800000> : vector<16xf32>
    %283 = vector.multi_reduction <maximumf>, %282, %cst_78 [1] : vector<16x16xf32> to vector<16xf32>
    %284 = vector.shape_cast %283 : vector<16xf32> to vector<16x1xf32>
    %285 = vector.broadcast %284 : vector<16x1xf32> to vector<16x16xf32>
    %286 = arith.subf %282, %285 : vector<16x16xf32>
    %287 = math.exp %286 : vector<16x16xf32>
    %cst_79 = arith.constant dense<0.000000e+00> : vector<16xf32>
    %288 = vector.multi_reduction <add>, %287, %cst_79 [1] : vector<16x16xf32> to vector<16xf32>
    %289 = vector.shape_cast %288 : vector<16xf32> to vector<16x1xf32>
    %290 = tpu.reciprocal %289 {approx = true} : vector<16x1xf32> -> vector<16x1xf32>
    %291 = vector.broadcast %290 : vector<16x1xf32> to vector<16x16xf32>
    %292 = arith.mulf %287, %291 : vector<16x16xf32>
    %293 = arith.truncf %278 : vector<8x16xf32> to vector<8x16xbf16>
    %294 = arith.truncf %292 : vector<16x16xf32> to vector<16x16xbf16>
    "tpu.trace_start"() <{level = 10 : i32, message = "dk,qk->dq"}> : () -> ()
    %cst_80 = arith.constant dense<0.000000e+00> : vector<8x16xf32>
    %295 = tpu.matmul %293, %294, %cst_80 {dimension_numbers = #tpu.dot_dimension_numbers<[1], [1], [0], [0], [0, 0, 1, 0], [], []>} : vector<8x16xbf16>, vector<16x16xbf16>, vector<8x16xf32> -> vector<8x16xf32>
    "tpu.trace_stop"() : () -> ()
    %296 = tpu.concatenate %235, %255, %275, %295 in 0 : vector<8x16xf32>, vector<8x16xf32>, vector<8x16xf32>, vector<8x16xf32> -> vector<32x16xf32>
    %297 = tpu.transpose %296, [1, 0] : vector<32x16xf32> -> vector<16x32xf32>
    %298 = arith.truncf %297 : vector<16x32xf32> to vector<16x32xbf16>
    %cst_81 = arith.constant dense<0.000000e+00> : vector<16x32xf32>
    %299 = tpu.matmul %298, %209, %cst_81 {dimension_numbers = #tpu.dot_dimension_numbers<[1], [0], [0], [1], [0, 0, 1, 1], [], []>} : vector<16x32xbf16>, vector<32x32xbf16>, vector<16x32xf32> -> vector<16x32xf32>
    %300 = arith.addf %181, %299 : vector<16x32xf32>
    %301 = vector.extract_strided_slice %0 {offsets = [8, 0], sizes = [1, 32], strides = [1, 1]} : vector<14x32xf32> to vector<1x32xf32>
    %302 = vector.broadcast %301 : vector<1x32xf32> to vector<16x32xf32>
    %303 = arith.addf %300, %302 : vector<16x32xf32>
    %304 = vector.extract_strided_slice %0 {offsets = [9, 0], sizes = [1, 32], strides = [1, 1]} : vector<14x32xf32> to vector<1x32xf32>
    %305 = vector.extract_strided_slice %0 {offsets = [10, 0], sizes = [1, 32], strides = [1, 1]} : vector<14x32xf32> to vector<1x32xf32>
    %cst_82 = arith.constant dense<0.000000e+00> : vector<16xf32>
    %306 = vector.multi_reduction <add>, %303, %cst_82 [1] : vector<16x32xf32> to vector<16xf32>
    %307 = vector.shape_cast %306 : vector<16xf32> to vector<16x1xf32>
    %cst_83 = arith.constant 3.200000e+01 : f32
    %308 = vector.broadcast %cst_83 : f32 to vector<16x1xf32>
    %309 = arith.divf %307, %308 : vector<16x1xf32>
    %310 = vector.broadcast %309 : vector<16x1xf32> to vector<16x32xf32>
    %311 = arith.subf %303, %310 : vector<16x32xf32>
    %312 = arith.mulf %311, %311 : vector<16x32xf32>
    %cst_84 = arith.constant dense<0.000000e+00> : vector<16xf32>
    %313 = vector.multi_reduction <add>, %312, %cst_84 [1] : vector<16x32xf32> to vector<16xf32>
    %314 = vector.shape_cast %313 : vector<16xf32> to vector<16x1xf32>
    %cst_85 = arith.constant 3.200000e+01 : f32
    %315 = vector.broadcast %cst_85 : f32 to vector<16x1xf32>
    %316 = arith.divf %314, %315 : vector<16x1xf32>
    %317 = vector.broadcast %309 : vector<16x1xf32> to vector<16x32xf32>
    %318 = arith.subf %303, %317 : vector<16x32xf32>
    %cst_86 = arith.constant 9.99999997E-7 : f32
    %319 = vector.broadcast %cst_86 : f32 to vector<16x1xf32>
    %320 = arith.addf %316, %319 : vector<16x1xf32>
    %321 = math.rsqrt %320 : vector<16x1xf32>
    %322 = vector.broadcast %321 : vector<16x1xf32> to vector<16x32xf32>
    %323 = arith.mulf %318, %322 : vector<16x32xf32>
    %324 = vector.broadcast %304 : vector<1x32xf32> to vector<16x32xf32>
    %325 = arith.mulf %323, %324 : vector<16x32xf32>
    %326 = vector.broadcast %305 : vector<1x32xf32> to vector<16x32xf32>
    %327 = arith.addf %325, %326 : vector<16x32xf32>
    %c1_87 = arith.constant 1 : index
    %c0_88 = arith.constant 0 : index
    %c0_89 = arith.constant 0 : index
    %328 = vector.load %arg6[%c1_87, %c0_88, %c0_89] : memref<2x64x64xbf16, #tpu.memory_space<vmem>>, vector<1x64x64xbf16>
    %329 = vector.shape_cast %328 : vector<1x64x64xbf16> to vector<64x64xbf16>
    %330 = vector.extract_strided_slice %329 {offsets = [0, 0], sizes = [32, 64], strides = [1, 1]} : vector<64x64xbf16> to vector<32x64xbf16>
    %331 = vector.extract_strided_slice %329 {offsets = [32, 0], sizes = [32, 64], strides = [1, 1]} : vector<64x64xbf16> to vector<32x64xbf16>
    %332 = arith.truncf %327 : vector<16x32xf32> to vector<16x32xbf16>
    %cst_90 = arith.constant dense<0.000000e+00> : vector<16x64xf32>
    %333 = tpu.matmul %332, %330, %cst_90 {dimension_numbers = #tpu.dot_dimension_numbers<[1], [0], [0], [1], [0, 0, 1, 1], [], []>} : vector<16x32xbf16>, vector<32x64xbf16>, vector<16x64xf32> -> vector<16x64xf32>
    %c1_91 = arith.constant 1 : index
    %c0_92 = arith.constant 0 : index
    %c0_93 = arith.constant 0 : index
    %334 = vector.load %arg7[%c1_91, %c0_92, %c0_93] : memref<2x1x64xf32, #tpu.memory_space<vmem>>, vector<1x1x64xf32>
    %335 = vector.shape_cast %334 : vector<1x1x64xf32> to vector<1x64xf32>
    %336 = vector.broadcast %335 : vector<1x64xf32> to vector<16x64xf32>
    %337 = arith.addf %333, %336 : vector<16x64xf32>
    %cst_94 = arith.constant 5.000000e-01 : f32
    %338 = vector.broadcast %cst_94 : f32 to vector<16x64xf32>
    %339 = arith.mulf %338, %337 : vector<16x64xf32>
    %cst_95 = arith.constant 4.471500e-02 : f32
    %340 = vector.broadcast %cst_95 : f32 to vector<16x64xf32>
    %341 = arith.mulf %340, %337 : vector<16x64xf32>
    %342 = arith.mulf %341, %337 : vector<16x64xf32>
    %343 = arith.mulf %342, %337 : vector<16x64xf32>
    %344 = arith.addf %337, %343 : vector<16x64xf32>
    %cst_96 = arith.constant 0.797884583 : f32
    %345 = vector.broadcast %cst_96 : f32 to vector<16x64xf32>
    %346 = arith.mulf %345, %344 : vector<16x64xf32>
    %347 = math.tanh %346 : vector<16x64xf32>
    %cst_97 = arith.constant 1.000000e+00 : f32
    %348 = vector.broadcast %cst_97 : f32 to vector<16x64xf32>
    %349 = arith.addf %348, %347 : vector<16x64xf32>
    %350 = arith.mulf %339, %349 : vector<16x64xf32>
    %351 = arith.truncf %350 : vector<16x64xf32> to vector<16x64xbf16>
    "tpu.trace_start"() <{level = 10 : i32, message = "si,oi->so"}> : () -> ()
    %cst_98 = arith.constant dense<0.000000e+00> : vector<16x32xf32>
    %352 = tpu.matmul %351, %331, %cst_98 {dimension_numbers = #tpu.dot_dimension_numbers<[1], [1], [0], [0], [0, 0, 1, 0], [], []>} : vector<16x64xbf16>, vector<32x64xbf16>, vector<16x32xf32> -> vector<16x32xf32>
    "tpu.trace_stop"() : () -> ()
    %353 = vector.extract_strided_slice %0 {offsets = [11, 0], sizes = [1, 32], strides = [1, 1]} : vector<14x32xf32> to vector<1x32xf32>
    %354 = vector.broadcast %353 : vector<1x32xf32> to vector<16x32xf32>
    %355 = arith.addf %352, %354 : vector<16x32xf32>
    %356 = arith.addf %303, %355 : vector<16x32xf32>
    %357 = vector.extract_strided_slice %0 {offsets = [12, 0], sizes = [1, 32], strides = [1, 1]} : vector<14x32xf32> to vector<1x32xf32>
    %358 = vector.extract_strided_slice %0 {offsets = [13, 0], sizes = [1, 32], strides = [1, 1]} : vector<14x32xf32> to vector<1x32xf32>
    %cst_99 = arith.constant dense<0.000000e+00> : vector<16xf32>
    %359 = vector.multi_reduction <add>, %356, %cst_99 [1] : vector<16x32xf32> to vector<16xf32>
    %360 = vector.shape_cast %359 : vector<16xf32> to vector<16x1xf32>
    %cst_100 = arith.constant 3.200000e+01 : f32
    %361 = vector.broadcast %cst_100 : f32 to vector<16x1xf32>
    %362 = arith.divf %360, %361 : vector<16x1xf32>
    %363 = vector.broadcast %362 : vector<16x1xf32> to vector<16x32xf32>
    %364 = arith.subf %356, %363 : vector<16x32xf32>
    %365 = arith.mulf %364, %364 : vector<16x32xf32>
    %cst_101 = arith.constant dense<0.000000e+00> : vector<16xf32>
    %366 = vector.multi_reduction <add>, %365, %cst_101 [1] : vector<16x32xf32> to vector<16xf32>
    %367 = vector.shape_cast %366 : vector<16xf32> to vector<16x1xf32>
    %cst_102 = arith.constant 3.200000e+01 : f32
    %368 = vector.broadcast %cst_102 : f32 to vector<16x1xf32>
    %369 = arith.divf %367, %368 : vector<16x1xf32>
    %370 = vector.broadcast %362 : vector<16x1xf32> to vector<16x32xf32>
    %371 = arith.subf %356, %370 : vector<16x32xf32>
    %cst_103 = arith.constant 9.99999997E-7 : f32
    %372 = vector.broadcast %cst_103 : f32 to vector<16x1xf32>
    %373 = arith.addf %369, %372 : vector<16x1xf32>
    %374 = math.rsqrt %373 : vector<16x1xf32>
    %375 = vector.broadcast %374 : vector<16x1xf32> to vector<16x32xf32>
    %376 = arith.mulf %371, %375 : vector<16x32xf32>
    %377 = vector.broadcast %357 : vector<1x32xf32> to vector<16x32xf32>
    %378 = arith.mulf %376, %377 : vector<16x32xf32>
    %379 = vector.broadcast %358 : vector<1x32xf32> to vector<16x32xf32>
    %380 = arith.addf %378, %379 : vector<16x32xf32>
    %c0_104 = arith.constant 0 : index
    %c0_105 = arith.constant 0 : index
    %c0_106 = arith.constant 0 : index
    %381 = vector.load %arg9[%c0_104, %c0_105, %c0_106] : memref<1x16x32xf32, #tpu.memory_space<vmem>>, vector<1x16x32xf32>
    %382 = vector.shape_cast %381 : vector<1x16x32xf32> to vector<16x32xf32>
    %383 = vector.shape_cast %380 : vector<16x32xf32> to vector<1x16x32xf32>
    tpu.vector_store %arg9[%c0_104, %c0_105, %c0_106], %383 {strides = array<i32>} : memref<1x16x32xf32, #tpu.memory_space<vmem>>, vector<1x16x32xf32>,
    return
  }
  func.func @transform_0(%arg0: i32) -> (i32, i32, i32) {
    %c0_i32 = arith.constant 0 : i32
    %c0_i32_0 = arith.constant 0 : i32
    %c0_i32_1 = arith.constant 0 : i32
    return %arg0, %c0_i32, %c0_i32_0 : i32, i32, i32
  }
  func.func @transform_1(%arg0: i32) -> (i32, i32) {
    %c0_i32 = arith.constant 0 : i32
    %c0_i32_0 = arith.constant 0 : i32
    %c0_i32_1 = arith.constant 0 : i32
    return %c0_i32, %c0_i32_0 : i32, i32
  }
  func.func @transform_2(%arg0: i32) -> (i32, i32) {
    %c0_i32 = arith.constant 0 : i32
    %c0_i32_0 = arith.constant 0 : i32
    %c0_i32_1 = arith.constant 0 : i32
    return %c0_i32, %c0_i32_0 : i32, i32
  }
  func.func @transform_3(%arg0: i32) -> (i32, i32, i32) {
    %c0_i32 = arith.constant 0 : i32
    %c0_i32_0 = arith.constant 0 : i32
    %c0_i32_1 = arith.constant 0 : i32
    %c0_i32_2 = arith.constant 0 : i32
    return %c0_i32, %c0_i32_0, %c0_i32_1 : i32, i32, i32
  }
  func.func @transform_4(%arg0: i32) -> (i32, i32, i32) {
    %c0_i32 = arith.constant 0 : i32
    %c0_i32_0 = arith.constant 0 : i32
    %c0_i32_1 = arith.constant 0 : i32
    %c0_i32_2 = arith.constant 0 : i32
    return %c0_i32, %c0_i32_0, %c0_i32_1 : i32, i32, i32
  }
  func.func @transform_5(%arg0: i32) -> (i32, i32, i32) {
    %c0_i32 = arith.constant 0 : i32
    %c0_i32_0 = arith.constant 0 : i32
    %c0_i32_1 = arith.constant 0 : i32
    %c0_i32_2 = arith.constant 0 : i32
    return %c0_i32, %c0_i32_0, %c0_i32_1 : i32, i32, i32
  }
  func.func @transform_6(%arg0: i32) -> (i32, i32, i32) {
    %c0_i32 = arith.constant 0 : i32
    %c0_i32_0 = arith.constant 0 : i32
    %c0_i32_1 = arith.constant 0 : i32
    %c0_i32_2 = arith.constant 0 : i32
    return %c0_i32, %c0_i32_0, %c0_i32_1 : i32, i32, i32
  }
  func.func @transform_7(%arg0: i32) -> (i32, i32) {
    %c0_i32 = arith.constant 0 : i32
    %c0_i32_0 = arith.constant 0 : i32
    %c0_i32_1 = arith.constant 0 : i32
    return %c0_i32, %c0_i32_0 : i32, i32
  }
  func.func @transform_8(%arg0: i32) -> (i32, i32, i32) {
    %c0_i32 = arith.constant 0 : i32
    %c0_i32_0 = arith.constant 0 : i32
    %c0_i32_1 = arith.constant 0 : i32
    return %arg0, %c0_i32, %c0_i32_0 : i32, i32, i32
  }
}

</mosaic_0001>

<llo_original>
// kernel: siglip_vision_transformer.1
$region0: #{siglip_vision_transformer.1}
  #allocation0 [shape = 'u32[]', space=smem, size = 0x4, offset = 0x4, fixed_abs, tag = 'smem constant byte address 0x4 - core index']
  #allocation1 [shape = 'u32[144,128]{1,0:T(1,128)}', space=vmem, size = 0x12000, scoped, tag = 'internal scratch']
  %s0 = inlined_call_operand.vmem [shape: bf16[2,16,48], index: 0, kind: input, shape index: {}]
  %s1 = inlined_call_operand.vmem [shape: bf16[48,32], index: 1, kind: input, shape index: {}]
  %s2 = inlined_call_operand.vmem [shape: f32[16,32], index: 2, kind: input, shape index: {}]
  %s3 = inlined_call_operand.vmem [shape: bf16[2,128,32], index: 3, kind: input, shape index: {}]
  %s4 = inlined_call_operand.vmem [shape: f32[2,96,1], index: 4, kind: input, shape index: {}]
  %s5 = inlined_call_operand.vmem [shape: bf16[2,64,64], index: 5, kind: input, shape index: {}]
  %s6 = inlined_call_operand.vmem [shape: f32[2,1,64], index: 6, kind: input, shape index: {}]
  %s7 = inlined_call_operand.vmem [shape: f32[14,32], index: 7, kind: input, shape index: {}]
  %s8 = inlined_call_operand.hbm [shape: f32[2,16,32], index: 8, kind: output, shape index: {}]
  %s9 = sld [smem:[#allocation0]]
  $region65: #{siglip_vision_transformer.1} parent=0
    _
  %s11 = ssub.s32 1, %s9
  %s12 = scalar_select 0, %s11, %s9
  $region1: #{siglip_vision_transformer.1} parent=0
    #allocation2 [shape = 'u8[16384]{0}', space=vmem, size = 0x4000, scoped, tag = 'output window, operand 0']
    #allocation3 [shape = 's32[2]{0}', space=sflag, size = 0x8, scoped, tag = 'scoped memory for siglip_vision_transformer.1']
    %13 = vsyncpa [#allocation3], 0
    %s14 = scalar_lea.sflag [#allocation3], 1
    %15 = vsyncpa %s14, 0
    loop: start=0, step=1, limit=4
    $region2: #{siglip_vision_transformer.1} parent=1 // loop_pre_header
      _
    $region3: #{siglip_vision_transformer.1} parent=1 // loop_header
      %s17 = sphi 0, %s21
      %p18 = scmp.ge.s32.totalorder %s17, 4
      %s27 = sphi 0, %s29
      %s30 = sphi 0, %s27
      %s31 = sphi 0, %s30
      %s47 = sphi 0, %s31
      %s51 = sphi 0, %s51
      %s53 = sphi 0, %s51
      %s54 = sphi 0, %s53
      %s68 = sphi 0, %s54
      %s72 = sphi 0, %s72
      %s74 = sphi 0, %s72
      %s75 = sphi 0, %s74
      %s89 = sphi 0, %s75
      %s93 = sphi 0, %s93
      %s95 = sphi 0, %s93
      %s96 = sphi 0, %s95
      %s110 = sphi 0, %s96
      %s114 = sphi 0, %s114
      %s116 = sphi 0, %s114
      %s117 = sphi 0, %s116
      %s131 = sphi 0, %s117
      %s135 = sphi 0, %s135
      %s137 = sphi 0, %s135
      %s138 = sphi 0, %s137
      %s152 = sphi 0, %s138
      %s156 = sphi 0, %s156
      %s158 = sphi 0, %s156
      %s159 = sphi 0, %s158
      %s173 = sphi 0, %s159
      %s177 = sphi 0, %s177
      %s179 = sphi 0, %s177
      %s180 = sphi 0, %s179
      %s194 = sphi 0, %s180
      %s200 = sphi 0, %s202
      %s203 = sphi 0, %s200
      %s204 = sphi 0, %s203
      %s220 = sphi 0, %s204
    $region4: #{siglip_vision_transformer.1} parent=1 // loop_header_branch
      %20 = sbr.rel (%p18) target = $region8
    $region5: #{siglip_vision_transformer.1} parent=1 // loop_body
      %s22 = ssub.s32 %s17, 1
      %s23 = ssub.s32 %s17, 2
      %s24 = sadd.s32 %s17, 1
      %s25 = ssub.s32 %s17, %s24
      %p26 = scmp.eq.s32.totalorder %s25, 0
      %s28 = sadd.s32 %s27, 1
      %s29 = scalar_select %p26, %s27, %s28
      %p32 = pneg %p26
      %p33 = scmp.eq.s32.totalorder %s17, 1
      %p34 = por %p32, %p33
      %p35 = scmp.ne.s32.totalorder %s27, %s30
      %p36 = scmp.eq.s32.totalorder %s17, 0
      %p37 = por %p35, %p36
      %p38 = scmp.ne.s32.totalorder %s27, %s30
      %p39 = scmp.eq.s32.totalorder %s22, 1
      %p40 = por %p38, %p39
      %p41 = scmp.ne.s32.totalorder %s30, %s31
      %p42 = scmp.eq.s32.totalorder %s22, 0
      %p43 = por %p41, %p42
      %p44 = scmp.ne.s32.totalorder %s30, %s31
      %p45 = scmp.eq.s32.totalorder %s23, 1
      %p46 = por %p44, %p45
      %p48 = scmp.ne.s32.totalorder %s31, %s47
      %p49 = scmp.eq.s32.totalorder %s23, 0
      %p50 = por %p48, %p49
      %s52 = sadd.s32 %s51, 1
      %p55 = scmp.eq.s32.totalorder %s17, 1
      %p56 = scmp.ne.s32.totalorder %s51, %s53
      %p57 = scmp.eq.s32.totalorder %s17, 0
      %p58 = por %p56, %p57
      %p59 = scmp.ne.s32.totalorder %s51, %s53
      %p60 = scmp.eq.s32.totalorder %s22, 1
      %p61 = por %p59, %p60
      %p62 = scmp.ne.s32.totalorder %s53, %s54
      %p63 = scmp.eq.s32.totalorder %s22, 0
      %p64 = por %p62, %p63
      %p65 = scmp.ne.s32.totalorder %s53, %s54
      %p66 = scmp.eq.s32.totalorder %s23, 1
      %p67 = por %p65, %p66
      %p69 = scmp.ne.s32.totalorder %s54, %s68
      %p70 = scmp.eq.s32.totalorder %s23, 0
      %p71 = por %p69, %p70
      %s73 = sadd.s32 %s72, 1
      %p76 = scmp.eq.s32.totalorder %s17, 1
      %p77 = scmp.ne.s32.totalorder %s72, %s74
      %p78 = scmp.eq.s32.totalorder %s17, 0
      %p79 = por %p77, %p78
      %p80 = scmp.ne.s32.totalorder %s72, %s74
      %p81 = scmp.eq.s32.totalorder %s22, 1
      %p82 = por %p80, %p81
      %p83 = scmp.ne.s32.totalorder %s74, %s75
      %p84 = scmp.eq.s32.totalorder %s22, 0
      %p85 = por %p83, %p84
      %p86 = scmp.ne.s32.totalorder %s74, %s75
      %p87 = scmp.eq.s32.totalorder %s23, 1
      %p88 = por %p86, %p87
      %p90 = scmp.ne.s32.totalorder %s75, %s89
      %p91 = scmp.eq.s32.totalorder %s23, 0
      %p92 = por %p90, %p91
      %s94 = sadd.s32 %s93, 1
      %p97 = scmp.eq.s32.totalorder %s17, 1
      %p98 = scmp.ne.s32.totalorder %s93, %s95
      %p99 = scmp.eq.s32.totalorder %s17, 0
      %p100 = por %p98, %p99
      %p101 = scmp.ne.s32.totalorder %s93, %s95
      %p102 = scmp.eq.s32.totalorder %s22, 1
      %p103 = por %p101, %p102
      %p104 = scmp.ne.s32.totalorder %s95, %s96
      %p105 = scmp.eq.s32.totalorder %s22, 0
      %p106 = por %p104, %p105
      %p107 = scmp.ne.s32.totalorder %s95, %s96
      %p108 = scmp.eq.s32.totalorder %s23, 1
      %p109 = por %p107, %p108
      %p111 = scmp.ne.s32.totalorder %s96, %s110
      %p112 = scmp.eq.s32.totalorder %s23, 0
      %p113 = por %p111, %p112
      %s115 = sadd.s32 %s114, 1
      %p118 = scmp.eq.s32.totalorder %s17, 1
      %p119 = scmp.ne.s32.totalorder %s114, %s116
      %p120 = scmp.eq.s32.totalorder %s17, 0
      %p121 = por %p119, %p120
      %p122 = scmp.ne.s32.totalorder %s114, %s116
      %p123 = scmp.eq.s32.totalorder %s22, 1
      %p124 = por %p122, %p123
      %p125 = scmp.ne.s32.totalorder %s116, %s117
      %p126 = scmp.eq.s32.totalorder %s22, 0
      %p127 = por %p125, %p126
      %p128 = scmp.ne.s32.totalorder %s116, %s117
      %p129 = scmp.eq.s32.totalorder %s23, 1
      %p130 = por %p128, %p129
      %p132 = scmp.ne.s32.totalorder %s117, %s131
      %p133 = scmp.eq.s32.totalorder %s23, 0
      %p134 = por %p132, %p133
      %s136 = sadd.s32 %s135, 1
      %p139 = scmp.eq.s32.totalorder %s17, 1
      %p140 = scmp.ne.s32.totalorder %s135, %s137
      %p141 = scmp.eq.s32.totalorder %s17, 0
      %p142 = por %p140, %p141
      %p143 = scmp.ne.s32.totalorder %s135, %s137
      %p144 = scmp.eq.s32.totalorder %s22, 1
      %p145 = por %p143, %p144
      %p146 = scmp.ne.s32.totalorder %s137, %s138
      %p147 = scmp.eq.s32.totalorder %s22, 0
      %p148 = por %p146, %p147
      %p149 = scmp.ne.s32.totalorder %s137, %s138
      %p150 = scmp.eq.s32.totalorder %s23, 1
      %p151 = por %p149, %p150
      %p153 = scmp.ne.s32.totalorder %s138, %s152
      %p154 = scmp.eq.s32.totalorder %s23, 0
      %p155 = por %p153, %p154
      %s157 = sadd.s32 %s156, 1
      %p160 = scmp.eq.s32.totalorder %s17, 1
      %p161 = scmp.ne.s32.totalorder %s156, %s158
      %p162 = scmp.eq.s32.totalorder %s17, 0
      %p163 = por %p161, %p162
      %p164 = scmp.ne.s32.totalorder %s156, %s158
      %p165 = scmp.eq.s32.totalorder %s22, 1
      %p166 = por %p164, %p165
      %p167 = scmp.ne.s32.totalorder %s158, %s159
      %p168 = scmp.eq.s32.totalorder %s22, 0
      %p169 = por %p167, %p168
      %p170 = scmp.ne.s32.totalorder %s158, %s159
      %p171 = scmp.eq.s32.totalorder %s23, 1
      %p172 = por %p170, %p171
      %p174 = scmp.ne.s32.totalorder %s159, %s173
      %p175 = scmp.eq.s32.totalorder %s23, 0
      %p176 = por %p174, %p175
      %s178 = sadd.s32 %s177, 1
      %p181 = scmp.eq.s32.totalorder %s17, 1
      %p182 = scmp.ne.s32.totalorder %s177, %s179
      %p183 = scmp.eq.s32.totalorder %s17, 0
      %p184 = por %p182, %p183
      %p185 = scmp.ne.s32.totalorder %s177, %s179
      %p186 = scmp.eq.s32.totalorder %s22, 1
      %p187 = por %p185, %p186
      %p188 = scmp.ne.s32.totalorder %s179, %s180
      %p189 = scmp.eq.s32.totalorder %s22, 0
      %p190 = por %p188, %p189
      %p191 = scmp.ne.s32.totalorder %s179, %s180
      %p192 = scmp.eq.s32.totalorder %s23, 1
      %p193 = por %p191, %p192
      %p195 = scmp.ne.s32.totalorder %s180, %s194
      %p196 = scmp.eq.s32.totalorder %s23, 0
      %p197 = por %p195, %p196
      %s198 = ssub.s32 %s17, %s24
      %p199 = scmp.eq.s32.totalorder %s198, 0
      %s201 = sadd.s32 %s200, 1
      %s202 = scalar_select %p199, %s200, %s201
      %p205 = pneg %p199
      %p206 = scmp.eq.s32.totalorder %s17, 1
      %p207 = por %p205, %p206
      %p208 = scmp.ne.s32.totalorder %s200, %s203
      %p209 = scmp.eq.s32.totalorder %s17, 0
      %p210 = por %p208, %p209
      %p211 = scmp.ne.s32.totalorder %s200, %s203
      %p212 = scmp.eq.s32.totalorder %s22, 1
      %p213 = por %p211, %p212
      %p214 = scmp.ne.s32.totalorder %s203, %s204
      %p215 = scmp.eq.s32.totalorder %s22, 0
      %p216 = por %p214, %p215
      %p217 = scmp.ne.s32.totalorder %s203, %s204
      %p218 = scmp.eq.s32.totalorder %s23, 1
      %p219 = por %p217, %p218
      %p221 = scmp.ne.s32.totalorder %s204, %s220
      %p222 = scmp.eq.s32.totalorder %s23, 0
      %p223 = por %p221, %p222
      %p224 = scmp.le.s32.totalorder 1, %s17
      %p225 = scmp.lt.s32.totalorder %s17, 3
      %p226 = pnand %p224, %p225
      %p227 = pneg %p226
      // Predicated region
      $region9: #{siglip_vision_transformer.1} parent=5 // pred_check
        _
      $region10: #{siglip_vision_transformer.1} parent=5 // pred_check_branch
        %229 = sbr.rel (%p226) target = $region12
      $region11: #{siglip_vision_transformer.1} parent=5 // pred_region
        %s230 = ssub.s32 %s17, 1
        // Predicated region
        $region13: #{siglip_vision_transformer.1} parent=11 // pred_check
          %p231 = pneg %p64
        $region14: #{siglip_vision_transformer.1} parent=11 // pred_check_branch
          %233 = sbr.rel (%p231) target = $region16
        $region15: #{siglip_vision_transformer.1} parent=11 // pred_region
          _
        $region16: #{siglip_vision_transformer.1} parent=11 // pred_fallthru
          _
        // Predicated region
        $region17: #{siglip_vision_transformer.1} parent=11 // pred_check
          %p234 = pneg %p85
        $region18: #{siglip_vision_transformer.1} parent=11 // pred_check_branch
          %236 = sbr.rel (%p234) target = $region20
        $region19: #{siglip_vision_transformer.1} parent=11 // pred_region
          _
        $region20: #{siglip_vision_transformer.1} parent=11 // pred_fallthru
          _
        // Predicated region
        $region21: #{siglip_vision_transformer.1} parent=11 // pred_check
          %p237 = pneg %p106
        $region22: #{siglip_vision_transformer.1} parent=11 // pred_check_branch
          %239 = sbr.rel (%p237) target = $region24
        $region23: #{siglip_vision_transformer.1} parent=11 // pred_region
          _
        $region24: #{siglip_vision_transformer.1} parent=11 // pred_fallthru
          _
        // Predicated region
        $region25: #{siglip_vision_transformer.1} parent=11 // pred_check
          %p240 = pneg %p127
        $region26: #{siglip_vision_transformer.1} parent=11 // pred_check_branch
          %242 = sbr.rel (%p240) target = $region28
        $region27: #{siglip_vision_transformer.1} parent=11 // pred_region
          _
        $region28: #{siglip_vision_transformer.1} parent=11 // pred_fallthru
          _
        // Predicated region
        $region29: #{siglip_vision_transformer.1} parent=11 // pred_check
          %p243 = pneg %p148
        $region30: #{siglip_vision_transformer.1} parent=11 // pred_check_branch
          %245 = sbr.rel (%p243) target = $region32
        $region31: #{siglip_vision_transformer.1} parent=11 // pred_region
          _
        $region32: #{siglip_vision_transformer.1} parent=11 // pred_fallthru
          _
        // Predicated region
        $region33: #{siglip_vision_transformer.1} parent=11 // pred_check
          %p246 = pneg %p169
        $region34: #{siglip_vision_transformer.1} parent=11 // pred_check_branch
          %248 = sbr.rel (%p246) target = $region36
        $region35: #{siglip_vision_transformer.1} parent=11 // pred_region
          _
        $region36: #{siglip_vision_transformer.1} parent=11 // pred_fallthru
          _
        // Predicated region
        $region37: #{siglip_vision_transformer.1} parent=11 // pred_check
          %p249 = pneg %p190
        $region38: #{siglip_vision_transformer.1} parent=11 // pred_check_branch
          %251 = sbr.rel (%p249) target = $region40
        $region39: #{siglip_vision_transformer.1} parent=11 // pred_region
          _
        $region40: #{siglip_vision_transformer.1} parent=11 // pred_fallthru
          _
      $region12: #{siglip_vision_transformer.1} parent=5 // pred_fallthru
        _
      %p252 = scmp.lt.s32.totalorder %s17, 2
      // Predicated region
      $region41: #{siglip_vision_transformer.1} parent=5 // pred_check
        %p253 = pneg %p252
      $region42: #{siglip_vision_transformer.1} parent=5 // pred_check_branch
        %255 = sbr.rel (%p253) target = $region44
      $region43: #{siglip_vision_transformer.1} parent=5 // pred_region
        // Predicated region
        $region45: #{siglip_vision_transformer.1} parent=43 // pred_check
          %p256 = pneg %p37
        $region46: #{siglip_vision_transformer.1} parent=43 // pred_check_branch
          %258 = sbr.rel (%p256) target = $region48
        $region47: #{siglip_vision_transformer.1} parent=43 // pred_region
          %p259 = scmp.lt.s32.totalorder %s17, 1
          %s260 = scalar_select %p259, %s17, 1
          %s261 = smul.addr %s260, 2
          %s262 = smul.addr %s261, 4
          %s263 = scalar_lea.vmem %s0, %s262
        $region48: #{siglip_vision_transformer.1} parent=43 // pred_fallthru
          _
      $region44: #{siglip_vision_transformer.1} parent=5 // pred_fallthru
        _
      %p264 = scmp.le.s32.totalorder 1, %s17
      %p265 = scmp.lt.s32.totalorder %s17, 3
      %p266 = pnand %p264, %p265
      %p267 = pneg %p266
      // Predicated region
      $region49: #{siglip_vision_transformer.1} parent=5 // pred_check
        _
      $region50: #{siglip_vision_transformer.1} parent=5 // pred_check_branch
        %269 = sbr.rel (%p266) target = $region52
      $region51: #{siglip_vision_transformer.1} parent=5 // pred_region
        %s270 = ssub.s32 %s17, 1
        %p271 = scmp.lt.s32.totalorder %s22, 1
        %s272 = scalar_select %p271, %s22, 1
        %s273 = smul.addr %s272, 2
        %s274 = smul.addr %s273, 4
        %s275 = scalar_lea.vmem %s0, %s274
        %p276 = pneg %p43
        %p277 = pneg %p40
        %p278 = pneg %p64
        %p279 = pneg %p61
        %p280 = pneg %p85
        %p281 = pneg %p82
        %p282 = pneg %p106
        %p283 = pneg %p103
        %p284 = pneg %p127
        %p285 = pneg %p124
        %p286 = pneg %p148
        %p287 = pneg %p145
        %p288 = pneg %p169
        %p289 = pneg %p166
        %p290 = pneg %p190
        %p291 = pneg %p187
        %p292 = pneg %p216
        %p293 = pneg %p213
        %s294 = sand.u32 %s203, 1
        %s295 = scalar_lea.sflag [#allocation3], %s294
        %s296 = sand.u32 %s203, 1
        %s297 = smul.addr %s296, 16
        %s298 = scalar_lea.vmem [#allocation2], %s297
        %p299 = scmp.lt.s32.totalorder %s22, 1
        %s300 = scalar_select %p299, %s22, 1
        %s301 = smul.addr %s300, 2
        %s302 = smul.addr %s301, 4
        %s303 = scalar_lea.vmem %s0, %s302
        %v305 = vld [vmem:[%s7] sm:$0xff]
        %v306 = vld [vmem:[%s7 + $0x8] sm:$0x3f]
        %v307 = vld [vmem:[%s303] sm:$0xf]
        %v308 = vld [vmem:[%s303 + $0x4] sm:$0xf]
        %v309 = vld [vmem:[%s1] sm:$0xf]
        %v310 = vld [vmem:[%s1 + $0x4] sm:$0xf]
        %v311 = vld [vmem:[%s1 + $0x8] sm:$0xf]
        %v312 = vld [vmem:[%s1 + $0xc] sm:$0xf]
        %v313 = vld [vmem:[%s1 + $0x10] sm:$0xf]
        %v314 = vld [vmem:[%s1 + $0x14] sm:$0xf]
        %v315 = vld [vmem:[%s2] sm:$0xff]
        %v316 = vld [vmem:[%s2 + $0x8] sm:$0xff]
        %v319 = vunpack.c.l.b16 %v307
        %v320 = vunpack.c.l.b16 %v308
        %v321 = vpack.c.b16 %v320, %v319
        %v328 = vunpack.c.l.b16 %v309
        %v329 = vunpack.c.l.b16 %v310
        %v330 = vunpack.c.l.b16 %v311
        %v331 = vunpack.c.l.b16 %v312
        %v332 = vunpack.c.l.b16 %v313
        %v333 = vunpack.c.l.b16 %v314
        %v334 = vpack.c.b16 %v329, %v328
        %v335 = vpack.c.b16 %v331, %v330
        %v336 = vpack.c.b16 %v333, %v332
        %vm340 = vcmask 392192
        %v342 = vsel %vm340, %v321, 0
        %344 = vmatprep.subr.bf16.mxu0 0
        %345 = vmatpush1.bf16.msra.mxu0 %v334
        %346 = vmatprep.subr.bf16.mxu0 0
        %347 = vmatpush1.bf16.msra.mxu0 %v335
        %348 = vmatprep.subr.bf16.mxu0 0
        %349 = vmatpush1.bf16.msra.mxu0 %v336
        %350 = vmatprep.subr.bf16.mxu0 0
        %351 = vmatpush1.bf16.msra.mxu0 0
        %352 = vmatprep.subr.bf16.mxu0 0
        %353 = vmatpush1.bf16.msra.mxu0 0
        %354 = vmatprep.subr.bf16.mxu0 0
        %355 = vmatpush1.bf16.msra.mxu0 0
        %356 = vmatprep.subr.bf16.mxu0 0
        %357 = vmatpush1.bf16.msra.mxu0 0
        %358 = vmatprep.subr.bf16.mxu0 0
        %359 = vmatpush1.bf16.msra.mxu0 0
        %360 = vmatprep.subr.bf16.mxu0 0
        %361 = vmatpush1.bf16.msra.mxu0 0
        %362 = vmatprep.subr.bf16.mxu0 0
        %363 = vmatpush1.bf16.msra.mxu0 0
        %364 = vmatprep.subr.bf16.mxu0 0
        %365 = vmatpush1.bf16.msra.mxu0 0
        %366 = vmatprep.subr.bf16.mxu0 0
        %367 = vmatpush1.bf16.msra.mxu0 0
        %368 = vmatprep.subr.bf16.mxu0 0
        %369 = vmatpush1.bf16.msra.mxu0 0
        %370 = vmatprep.subr.bf16.mxu0 0
        %371 = vmatpush1.bf16.msra.mxu0 0
        %372 = vmatprep.subr.bf16.mxu0 0
        %373 = vmatpush1.bf16.msra.mxu0 0
        %374 = vmatprep.subr.bf16.mxu0 0
        %375 = vmatpush1.bf16.msra.mxu0 0
        %376 = vmatprep.mubr.bf16.mxu0 0
        %377 = vmatmul.mubr.bf16.gmra.mrb[0].mxu0 %v342
        %v378 = vpop.f32.mrb[0].mxu0
        %v379 = vadd.f32 %v315, %v378
        %v380 = vpop.f32.mrb[0].mxu0
        %v381 = vpop.f32.mrb[0].mxu0
        %v382 = vadd.f32 %v316, %v381
        %v383 = vpop.f32.mrb[0].mxu0
        %384 = vdwg.mxu0
        %vm385 = vcmask 261120
        %v386 = vsel %vm385, %v379, 0.0
        %387 = vadd.xlane.f32.xlu0 %v386
        %v388 = vpop.xlane.xlu0 %387
        %v389 = vsel %vm385, %v382, 0.0
        %390 = vadd.xlane.f32.xlu0 %v389
        %v391 = vpop.xlane.xlu0 %390
        %v392 = vrcp.pop 32.0
        %v393 = vmul.f32 %v388, %v392
        %v394 = vmul.f32 %v391, %v392
        %v395 = vsub.f32 %v379, %v393
        %v396 = vsub.f32 %v382, %v394
        %v397 = vmul.f32 %v395, %v395
        %v398 = vmul.f32 %v396, %v396
        %v399 = vsel %vm385, %v397, 0.0
        %400 = vadd.xlane.f32.xlu0 %v399
        %v401 = vpop.xlane.xlu0 %400
        %v402 = vsel %vm385, %v398, 0.0
        %403 = vadd.xlane.f32.xlu0 %v402
        %v404 = vpop.xlane.xlu0 %403
        %v405 = vmul.f32 %v401, %v392
        %v406 = vmul.f32 %v404, %v392
        %v407 = vadd.f32 %v405, 1e-06
        %v408 = vadd.f32 %v406, 1e-06
        %v409 = vrsqrt.pop %v407
        %v410 = vrsqrt.pop %v408
        %v411 = vmul.f32 %v395, %v409
        %v412 = vmul.f32 %v396, %v410
        %v413 = vlaneseq
        %v414 = vshrl.u32 %v413, 7
        %v415 = vsub.s32 0, %v414
        %v416 = vrot.slane %v305, %v415
        %v417 = vmul.f32 %v411, %v416
        %v418 = vmul.f32 %v412, %v416
        %v419 = vlaneseq
        %v420 = vshrl.u32 %v419, 7
        %v421 = vsub.s32 1, %v420
        %v422 = vrot.slane %v305, %v421
        %v423 = vadd.f32 %v417, %v422
        %v424 = vadd.f32 %v418, %v422
        %v425 = vld [vmem:[%s3] sm:$0xf]
        %v426 = vld [vmem:[%s3 + $0x4] sm:$0xf]
        %v427 = vld [vmem:[%s3 + $0x8] sm:$0xf]
        %v428 = vld [vmem:[%s3 + $0xc] sm:$0xf]
        %v429 = vld [vmem:[%s3 + $0x10] sm:$0xf]
        %v430 = vld [vmem:[%s3 + $0x14] sm:$0xf]
        %v431 = vld [vmem:[%s3 + $0x18] sm:$0xf]
        %v432 = vld [vmem:[%s3 + $0x1c] sm:$0xf]
        %v433 = vld [vmem:[%s3 + $0x20] sm:$0xf]
        %v434 = vld [vmem:[%s3 + $0x24] sm:$0xf]
        %v435 = vld [vmem:[%s3 + $0x28] sm:$0xf]
        %v436 = vld [vmem:[%s3 + $0x2c] sm:$0xf]
        %v437 = vld [vmem:[%s3 + $0x30] sm:$0xf]
        %v438 = vld [vmem:[%s3 + $0x34] sm:$0xf]
        %v439 = vld [vmem:[%s3 + $0x38] sm:$0xf]
        %v440 = vld [vmem:[%s3 + $0x3c] sm:$0xf]
        %v441 = vpack.c.bf16 %v424, %v423
        %v442 = vld [vmem:[%s4] sm:$0xff]
        %v443 = vld [vmem:[%s4 + $0x8] sm:$0xff]
        %v444 = vld [vmem:[%s4 + $0x10] sm:$0xff]
        %v445 = vld [vmem:[%s4 + $0x18] sm:$0xff]
        %v446 = vld [vmem:[%s4 + $0x20] sm:$0xff]
        %v447 = vld [vmem:[%s4 + $0x28] sm:$0xff]
        %v448 = vld [vmem:[%s4 + $0x30] sm:$0xff]
        %v449 = vld [vmem:[%s4 + $0x38] sm:$0xff]
        %v450 = vld [vmem:[%s4 + $0x40] sm:$0xff]
        %v451 = vld [vmem:[%s4 + $0x48] sm:$0xff]
        %v452 = vld [vmem:[%s4 + $0x50] sm:$0xff]
        %v453 = vld [vmem:[%s4 + $0x58] sm:$0xff]
        %455 = vset.pattern.permute.xlu0 0
        %456 = vperm.xlu0 %455, %v442
        %v457 = vpop.permute.xlu0 %456
        %460 = vset.pattern.permute.xlu0 0
        %461 = vperm.xlu0 %460, %v443
        %v462 = vpop.permute.xlu0 %461
        %465 = vset.pattern.permute.xlu0 0
        %466 = vperm.xlu0 %465, %v444
        %v467 = vpop.permute.xlu0 %466
        %470 = vset.pattern.permute.xlu0 0
        %471 = vperm.xlu0 %470, %v445
        %v472 = vpop.permute.xlu0 %471
        %475 = vset.pattern.permute.xlu0 0
        %476 = vperm.xlu0 %475, %v446
        %v477 = vpop.permute.xlu0 %476
        %480 = vset.pattern.permute.xlu0 0
        %481 = vperm.xlu0 %480, %v447
        %v482 = vpop.permute.xlu0 %481
        %485 = vset.pattern.permute.xlu0 0
        %486 = vperm.xlu0 %485, %v448
        %v487 = vpop.permute.xlu0 %486
        %490 = vset.pattern.permute.xlu0 0
        %491 = vperm.xlu0 %490, %v449
        %v492 = vpop.permute.xlu0 %491
        %495 = vset.pattern.permute.xlu0 0
        %496 = vperm.xlu0 %495, %v450
        %v497 = vpop.permute.xlu0 %496
        %500 = vset.pattern.permute.xlu0 0
        %501 = vperm.xlu0 %500, %v451
        %v502 = vpop.permute.xlu0 %501
        %505 = vset.pattern.permute.xlu0 0
        %506 = vperm.xlu0 %505, %v452
        %v507 = vpop.permute.xlu0 %506
        %510 = vset.pattern.permute.xlu0 0
        %511 = vperm.xlu0 %510, %v453
        %v512 = vpop.permute.xlu0 %511
        %v526 = vunpack.c.l.b16 %v425
        %v527 = vunpack.c.l.b16 %v426
        %v528 = vunpack.c.l.b16 %v427
        %v529 = vunpack.c.l.b16 %v428
        %v530 = vunpack.c.l.b16 %v429
        %v531 = vunpack.c.l.b16 %v430
        %v532 = vunpack.c.l.b16 %v431
        %v533 = vunpack.c.l.b16 %v432
        %v534 = vunpack.c.l.b16 %v433
        %v535 = vunpack.c.l.b16 %v434
        %v536 = vunpack.c.l.b16 %v435
        %v537 = vunpack.c.l.b16 %v436
        %v538 = vpack.c.b16 %v527, %v526
        %v539 = vpack.c.b16 %v529, %v528
        %v540 = vpack.c.b16 %v531, %v530
        %v541 = vpack.c.b16 %v533, %v532
        %v542 = vpack.c.b16 %v535, %v534
        %v543 = vpack.c.b16 %v537, %v536
        %v545 = vsel %vm385, %v538, 0
        %v548 = vsel %vm385, %v539, 0
        %v551 = vsel %vm385, %v540, 0
        %v554 = vsel %vm385, %v541, 0
        %v557 = vsel %vm385, %v542, 0
        %v560 = vsel %vm385, %v543, 0
        %v563 = vsel %vm385, %v441, 0
        %565 = vmatprep.subr.bf16.mxu0 0
        %566 = vmatpush1.bf16.xpose.msra.mxu0 %v563
        %567 = vmatprep.subr.bf16.mxu0 0
        %568 = vmatpush1.bf16.xpose.msra.mxu0 0
        %569 = vmatprep.subr.bf16.mxu0 0
        %570 = vmatpush1.bf16.xpose.msra.mxu0 0
        %571 = vmatprep.subr.bf16.mxu0 0
        %572 = vmatpush1.bf16.xpose.msra.mxu0 0
        %573 = vmatprep.subr.bf16.mxu0 0
        %574 = vmatpush1.bf16.xpose.msra.mxu0 0
        %575 = vmatprep.subr.bf16.mxu0 0
        %576 = vmatpush1.bf16.xpose.msra.mxu0 0
        %577 = vmatprep.subr.bf16.mxu0 0
        %578 = vmatpush1.bf16.xpose.msra.mxu0 0
        %579 = vmatprep.subr.bf16.mxu0 0
        %580 = vmatpush1.bf16.xpose.msra.mxu0 0
        %581 = vmatprep.subr.bf16.mxu0 0
        %582 = vmatpush1.bf16.xpose.msra.mxu0 0
        %583 = vmatprep.subr.bf16.mxu0 0
        %584 = vmatpush1.bf16.xpose.msra.mxu0 0
        %585 = vmatprep.subr.bf16.mxu0 0
        %586 = vmatpush1.bf16.xpose.msra.mxu0 0
        %587 = vmatprep.subr.bf16.mxu0 0
        %588 = vmatpush1.bf16.xpose.msra.mxu0 0
        %589 = vmatprep.subr.bf16.mxu0 0
        %590 = vmatpush1.bf16.xpose.msra.mxu0 0
        %591 = vmatprep.subr.bf16.mxu0 0
        %592 = vmatpush1.bf16.xpose.msra.mxu0 0
        %593 = vmatprep.subr.bf16.mxu0 0
        %594 = vmatpush1.bf16.xpose.msra.mxu0 0
        %595 = vmatprep.subr.bf16.mxu0 0
        %596 = vmatpush1.bf16.xpose.msra.mxu0 0
        %597 = vmatprep.mubr.bf16.mxu0 0
        %598 = vmatmul.mubr.bf16.gmra.mrb[0].mxu0 %v545
        %v599 = vpop.f32.mrb[0].mxu0
        %v600 = vadd.f32 %v457, %v599
        %v601 = vpop.f32.mrb[0].mxu0
        %v602 = vpop.f32.mrb[0].mxu0
        %v603 = vadd.f32 %v462, %v602
        %v604 = vpop.f32.mrb[0].mxu0
        %605 = vmatprep.mubr.bf16.mxu0 0
        %606 = vmatmul.mubr.bf16.gmra.mrb[0].mxu0 %v548
        %v607 = vpop.f32.mrb[0].mxu0
        %v608 = vadd.f32 %v467, %v607
        %v609 = vpop.f32.mrb[0].mxu0
        %v610 = vpop.f32.mrb[0].mxu0
        %v611 = vadd.f32 %v472, %v610
        %v612 = vpop.f32.mrb[0].mxu0
        %613 = vmatprep.mubr.bf16.mxu0 0
        %614 = vmatmul.mubr.bf16.gmra.mrb[0].mxu0 %v551
        %v615 = vpop.f32.mrb[0].mxu0
        %v616 = vadd.f32 %v477, %v615
        %v617 = vpop.f32.mrb[0].mxu0
        %v618 = vpop.f32.mrb[0].mxu0
        %v619 = vadd.f32 %v482, %v618
        %v620 = vpop.f32.mrb[0].mxu0
        %621 = vmatprep.mubr.bf16.mxu0 0
        %622 = vmatmul.mubr.bf16.gmra.mrb[0].mxu0 %v554
        %v623 = vpop.f32.mrb[0].mxu0
        %v624 = vadd.f32 %v487, %v623
        %v625 = vpop.f32.mrb[0].mxu0
        %v626 = vpop.f32.mrb[0].mxu0
        %v627 = vadd.f32 %v492, %v626
        %v628 = vpop.f32.mrb[0].mxu0
        %629 = vmatprep.mubr.bf16.mxu0 0
        %630 = vmatmul.mubr.bf16.gmra.mrb[0].mxu0 %v557
        %v631 = vpop.f32.mrb[0].mxu0
        %v632 = vadd.f32 %v497, %v631
        %v633 = vpop.f32.mrb[0].mxu0
        %v634 = vpop.f32.mrb[0].mxu0
        %v635 = vadd.f32 %v502, %v634
        %v636 = vpop.f32.mrb[0].mxu0
        %637 = vmatprep.mubr.bf16.mxu0 0
        %638 = vmatmul.mubr.bf16.gmra.mrb[0].mxu0 %v560
        %v639 = vpop.f32.mrb[0].mxu0
        %v640 = vadd.f32 %v507, %v639
        %v641 = vpop.f32.mrb[0].mxu0
        %v642 = vpop.f32.mrb[0].mxu0
        %v643 = vadd.f32 %v512, %v642
        %v644 = vpop.f32.mrb[0].mxu0
        %645 = vdwg.mxu0
        %646 = vxpose.xlu0.b32.start [1/16] %v600, 128
        %647 = vxpose.xlu0.b32.cont [2/16] 0.0, 128
        %648 = vxpose.xlu0.b32.cont [3/16] 0.0, 128
        %649 = vxpose.xlu0.b32.cont [4/16] 0.0, 128
        %650 = vxpose.xlu0.b32.cont [5/16] 0.0, 128
        %651 = vxpose.xlu0.b32.cont [6/16] 0.0, 128
        %652 = vxpose.xlu0.b32.cont [7/16] 0.0, 128
        %653 = vxpose.xlu0.b32.cont [8/16] 0.0, 128
        %654 = vxpose.xlu0.b32.cont [9/16] 0.0, 128
        %655 = vxpose.xlu0.b32.cont [10/16] 0.0, 128
        %656 = vxpose.xlu0.b32.cont [11/16] 0.0, 128
        %657 = vxpose.xlu0.b32.cont [12/16] 0.0, 128
        %658 = vxpose.xlu0.b32.cont [13/16] 0.0, 128
        %659 = vxpose.xlu0.b32.cont [14/16] 0.0, 128
        %660 = vxpose.xlu0.b32.cont [15/16] 0.0, 128
        %661 = vxpose.xlu0.b32.end [16/16] 0.0, 128
        %v662 = vpop.trf.xlu0
        %v663 = vpop.trf.xlu0
        %v664 = vpop.trf.xlu0
        %v665 = vpop.trf.xlu0
        %v666 = vpop.trf.xlu0
        %v667 = vpop.trf.xlu0
        %v668 = vpop.trf.xlu0
        %v669 = vpop.trf.xlu0
        %v670 = vpop.trf.xlu0
        %v671 = vpop.trf.xlu0
        %v672 = vpop.trf.xlu0
        %v673 = vpop.trf.xlu0
        %v674 = vpop.trf.xlu0
        %v675 = vpop.trf.xlu0
        %v676 = vpop.trf.xlu0
        %v677 = vpop.trf.xlu0
        %v678 = vpack.c.bf16 %v663, %v662
        %v679 = vpack.c.bf16 %v616, %v616
        %vm680 = vcmask 64512
        %v682 = vsel %vm680, %v678, 0
        %vm684 = vcmask 1043456
        %v686 = vsel %vm684, %v679, 0
        %688 = vmatprep.subr.bf16.mxu0 0
        %689 = vmatpush1.bf16.msra.mxu0 %v686
        %690 = vmatprep.subr.bf16.mxu0 0
        %691 = vmatpush1.bf16.msra.mxu0 0
        %692 = vmatprep.subr.bf16.mxu0 0
        %693 = vmatpush1.bf16.msra.mxu0 0
        %694 = vmatprep.subr.bf16.mxu0 0
        %695 = vmatpush1.bf16.msra.mxu0 0
        %696 = vmatprep.subr.bf16.mxu0 0
        %697 = vmatpush1.bf16.msra.mxu0 0
        %698 = vmatprep.subr.bf16.mxu0 0
        %699 = vmatpush1.bf16.msra.mxu0 0
        %700 = vmatprep.subr.bf16.mxu0 0
        %701 = vmatpush1.bf16.msra.mxu0 0
        %702 = vmatprep.subr.bf16.mxu0 0
        %703 = vmatpush1.bf16.msra.mxu0 0
        %704 = vmatprep.subr.bf16.mxu0 0
        %705 = vmatpush1.bf16.msra.mxu0 0
        %706 = vmatprep.subr.bf16.mxu0 0
        %707 = vmatpush1.bf16.msra.mxu0 0
        %708 = vmatprep.subr.bf16.mxu0 0
        %709 = vmatpush1.bf16.msra.mxu0 0
        %710 = vmatprep.subr.bf16.mxu0 0
        %711 = vmatpush1.bf16.msra.mxu0 0
        %712 = vmatprep.subr.bf16.mxu0 0
        %713 = vmatpush1.bf16.msra.mxu0 0
        %714 = vmatprep.subr.bf16.mxu0 0
        %715 = vmatpush1.bf16.msra.mxu0 0
        %716 = vmatprep.subr.bf16.mxu0 0
        %717 = vmatpush1.bf16.msra.mxu0 0
        %718 = vmatprep.subr.bf16.mxu0 0
        %719 = vmatpush1.bf16.msra.mxu0 0
        %720 = vmatprep.mubr.bf16.mxu0 0
        %721 = vmatmul.mubr.bf16.gmra.mrb[0].mxu0 %v682
        %v722 = vpop.f32.mrb[0].mxu0
        %v723 = vadd.f32 0.0, %v722
        %v724 = vpop.f32.mrb[0].mxu0
        %v725 = vpop.f32.mrb[0].mxu0
        %v726 = vadd.f32 0.0, %v725
        %v727 = vpop.f32.mrb[0].mxu0
        %728 = vdwg.mxu0
        %vm729 = vcmask 130048
        %v730 = vsel %vm729, %v723, -inf
        %731 = vmax.xlane.f32.xlu0 %v730
        %v732 = vpop.xlane.xlu0 %731
        %v733 = vsel %vm729, %v726, -inf
        %734 = vmax.xlane.f32.xlu0 %v733
        %v735 = vpop.xlane.xlu0 %734
        %v736 = vsub.f32 %v723, %v732
        %v737 = vsub.f32 %v726, %v735
        %v738 = vmul.f32 %v736, 1.442695
        %v739 = vpow.pop %v738
        %v740 = vmul.f32 %v737, 1.442695
        %v741 = vpow.pop %v740
        %v742 = vsel %vm729, %v739, 0.0
        %743 = vadd.xlane.f32.xlu0 %v742
        %v744 = vpop.xlane.xlu0 %743
        %v745 = vsel %vm729, %v741, 0.0
        %746 = vadd.xlane.f32.xlu0 %v745
        %v747 = vpop.xlane.xlu0 %746
        %v748 = vrcp.pop %v744
        %v749 = vrcp.pop %v747
        %v750 = vmul.f32 %v739, %v748
        %v751 = vmul.f32 %v741, %v749
        %v752 = vpack.c.bf16 %v632, %v632
        %v753 = vpack.c.bf16 %v751, %v750
        %v755 = vsel %vm729, %v752, 0
        %v758 = vsel %vm729, %v753, 0
        %760 = vmatprep.subr.bf16.mxu0 0
        %761 = vmatpush1.bf16.xpose.msra.mxu0 %v758
        %762 = vmatprep.subr.bf16.mxu0 0
        %763 = vmatpush1.bf16.xpose.msra.mxu0 0
        %764 = vmatprep.subr.bf16.mxu0 0
        %765 = vmatpush1.bf16.xpose.msra.mxu0 0
        %766 = vmatprep.subr.bf16.mxu0 0
        %767 = vmatpush1.bf16.xpose.msra.mxu0 0
        %768 = vmatprep.subr.bf16.mxu0 0
        %769 = vmatpush1.bf16.xpose.msra.mxu0 0
        %770 = vmatprep.subr.bf16.mxu0 0
        %771 = vmatpush1.bf16.xpose.msra.mxu0 0
        %772 = vmatprep.subr.bf16.mxu0 0
        %773 = vmatpush1.bf16.xpose.msra.mxu0 0
        %774 = vmatprep.subr.bf16.mxu0 0
        %775 = vmatpush1.bf16.xpose.msra.mxu0 0
        %776 = vmatprep.subr.bf16.mxu0 0
        %777 = vmatpush1.bf16.xpose.msra.mxu0 0
        %778 = vmatprep.subr.bf16.mxu0 0
        %779 = vmatpush1.bf16.xpose.msra.mxu0 0
        %780 = vmatprep.subr.bf16.mxu0 0
        %781 = vmatpush1.bf16.xpose.msra.mxu0 0
        %782 = vmatprep.subr.bf16.mxu0 0
        %783 = vmatpush1.bf16.xpose.msra.mxu0 0
        %784 = vmatprep.subr.bf16.mxu0 0
        %785 = vmatpush1.bf16.xpose.msra.mxu0 0
        %786 = vmatprep.subr.bf16.mxu0 0
        %787 = vmatpush1.bf16.xpose.msra.mxu0 0
        %788 = vmatprep.subr.bf16.mxu0 0
        %789 = vmatpush1.bf16.xpose.msra.mxu0 0
        %790 = vmatprep.subr.bf16.mxu0 0
        %791 = vmatpush1.bf16.xpose.msra.mxu0 0
        %792 = vmatprep.mubr.bf16.mxu0 0
        %793 = vmatmul.mubr.bf16.gmra.mrb[0].mxu0 %v755
        %v794 = vpop.f32.mrb[0].mxu0
        %v795 = vadd.f32 0.0, %v794
        %v796 = vpop.f32.mrb[0].mxu0
        %v797 = vpop.f32.mrb[0].mxu0
        %v798 = vpop.f32.mrb[0].mxu0
        %799 = vdwg.mxu0
        %800 = vxpose.xlu0.b32.start [1/16] %v603, 128
        %801 = vxpose.xlu0.b32.cont [2/16] 0.0, 128
        %802 = vxpose.xlu0.b32.cont [3/16] 0.0, 128
        %803 = vxpose.xlu0.b32.cont [4/16] 0.0, 128
        %804 = vxpose.xlu0.b32.cont [5/16] 0.0, 128
        %805 = vxpose.xlu0.b32.cont [6/16] 0.0, 128
        %806 = vxpose.xlu0.b32.cont [7/16] 0.0, 128
        %807 = vxpose.xlu0.b32.cont [8/16] 0.0, 128
        %808 = vxpose.xlu0.b32.cont [9/16] 0.0, 128
        %809 = vxpose.xlu0.b32.cont [10/16] 0.0, 128
        %810 = vxpose.xlu0.b32.cont [11/16] 0.0, 128
        %811 = vxpose.xlu0.b32.cont [12/16] 0.0, 128
        %812 = vxpose.xlu0.b32.cont [13/16] 0.0, 128
        %813 = vxpose.xlu0.b32.cont [14/16] 0.0, 128
        %814 = vxpose.xlu0.b32.cont [15/16] 0.0, 128
        %815 = vxpose.xlu0.b32.end [16/16] 0.0, 128
        %v816 = vpop.trf.xlu0
        %v817 = vpop.trf.xlu0
        %v818 = vpop.trf.xlu0
        %v819 = vpop.trf.xlu0
        %v820 = vpop.trf.xlu0
        %v821 = vpop.trf.xlu0
        %v822 = vpop.trf.xlu0
        %v823 = vpop.trf.xlu0
        %v824 = vpop.trf.xlu0
        %v825 = vpop.trf.xlu0
        %v826 = vpop.trf.xlu0
        %v827 = vpop.trf.xlu0
        %v828 = vpop.trf.xlu0
        %v829 = vpop.trf.xlu0
        %v830 = vpop.trf.xlu0
        %v831 = vpop.trf.xlu0
        %v832 = vpack.c.bf16 %v817, %v816
        %v833 = vpack.c.bf16 %v619, %v619
        %v835 = vsel %vm680, %v832, 0
        %v838 = vsel %vm684, %v833, 0
        %840 = vmatprep.subr.bf16.mxu0 0
        %841 = vmatpush1.bf16.msra.mxu0 %v838
        %842 = vmatprep.subr.bf16.mxu0 0
        %843 = vmatpush1.bf16.msra.mxu0 0
        %844 = vmatprep.subr.bf16.mxu0 0
        %845 = vmatpush1.bf16.msra.mxu0 0
        %846 = vmatprep.subr.bf16.mxu0 0
        %847 = vmatpush1.bf16.msra.mxu0 0
        %848 = vmatprep.subr.bf16.mxu0 0
        %849 = vmatpush1.bf16.msra.mxu0 0
        %850 = vmatprep.subr.bf16.mxu0 0
        %851 = vmatpush1.bf16.msra.mxu0 0
        %852 = vmatprep.subr.bf16.mxu0 0
        %853 = vmatpush1.bf16.msra.mxu0 0
        %854 = vmatprep.subr.bf16.mxu0 0
        %855 = vmatpush1.bf16.msra.mxu0 0
        %856 = vmatprep.subr.bf16.mxu0 0
        %857 = vmatpush1.bf16.msra.mxu0 0
        %858 = vmatprep.subr.bf16.mxu0 0
        %859 = vmatpush1.bf16.msra.mxu0 0
        %860 = vmatprep.subr.bf16.mxu0 0
        %861 = vmatpush1.bf16.msra.mxu0 0
        %862 = vmatprep.subr.bf16.mxu0 0
        %863 = vmatpush1.bf16.msra.mxu0 0
        %864 = vmatprep.subr.bf16.mxu0 0
        %865 = vmatpush1.bf16.msra.mxu0 0
        %866 = vmatprep.subr.bf16.mxu0 0
        %867 = vmatpush1.bf16.msra.mxu0 0
        %868 = vmatprep.subr.bf16.mxu0 0
        %869 = vmatpush1.bf16.msra.mxu0 0
        %870 = vmatprep.subr.bf16.mxu0 0
        %871 = vmatpush1.bf16.msra.mxu0 0
        %872 = vmatprep.mubr.bf16.mxu0 0
        %873 = vmatmul.mubr.bf16.gmra.mrb[0].mxu0 %v835
        %v874 = vpop.f32.mrb[0].mxu0
        %v875 = vadd.f32 0.0, %v874
        %v876 = vpop.f32.mrb[0].mxu0
        %v877 = vpop.f32.mrb[0].mxu0
        %v878 = vadd.f32 0.0, %v877
        %v879 = vpop.f32.mrb[0].mxu0
        %880 = vdwg.mxu0
        %v881 = vsel %vm729, %v875, -inf
        %882 = vmax.xlane.f32.xlu0 %v881
        %v883 = vpop.xlane.xlu0 %882
        %v884 = vsel %vm729, %v878, -inf
        %885 = vmax.xlane.f32.xlu0 %v884
        %v886 = vpop.xlane.xlu0 %885
        %v887 = vsub.f32 %v875, %v883
        %v888 = vsub.f32 %v878, %v886
        %v889 = vmul.f32 %v887, 1.442695
        %v890 = vpow.pop %v889
        %v891 = vmul.f32 %v888, 1.442695
        %v892 = vpow.pop %v891
        %v893 = vsel %vm729, %v890, 0.0
        %894 = vadd.xlane.f32.xlu0 %v893
        %v895 = vpop.xlane.xlu0 %894
        %v896 = vsel %vm729, %v892, 0.0
        %897 = vadd.xlane.f32.xlu0 %v896
        %v898 = vpop.xlane.xlu0 %897
        %v899 = vrcp.pop %v895
        %v900 = vrcp.pop %v898
        %v901 = vmul.f32 %v890, %v899
        %v902 = vmul.f32 %v892, %v900
        %v903 = vpack.c.bf16 %v635, %v635
        %v904 = vpack.c.bf16 %v902, %v901
        %v906 = vsel %vm729, %v903, 0
        %v909 = vsel %vm729, %v904, 0
        %911 = vmatprep.subr.bf16.mxu0 0
        %912 = vmatpush1.bf16.xpose.msra.mxu0 %v909
        %913 = vmatprep.subr.bf16.mxu0 0
        %914 = vmatpush1.bf16.xpose.msra.mxu0 0
        %915 = vmatprep.subr.bf16.mxu0 0
        %916 = vmatpush1.bf16.xpose.msra.mxu0 0
        %917 = vmatprep.subr.bf16.mxu0 0
        %918 = vmatpush1.bf16.xpose.msra.mxu0 0
        %919 = vmatprep.subr.bf16.mxu0 0
        %920 = vmatpush1.bf16.xpose.msra.mxu0 0
        %921 = vmatprep.subr.bf16.mxu0 0
        %922 = vmatpush1.bf16.xpose.msra.mxu0 0
        %923 = vmatprep.subr.bf16.mxu0 0
        %924 = vmatpush1.bf16.xpose.msra.mxu0 0
        %925 = vmatprep.subr.bf16.mxu0 0
        %926 = vmatpush1.bf16.xpose.msra.mxu0 0
        %927 = vmatprep.subr.bf16.mxu0 0
        %928 = vmatpush1.bf16.xpose.msra.mxu0 0
        %929 = vmatprep.subr.bf16.mxu0 0
        %930 = vmatpush1.bf16.xpose.msra.mxu0 0
        %931 = vmatprep.subr.bf16.mxu0 0
        %932 = vmatpush1.bf16.xpose.msra.mxu0 0
        %933 = vmatprep.subr.bf16.mxu0 0
        %934 = vmatpush1.bf16.xpose.msra.mxu0 0
        %935 = vmatprep.subr.bf16.mxu0 0
        %936 = vmatpush1.bf16.xpose.msra.mxu0 0
        %937 = vmatprep.subr.bf16.mxu0 0
        %938 = vmatpush1.bf16.xpose.msra.mxu0 0
        %939 = vmatprep.subr.bf16.mxu0 0
        %940 = vmatpush1.bf16.xpose.msra.mxu0 0
        %941 = vmatprep.subr.bf16.mxu0 0
        %942 = vmatpush1.bf16.xpose.msra.mxu0 0
        %943 = vmatprep.mubr.bf16.mxu0 0
        %944 = vmatmul.mubr.bf16.gmra.mrb[0].mxu0 %v906
        %v945 = vpop.f32.mrb[0].mxu0
        %v946 = vadd.f32 0.0, %v945
        %v947 = vpop.f32.mrb[0].mxu0
        %v948 = vpop.f32.mrb[0].mxu0
        %v949 = vpop.f32.mrb[0].mxu0
        %950 = vdwg.mxu0
        %951 = vxpose.xlu0.b32.start [1/16] %v608, 128
        %952 = vxpose.xlu0.b32.cont [2/16] 0.0, 128
        %953 = vxpose.xlu0.b32.cont [3/16] 0.0, 128
        %954 = vxpose.xlu0.b32.cont [4/16] 0.0, 128
        %955 = vxpose.xlu0.b32.cont [5/16] 0.0, 128
        %956 = vxpose.xlu0.b32.cont [6/16] 0.0, 128
        %957 = vxpose.xlu0.b32.cont [7/16] 0.0, 128
        %958 = vxpose.xlu0.b32.cont [8/16] 0.0, 128
        %959 = vxpose.xlu0.b32.cont [9/16] 0.0, 128
        %960 = vxpose.xlu0.b32.cont [10/16] 0.0, 128
        %961 = vxpose.xlu0.b32.cont [11/16] 0.0, 128
        %962 = vxpose.xlu0.b32.cont [12/16] 0.0, 128
        %963 = vxpose.xlu0.b32.cont [13/16] 0.0, 128
        %964 = vxpose.xlu0.b32.cont [14/16] 0.0, 128
        %965 = vxpose.xlu0.b32.cont [15/16] 0.0, 128
        %966 = vxpose.xlu0.b32.end [16/16] 0.0, 128
        %v967 = vpop.trf.xlu0
        %v968 = vpop.trf.xlu0
        %v969 = vpop.trf.xlu0
        %v970 = vpop.trf.xlu0
        %v971 = vpop.trf.xlu0
        %v972 = vpop.trf.xlu0
        %v973 = vpop.trf.xlu0
        %v974 = vpop.trf.xlu0
        %v975 = vpop.trf.xlu0
        %v976 = vpop.trf.xlu0
        %v977 = vpop.trf.xlu0
        %v978 = vpop.trf.xlu0
        %v979 = vpop.trf.xlu0
        %v980 = vpop.trf.xlu0
        %v981 = vpop.trf.xlu0
        %v982 = vpop.trf.xlu0
        %v983 = vpack.c.bf16 %v968, %v967
        %v984 = vpack.c.bf16 %v624, %v624
        %v986 = vsel %vm680, %v983, 0
        %v989 = vsel %vm684, %v984, 0
        %991 = vmatprep.subr.bf16.mxu0 0
        %992 = vmatpush1.bf16.msra.mxu0 %v989
        %993 = vmatprep.subr.bf16.mxu0 0
        %994 = vmatpush1.bf16.msra.mxu0 0
        %995 = vmatprep.subr.bf16.mxu0 0
        %996 = vmatpush1.bf16.msra.mxu0 0
        %997 = vmatprep.subr.bf16.mxu0 0
        %998 = vmatpush1.bf16.msra.mxu0 0
        %999 = vmatprep.subr.bf16.mxu0 0
        %1000 = vmatpush1.bf16.msra.mxu0 0
        %1001 = vmatprep.subr.bf16.mxu0 0
        %1002 = vmatpush1.bf16.msra.mxu0 0
        %1003 = vmatprep.subr.bf16.mxu0 0
        %1004 = vmatpush1.bf16.msra.mxu0 0
        %1005 = vmatprep.subr.bf16.mxu0 0
        %1006 = vmatpush1.bf16.msra.mxu0 0
        %1007 = vmatprep.subr.bf16.mxu0 0
        %1008 = vmatpush1.bf16.msra.mxu0 0
        %1009 = vmatprep.subr.bf16.mxu0 0
        %1010 = vmatpush1.bf16.msra.mxu0 0
        %1011 = vmatprep.subr.bf16.mxu0 0
        %1012 = vmatpush1.bf16.msra.mxu0 0
        %1013 = vmatprep.subr.bf16.mxu0 0
        %1014 = vmatpush1.bf16.msra.mxu0 0
        %1015 = vmatprep.subr.bf16.mxu0 0
        %1016 = vmatpush1.bf16.msra.mxu0 0
        %1017 = vmatprep.subr.bf16.mxu0 0
        %1018 = vmatpush1.bf16.msra.mxu0 0
        %1019 = vmatprep.subr.bf16.mxu0 0
        %1020 = vmatpush1.bf16.msra.mxu0 0
        %1021 = vmatprep.subr.bf16.mxu0 0
        %1022 = vmatpush1.bf16.msra.mxu0 0
        %1023 = vmatprep.mubr.bf16.mxu0 0
        %1024 = vmatmul.mubr.bf16.gmra.mrb[0].mxu0 %v986
        %v1025 = vpop.f32.mrb[0].mxu0
        %v1026 = vadd.f32 0.0, %v1025
        %v1027 = vpop.f32.mrb[0].mxu0
        %v1028 = vpop.f32.mrb[0].mxu0
        %v1029 = vadd.f32 0.0, %v1028
        %v1030 = vpop.f32.mrb[0].mxu0
        %1031 = vdwg.mxu0
        %v1032 = vsel %vm729, %v1026, -inf
        %1033 = vmax.xlane.f32.xlu0 %v1032
        %v1034 = vpop.xlane.xlu0 %1033
        %v1035 = vsel %vm729, %v1029, -inf
        %1036 = vmax.xlane.f32.xlu0 %v1035
        %v1037 = vpop.xlane.xlu0 %1036
        %v1038 = vsub.f32 %v1026, %v1034
        %v1039 = vsub.f32 %v1029, %v1037
        %v1040 = vmul.f32 %v1038, 1.442695
        %v1041 = vpow.pop %v1040
        %v1042 = vmul.f32 %v1039, 1.442695
        %v1043 = vpow.pop %v1042
        %v1044 = vsel %vm729, %v1041, 0.0
        %1045 = vadd.xlane.f32.xlu0 %v1044
        %v1046 = vpop.xlane.xlu0 %1045
        %v1047 = vsel %vm729, %v1043, 0.0
        %1048 = vadd.xlane.f32.xlu0 %v1047
        %v1049 = vpop.xlane.xlu0 %1048
        %v1050 = vrcp.pop %v1046
        %v1051 = vrcp.pop %v1049
        %v1052 = vmul.f32 %v1041, %v1050
        %v1053 = vmul.f32 %v1043, %v1051
        %v1054 = vpack.c.bf16 %v640, %v640
        %v1055 = vpack.c.bf16 %v1053, %v1052
        %v1057 = vsel %vm729, %v1054, 0
        %v1060 = vsel %vm729, %v1055, 0
        %1062 = vmatprep.subr.bf16.mxu0 0
        %1063 = vmatpush1.bf16.xpose.msra.mxu0 %v1060
        %1064 = vmatprep.subr.bf16.mxu0 0
        %1065 = vmatpush1.bf16.xpose.msra.mxu0 0
        %1066 = vmatprep.subr.bf16.mxu0 0
        %1067 = vmatpush1.bf16.xpose.msra.mxu0 0
        %1068 = vmatprep.subr.bf16.mxu0 0
        %1069 = vmatpush1.bf16.xpose.msra.mxu0 0
        %1070 = vmatprep.subr.bf16.mxu0 0
        %1071 = vmatpush1.bf16.xpose.msra.mxu0 0
        %1072 = vmatprep.subr.bf16.mxu0 0
        %1073 = vmatpush1.bf16.xpose.msra.mxu0 0
        %1074 = vmatprep.subr.bf16.mxu0 0
        %1075 = vmatpush1.bf16.xpose.msra.mxu0 0
        %1076 = vmatprep.subr.bf16.mxu0 0
        %1077 = vmatpush1.bf16.xpose.msra.mxu0 0
        %1078 = vmatprep.subr.bf16.mxu0 0
        %1079 = vmatpush1.bf16.xpose.msra.mxu0 0
        %1080 = vmatprep.subr.bf16.mxu0 0
        %1081 = vmatpush1.bf16.xpose.msra.mxu0 0
        %1082 = vmatprep.subr.bf16.mxu0 0
        %1083 = vmatpush1.bf16.xpose.msra.mxu0 0
        %1084 = vmatprep.subr.bf16.mxu0 0
        %1085 = vmatpush1.bf16.xpose.msra.mxu0 0
        %1086 = vmatprep.subr.bf16.mxu0 0
        %1087 = vmatpush1.bf16.xpose.msra.mxu0 0
        %1088 = vmatprep.subr.bf16.mxu0 0
        %1089 = vmatpush1.bf16.xpose.msra.mxu0 0
        %1090 = vmatprep.subr.bf16.mxu0 0
        %1091 = vmatpush1.bf16.xpose.msra.mxu0 0
        %1092 = vmatprep.subr.bf16.mxu0 0
        %1093 = vmatpush1.bf16.xpose.msra.mxu0 0
        %1094 = vmatprep.mubr.bf16.mxu0 0
        %1095 = vmatmul.mubr.bf16.gmra.mrb[0].mxu0 %v1057
        %v1096 = vpop.f32.mrb[0].mxu0
        %v1097 = vadd.f32 0.0, %v1096
        %v1098 = vpop.f32.mrb[0].mxu0
        %v1099 = vpop.f32.mrb[0].mxu0
        %v1100 = vpop.f32.mrb[0].mxu0
        %1101 = vdwg.mxu0
        %1102 = vxpose.xlu0.b32.start [1/16] %v611, 128
        %1103 = vxpose.xlu0.b32.cont [2/16] 0.0, 128
        %1104 = vxpose.xlu0.b32.cont [3/16] 0.0, 128
        %1105 = vxpose.xlu0.b32.cont [4/16] 0.0, 128
        %1106 = vxpose.xlu0.b32.cont [5/16] 0.0, 128
        %1107 = vxpose.xlu0.b32.cont [6/16] 0.0, 128
        %1108 = vxpose.xlu0.b32.cont [7/16] 0.0, 128
        %1109 = vxpose.xlu0.b32.cont [8/16] 0.0, 128
        %1110 = vxpose.xlu0.b32.cont [9/16] 0.0, 128
        %1111 = vxpose.xlu0.b32.cont [10/16] 0.0, 128
        %1112 = vxpose.xlu0.b32.cont [11/16] 0.0, 128
        %1113 = vxpose.xlu0.b32.cont [12/16] 0.0, 128
        %1114 = vxpose.xlu0.b32.cont [13/16] 0.0, 128
        %1115 = vxpose.xlu0.b32.cont [14/16] 0.0, 128
        %1116 = vxpose.xlu0.b32.cont [15/16] 0.0, 128
        %1117 = vxpose.xlu0.b32.end [16/16] 0.0, 128
        %v1118 = vpop.trf.xlu0
        %v1119 = vpop.trf.xlu0
        %v1120 = vpop.trf.xlu0
        %v1121 = vpop.trf.xlu0
        %v1122 = vpop.trf.xlu0
        %v1123 = vpop.trf.xlu0
        %v1124 = vpop.trf.xlu0
        %v1125 = vpop.trf.xlu0
        %v1126 = vpop.trf.xlu0
        %v1127 = vpop.trf.xlu0
        %v1128 = vpop.trf.xlu0
        %v1129 = vpop.trf.xlu0
        %v1130 = vpop.trf.xlu0
        %v1131 = vpop.trf.xlu0
        %v1132 = vpop.trf.xlu0
        %v1133 = vpop.trf.xlu0
        %v1134 = vpack.c.bf16 %v1119, %v1118
        %v1135 = vpack.c.bf16 %v627, %v627
        %v1137 = vsel %vm680, %v1134, 0
        %v1140 = vsel %vm684, %v1135, 0
        %1142 = vmatprep.subr.bf16.mxu0 0
        %1143 = vmatpush1.bf16.msra.mxu0 %v1140
        %1144 = vmatprep.subr.bf16.mxu0 0
        %1145 = vmatpush1.bf16.msra.mxu0 0
        %1146 = vmatprep.subr.bf16.mxu0 0
        %1147 = vmatpush1.bf16.msra.mxu0 0
        %1148 = vmatprep.subr.bf16.mxu0 0
        %1149 = vmatpush1.bf16.msra.mxu0 0
        %1150 = vmatprep.subr.bf16.mxu0 0
        %1151 = vmatpush1.bf16.msra.mxu0 0
        %1152 = vmatprep.subr.bf16.mxu0 0
        %1153 = vmatpush1.bf16.msra.mxu0 0
        %1154 = vmatprep.subr.bf16.mxu0 0
        %1155 = vmatpush1.bf16.msra.mxu0 0
        %1156 = vmatprep.subr.bf16.mxu0 0
        %1157 = vmatpush1.bf16.msra.mxu0 0
        %1158 = vmatprep.subr.bf16.mxu0 0
        %1159 = vmatpush1.bf16.msra.mxu0 0
        %1160 = vmatprep.subr.bf16.mxu0 0
        %1161 = vmatpush1.bf16.msra.mxu0 0
        %1162 = vmatprep.subr.bf16.mxu0 0
        %1163 = vmatpush1.bf16.msra.mxu0 0
        %1164 = vmatprep.subr.bf16.mxu0 0
        %1165 = vmatpush1.bf16.msra.mxu0 0
        %1166 = vmatprep.subr.bf16.mxu0 0
        %1167 = vmatpush1.bf16.msra.mxu0 0
        %1168 = vmatprep.subr.bf16.mxu0 0
        %1169 = vmatpush1.bf16.msra.mxu0 0
        %1170 = vmatprep.subr.bf16.mxu0 0
        %1171 = vmatpush1.bf16.msra.mxu0 0
        %1172 = vmatprep.subr.bf16.mxu0 0
        %1173 = vmatpush1.bf16.msra.mxu0 0
        %1174 = vmatprep.mubr.bf16.mxu0 0
        %1175 = vmatmul.mubr.bf16.gmra.mrb[0].mxu0 %v1137
        %v1176 = vpop.f32.mrb[0].mxu0
        %v1177 = vadd.f32 0.0, %v1176
        %v1178 = vpop.f32.mrb[0].mxu0
        %v1179 = vpop.f32.mrb[0].mxu0
        %v1180 = vadd.f32 0.0, %v1179
        %v1181 = vpop.f32.mrb[0].mxu0
        %1182 = vdwg.mxu0
        %v1183 = vsel %vm729, %v1177, -inf
        %1184 = vmax.xlane.f32.xlu0 %v1183
        %v1185 = vpop.xlane.xlu0 %1184
        %v1186 = vsel %vm729, %v1180, -inf
        %1187 = vmax.xlane.f32.xlu0 %v1186
        %v1188 = vpop.xlane.xlu0 %1187
        %v1189 = vsub.f32 %v1177, %v1185
        %v1190 = vsub.f32 %v1180, %v1188
        %v1191 = vmul.f32 %v1189, 1.442695
        %v1192 = vpow.pop %v1191
        %v1193 = vmul.f32 %v1190, 1.442695
        %v1194 = vpow.pop %v1193
        %v1195 = vsel %vm729, %v1192, 0.0
        %1196 = vadd.xlane.f32.xlu0 %v1195
        %v1197 = vpop.xlane.xlu0 %1196
        %v1198 = vsel %vm729, %v1194, 0.0
        %1199 = vadd.xlane.f32.xlu0 %v1198
        %v1200 = vpop.xlane.xlu0 %1199
        %v1201 = vrcp.pop %v1197
        %v1202 = vrcp.pop %v1200
        %v1203 = vmul.f32 %v1192, %v1201
        %v1204 = vmul.f32 %v1194, %v1202
        %v1205 = vpack.c.bf16 %v643, %v643
        %v1206 = vpack.c.bf16 %v1204, %v1203
        %v1208 = vsel %vm729, %v1205, 0
        %v1211 = vsel %vm729, %v1206, 0
        %1213 = vmatprep.subr.bf16.mxu0 0
        %1214 = vmatpush1.bf16.xpose.msra.mxu0 %v1211
        %1215 = vmatprep.subr.bf16.mxu0 0
        %1216 = vmatpush1.bf16.xpose.msra.mxu0 0
        %1217 = vmatprep.subr.bf16.mxu0 0
        %1218 = vmatpush1.bf16.xpose.msra.mxu0 0
        %1219 = vmatprep.subr.bf16.mxu0 0
        %1220 = vmatpush1.bf16.xpose.msra.mxu0 0
        %1221 = vmatprep.subr.bf16.mxu0 0
        %1222 = vmatpush1.bf16.xpose.msra.mxu0 0
        %1223 = vmatprep.subr.bf16.mxu0 0
        %1224 = vmatpush1.bf16.xpose.msra.mxu0 0
        %1225 = vmatprep.subr.bf16.mxu0 0
        %1226 = vmatpush1.bf16.xpose.msra.mxu0 0
        %1227 = vmatprep.subr.bf16.mxu0 0
        %1228 = vmatpush1.bf16.xpose.msra.mxu0 0
        %1229 = vmatprep.subr.bf16.mxu0 0
        %1230 = vmatpush1.bf16.xpose.msra.mxu0 0
        %1231 = vmatprep.subr.bf16.mxu0 0
        %1232 = vmatpush1.bf16.xpose.msra.mxu0 0
        %1233 = vmatprep.subr.bf16.mxu0 0
        %1234 = vmatpush1.bf16.xpose.msra.mxu0 0
        %1235 = vmatprep.subr.bf16.mxu0 0
        %1236 = vmatpush1.bf16.xpose.msra.mxu0 0
        %1237 = vmatprep.subr.bf16.mxu0 0
        %1238 = vmatpush1.bf16.xpose.msra.mxu0 0
        %1239 = vmatprep.subr.bf16.mxu0 0
        %1240 = vmatpush1.bf16.xpose.msra.mxu0 0
        %1241 = vmatprep.subr.bf16.mxu0 0
        %1242 = vmatpush1.bf16.xpose.msra.mxu0 0
        %1243 = vmatprep.subr.bf16.mxu0 0
        %1244 = vmatpush1.bf16.xpose.msra.mxu0 0
        %1245 = vmatprep.mubr.bf16.mxu0 0
        %1246 = vmatmul.mubr.bf16.gmra.mrb[0].mxu0 %v1208
        %v1247 = vpop.f32.mrb[0].mxu0
        %v1248 = vadd.f32 0.0, %v1247
        %v1249 = vpop.f32.mrb[0].mxu0
        %v1250 = vpop.f32.mrb[0].mxu0
        %v1251 = vpop.f32.mrb[0].mxu0
        %1252 = vdwg.mxu0
        %1253 = vxpose.xlu0.b32.start [1/16] %v795, 128
        %1254 = vxpose.xlu0.b32.cont [2/16] %v946, 128
        %1255 = vxpose.xlu0.b32.cont [3/16] %v1097, 128
        %1256 = vxpose.xlu0.b32.cont [4/16] %v1248, 128
        %1257 = vxpose.xlu0.b32.cont [5/16] 0.0, 128
        %1258 = vxpose.xlu0.b32.cont [6/16] 0.0, 128
        %1259 = vxpose.xlu0.b32.cont [7/16] 0.0, 128
        %1260 = vxpose.xlu0.b32.cont [8/16] 0.0, 128
        %1261 = vxpose.xlu0.b32.cont [9/16] 0.0, 128
        %1262 = vxpose.xlu0.b32.cont [10/16] 0.0, 128
        %1263 = vxpose.xlu0.b32.cont [11/16] 0.0, 128
        %1264 = vxpose.xlu0.b32.cont [12/16] 0.0, 128
        %1265 = vxpose.xlu0.b32.cont [13/16] 0.0, 128
        %1266 = vxpose.xlu0.b32.cont [14/16] 0.0, 128
        %1267 = vxpose.xlu0.b32.cont [15/16] 0.0, 128
        %1268 = vxpose.xlu0.b32.end [16/16] 0.0, 128
        %v1269 = vpop.trf.xlu0
        %v1270 = vpop.trf.xlu0
        %v1271 = vpop.trf.xlu0
        %v1272 = vpop.trf.xlu0
        %v1273 = vpop.trf.xlu0
        %v1274 = vpop.trf.xlu0
        %v1275 = vpop.trf.xlu0
        %v1276 = vpop.trf.xlu0
        %v1277 = vpop.trf.xlu0
        %v1278 = vpop.trf.xlu0
        %v1279 = vpop.trf.xlu0
        %v1280 = vpop.trf.xlu0
        %v1281 = vpop.trf.xlu0
        %v1282 = vpop.trf.xlu0
        %v1283 = vpop.trf.xlu0
        %v1284 = vpop.trf.xlu0
        %v1285 = vpack.c.bf16 %v1270, %v1269
        %v1290 = vunpack.c.l.b16 %v437
        %v1291 = vunpack.c.l.b16 %v438
        %v1292 = vunpack.c.l.b16 %v439
        %v1293 = vunpack.c.l.b16 %v440
        %v1294 = vpack.c.b16 %v1291, %v1290
        %v1295 = vpack.c.b16 %v1293, %v1292
        %v1299 = vsel %vm385, %v1285, 0
        %1301 = vmatprep.subr.bf16.mxu0 0
        %1302 = vmatpush1.bf16.msra.mxu0 %v1294
        %1303 = vmatprep.subr.bf16.mxu0 0
        %1304 = vmatpush1.bf16.msra.mxu0 %v1295
        %1305 = vmatprep.subr.bf16.mxu0 0
        %1306 = vmatpush1.bf16.msra.mxu0 0
        %1307 = vmatprep.subr.bf16.mxu0 0
        %1308 = vmatpush1.bf16.msra.mxu0 0
        %1309 = vmatprep.subr.bf16.mxu0 0
        %1310 = vmatpush1.bf16.msra.mxu0 0
        %1311 = vmatprep.subr.bf16.mxu0 0
        %1312 = vmatpush1.bf16.msra.mxu0 0
        %1313 = vmatprep.subr.bf16.mxu0 0
        %1314 = vmatpush1.bf16.msra.mxu0 0
        %1315 = vmatprep.subr.bf16.mxu0 0
        %1316 = vmatpush1.bf16.msra.mxu0 0
        %1317 = vmatprep.subr.bf16.mxu0 0
        %1318 = vmatpush1.bf16.msra.mxu0 0
        %1319 = vmatprep.subr.bf16.mxu0 0
        %1320 = vmatpush1.bf16.msra.mxu0 0
        %1321 = vmatprep.subr.bf16.mxu0 0
        %1322 = vmatpush1.bf16.msra.mxu0 0
        %1323 = vmatprep.subr.bf16.mxu0 0
        %1324 = vmatpush1.bf16.msra.mxu0 0
        %1325 = vmatprep.subr.bf16.mxu0 0
        %1326 = vmatpush1.bf16.msra.mxu0 0
        %1327 = vmatprep.subr.bf16.mxu0 0
        %1328 = vmatpush1.bf16.msra.mxu0 0
        %1329 = vmatprep.subr.bf16.mxu0 0
        %1330 = vmatpush1.bf16.msra.mxu0 0
        %1331 = vmatprep.subr.bf16.mxu0 0
        %1332 = vmatpush1.bf16.msra.mxu0 0
        %1333 = vmatprep.mubr.bf16.mxu0 0
        %1334 = vmatmul.mubr.bf16.gmra.mrb[0].mxu0 %v1299
        %v1335 = vpop.f32.mrb[0].mxu0
        %v1336 = vadd.f32 0.0, %v1335
        %v1337 = vpop.f32.mrb[0].mxu0
        %v1338 = vpop.f32.mrb[0].mxu0
        %v1339 = vadd.f32 0.0, %v1338
        %v1340 = vpop.f32.mrb[0].mxu0
        %1341 = vdwg.mxu0
        %v1342 = vadd.f32 %v379, %v1336
        %v1343 = vadd.f32 %v382, %v1339
        %v1344 = vlaneseq
        %v1345 = vshrl.u32 %v1344, 7
        %v1346 = vsub.s32 2, %v1345
        %v1347 = vrot.slane %v305, %v1346
        %v1348 = vadd.f32 %v1342, %v1347
        %v1349 = vadd.f32 %v1343, %v1347
        %v1350 = vsel %vm385, %v1348, 0.0
        %1351 = vadd.xlane.f32.xlu0 %v1350
        %v1352 = vpop.xlane.xlu0 %1351
        %v1353 = vsel %vm385, %v1349, 0.0
        %1354 = vadd.xlane.f32.xlu0 %v1353
        %v1355 = vpop.xlane.xlu0 %1354
        %v1356 = vmul.f32 %v1352, %v392
        %v1357 = vmul.f32 %v1355, %v392
        %v1358 = vsub.f32 %v1348, %v1356
        %v1359 = vsub.f32 %v1349, %v1357
        %v1360 = vmul.f32 %v1358, %v1358
        %v1361 = vmul.f32 %v1359, %v1359
        %v1362 = vsel %vm385, %v1360, 0.0
        %1363 = vadd.xlane.f32.xlu0 %v1362
        %v1364 = vpop.xlane.xlu0 %1363
        %v1365 = vsel %vm385, %v1361, 0.0
        %1366 = vadd.xlane.f32.xlu0 %v1365
        %v1367 = vpop.xlane.xlu0 %1366
        %v1368 = vmul.f32 %v1364, %v392
        %v1369 = vmul.f32 %v1367, %v392
        %v1370 = vadd.f32 %v1368, 1e-06
        %v1371 = vadd.f32 %v1369, 1e-06
        %v1372 = vrsqrt.pop %v1370
        %v1373 = vrsqrt.pop %v1371
        %v1374 = vmul.f32 %v1358, %v1372
        %v1375 = vmul.f32 %v1359, %v1373
        %v1376 = vlaneseq
        %v1377 = vshrl.u32 %v1376, 7
        %v1378 = vsub.s32 3, %v1377
        %v1379 = vrot.slane %v305, %v1378
        %v1380 = vmul.f32 %v1374, %v1379
        %v1381 = vmul.f32 %v1375, %v1379
        %v1382 = vlaneseq
        %v1383 = vshrl.u32 %v1382, 7
        %v1384 = vsub.s32 4, %v1383
        %v1385 = vrot.slane %v305, %v1384
        %v1386 = vadd.f32 %v1380, %v1385
        %v1387 = vadd.f32 %v1381, %v1385
        %v1388 = vld [vmem:[%s5] sm:$0xf]
        %v1389 = vld [vmem:[%s5 + $0x4] sm:$0xf]
        %v1390 = vld [vmem:[%s5 + $0x8] sm:$0xf]
        %v1391 = vld [vmem:[%s5 + $0xc] sm:$0xf]
        %v1392 = vld [vmem:[%s5 + $0x10] sm:$0xf]
        %v1393 = vld [vmem:[%s5 + $0x14] sm:$0xf]
        %v1394 = vld [vmem:[%s5 + $0x18] sm:$0xf]
        %v1395 = vld [vmem:[%s5 + $0x1c] sm:$0xf]
        %v1396 = vpack.c.bf16 %v1387, %v1386
        %v1397 = vld [vmem:[%s6] sm:$0x1]
        %v1399 = vlaneseq
        %v1400 = vshrl.u32 %v1399, 7
        %v1401 = vsub.s32 0, %v1400
        %v1402 = vrot.slane %v1397, %v1401
        %v1408 = vunpack.c.l.b16 %v1388
        %v1409 = vunpack.c.l.b16 %v1389
        %v1410 = vunpack.c.l.b16 %v1390
        %v1411 = vunpack.c.l.b16 %v1391
        %v1412 = vpack.c.b16 %v1409, %v1408
        %v1413 = vpack.c.b16 %v1411, %v1410
        %v1417 = vsel %vm385, %v1396, 0
        %1419 = vmatprep.subr.bf16.mxu0 0
        %1420 = vmatpush1.bf16.msra.mxu0 %v1412
        %1421 = vmatprep.subr.bf16.mxu0 0
        %1422 = vmatpush1.bf16.msra.mxu0 %v1413
        %1423 = vmatprep.subr.bf16.mxu0 0
        %1424 = vmatpush1.bf16.msra.mxu0 0
        %1425 = vmatprep.subr.bf16.mxu0 0
        %1426 = vmatpush1.bf16.msra.mxu0 0
        %1427 = vmatprep.subr.bf16.mxu0 0
        %1428 = vmatpush1.bf16.msra.mxu0 0
        %1429 = vmatprep.subr.bf16.mxu0 0
        %1430 = vmatpush1.bf16.msra.mxu0 0
        %1431 = vmatprep.subr.bf16.mxu0 0
        %1432 = vmatpush1.bf16.msra.mxu0 0
        %1433 = vmatprep.subr.bf16.mxu0 0
        %1434 = vmatpush1.bf16.msra.mxu0 0
        %1435 = vmatprep.subr.bf16.mxu0 0
        %1436 = vmatpush1.bf16.msra.mxu0 0
        %1437 = vmatprep.subr.bf16.mxu0 0
        %1438 = vmatpush1.bf16.msra.mxu0 0
        %1439 = vmatprep.subr.bf16.mxu0 0
        %1440 = vmatpush1.bf16.msra.mxu0 0
        %1441 = vmatprep.subr.bf16.mxu0 0
        %1442 = vmatpush1.bf16.msra.mxu0 0
        %1443 = vmatprep.subr.bf16.mxu0 0
        %1444 = vmatpush1.bf16.msra.mxu0 0
        %1445 = vmatprep.subr.bf16.mxu0 0
        %1446 = vmatpush1.bf16.msra.mxu0 0
        %1447 = vmatprep.subr.bf16.mxu0 0
        %1448 = vmatpush1.bf16.msra.mxu0 0
        %1449 = vmatprep.subr.bf16.mxu0 0
        %1450 = vmatpush1.bf16.msra.mxu0 0
        %1451 = vmatprep.mubr.bf16.mxu0 0
        %1452 = vmatmul.mubr.bf16.gmra.mrb[0].mxu0 %v1417
        %v1453 = vpop.f32.mrb[0].mxu0
        %v1454 = vadd.f32 %v1402, %v1453
        %v1455 = vpop.f32.mrb[0].mxu0
        %v1456 = vpop.f32.mrb[0].mxu0
        %v1457 = vadd.f32 %v1402, %v1456
        %v1458 = vpop.f32.mrb[0].mxu0
        %1459 = vdwg.mxu0
        %v1460 = vmul.f32 %v1454, 0.5
        %v1461 = vmul.f32 %v1457, 0.5
        %v1462 = vmul.f32 %v1454, 0.044715
        %v1463 = vmul.f32 %v1457, 0.044715
        %v1464 = vmul.f32 %v1462, %v1454
        %v1465 = vmul.f32 %v1463, %v1457
        %v1466 = vmul.f32 %v1464, %v1454
        %v1467 = vmul.f32 %v1465, %v1457
        %v1468 = vadd.f32 %v1454, %v1466
        %v1469 = vadd.f32 %v1457, %v1467
        %v1470 = vmul.f32 %v1468, 0.7978846
        %v1471 = vmul.f32 %v1469, 0.7978846
        %v1472 = vtanh.pop %v1470
        %v1473 = vtanh.pop %v1471
        %v1474 = vadd.f32 %v1472, 1.0
        %v1475 = vadd.f32 %v1473, 1.0
        %v1476 = vmul.f32 %v1460, %v1474
        %v1477 = vmul.f32 %v1461, %v1475
        %v1478 = vpack.c.bf16 %v1477, %v1476
        %v1479 = vlaneseq
        %v1480 = vshrl.u32 %v1479, 7
        %v1481 = vsub.s32 5, %v1480
        %v1482 = vrot.slane %v305, %v1481
        %v1487 = vunpack.c.l.b16 %v1392
        %v1488 = vunpack.c.l.b16 %v1393
        %v1489 = vunpack.c.l.b16 %v1394
        %v1490 = vunpack.c.l.b16 %v1395
        %v1491 = vpack.c.b16 %v1488, %v1487
        %v1492 = vpack.c.b16 %v1490, %v1489
        %vm1493 = vcmask 523264
        %v1495 = vsel %vm1493, %v1478, 0
        %v1498 = vsel %vm1493, %v1491, 0
        %v1501 = vsel %vm1493, %v1492, 0
        %1503 = vmatprep.subr.bf16.mxu0 0
        %1504 = vmatpush1.bf16.xpose.msra.mxu0 %v1498
        %1505 = vmatprep.subr.bf16.mxu0 0
        %1506 = vmatpush1.bf16.xpose.msra.mxu0 %v1501
        %1507 = vmatprep.subr.bf16.mxu0 0
        %1508 = vmatpush1.bf16.xpose.msra.mxu0 0
        %1509 = vmatprep.subr.bf16.mxu0 0
        %1510 = vmatpush1.bf16.xpose.msra.mxu0 0
        %1511 = vmatprep.subr.bf16.mxu0 0
        %1512 = vmatpush1.bf16.xpose.msra.mxu0 0
        %1513 = vmatprep.subr.bf16.mxu0 0
        %1514 = vmatpush1.bf16.xpose.msra.mxu0 0
        %1515 = vmatprep.subr.bf16.mxu0 0
        %1516 = vmatpush1.bf16.xpose.msra.mxu0 0
        %1517 = vmatprep.subr.bf16.mxu0 0
        %1518 = vmatpush1.bf16.xpose.msra.mxu0 0
        %1519 = vmatprep.subr.bf16.mxu0 0
        %1520 = vmatpush1.bf16.xpose.msra.mxu0 0
        %1521 = vmatprep.subr.bf16.mxu0 0
        %1522 = vmatpush1.bf16.xpose.msra.mxu0 0
        %1523 = vmatprep.subr.bf16.mxu0 0
        %1524 = vmatpush1.bf16.xpose.msra.mxu0 0
        %1525 = vmatprep.subr.bf16.mxu0 0
        %1526 = vmatpush1.bf16.xpose.msra.mxu0 0
        %1527 = vmatprep.subr.bf16.mxu0 0
        %1528 = vmatpush1.bf16.xpose.msra.mxu0 0
        %1529 = vmatprep.subr.bf16.mxu0 0
        %1530 = vmatpush1.bf16.xpose.msra.mxu0 0
        %1531 = vmatprep.subr.bf16.mxu0 0
        %1532 = vmatpush1.bf16.xpose.msra.mxu0 0
        %1533 = vmatprep.subr.bf16.mxu0 0
        %1534 = vmatpush1.bf16.xpose.msra.mxu0 0
        %1535 = vmatprep.mubr.bf16.mxu0 0
        %1536 = vmatmul.mubr.bf16.gmra.mrb[0].mxu0 %v1495
        %v1537 = vpop.f32.mrb[0].mxu0
        %v1538 = vadd.f32 %v1482, %v1537
        %v1539 = vpop.f32.mrb[0].mxu0
        %v1540 = vpop.f32.mrb[0].mxu0
        %v1541 = vadd.f32 %v1482, %v1540
        %v1542 = vpop.f32.mrb[0].mxu0
        %1543 = vdwg.mxu0
        %v1544 = vadd.f32 %v1348, %v1538
        %v1545 = vadd.f32 %v1349, %v1541
        %v1546 = vsel %vm385, %v1544, 0.0
        %1547 = vadd.xlane.f32.xlu0 %v1546
        %v1548 = vpop.xlane.xlu0 %1547
        %v1549 = vsel %vm385, %v1545, 0.0
        %1550 = vadd.xlane.f32.xlu0 %v1549
        %v1551 = vpop.xlane.xlu0 %1550
        %v1552 = vmul.f32 %v1548, %v392
        %v1553 = vmul.f32 %v1551, %v392
        %v1554 = vsub.f32 %v1544, %v1552
        %v1555 = vsub.f32 %v1545, %v1553
        %v1556 = vmul.f32 %v1554, %v1554
        %v1557 = vmul.f32 %v1555, %v1555
        %v1558 = vsel %vm385, %v1556, 0.0
        %1559 = vadd.xlane.f32.xlu0 %v1558
        %v1560 = vpop.xlane.xlu0 %1559
        %v1561 = vsel %vm385, %v1557, 0.0
        %1562 = vadd.xlane.f32.xlu0 %v1561
        %v1563 = vpop.xlane.xlu0 %1562
        %v1564 = vmul.f32 %v1560, %v392
        %v1565 = vmul.f32 %v1563, %v392
        %v1566 = vadd.f32 %v1564, 1e-06
        %v1567 = vadd.f32 %v1565, 1e-06
        %v1568 = vrsqrt.pop %v1566
        %v1569 = vrsqrt.pop %v1567
        %v1570 = vmul.f32 %v1554, %v1568
        %v1571 = vmul.f32 %v1555, %v1569
        %v1572 = vlaneseq
        %v1573 = vshrl.u32 %v1572, 7
        %v1574 = vsub.s32 6, %v1573
        %v1575 = vrot.slane %v305, %v1574
        %v1576 = vmul.f32 %v1570, %v1575
        %v1577 = vmul.f32 %v1571, %v1575
        %v1578 = vlaneseq
        %v1579 = vshrl.u32 %v1578, 7
        %v1580 = vsub.s32 7, %v1579
        %v1581 = vrot.slane %v305, %v1580
        %v1582 = vadd.f32 %v1576, %v1581
        %v1583 = vadd.f32 %v1577, %v1581
        %s1584 = scalar_lea.vmem %s3, 64
        %v1585 = vld [vmem:[%s1584] sm:$0xf]
        %v1586 = vld [vmem:[%s1584 + $0x4] sm:$0xf]
        %v1587 = vld [vmem:[%s1584 + $0x8] sm:$0xf]
        %v1588 = vld [vmem:[%s1584 + $0xc] sm:$0xf]
        %v1589 = vld [vmem:[%s1584 + $0x10] sm:$0xf]
        %v1590 = vld [vmem:[%s1584 + $0x14] sm:$0xf]
        %v1591 = vld [vmem:[%s1584 + $0x18] sm:$0xf]
        %v1592 = vld [vmem:[%s1584 + $0x1c] sm:$0xf]
        %v1593 = vld [vmem:[%s1584 + $0x20] sm:$0xf]
        %v1594 = vld [vmem:[%s1584 + $0x24] sm:$0xf]
        %v1595 = vld [vmem:[%s1584 + $0x28] sm:$0xf]
        %v1596 = vld [vmem:[%s1584 + $0x2c] sm:$0xf]
        %v1597 = vld [vmem:[%s1584 + $0x30] sm:$0xf]
        %v1598 = vld [vmem:[%s1584 + $0x34] sm:$0xf]
        %v1599 = vld [vmem:[%s1584 + $0x38] sm:$0xf]
        %v1600 = vld [vmem:[%s1584 + $0x3c] sm:$0xf]
        %v1601 = vpack.c.bf16 %v1583, %v1582
        %s1602 = scalar_lea.vmem %s4, 96
        %v1603 = vld [vmem:[%s1602] sm:$0xff]
        %v1604 = vld [vmem:[%s1602 + $0x8] sm:$0xff]
        %v1605 = vld [vmem:[%s1602 + $0x10] sm:$0xff]
        %v1606 = vld [vmem:[%s1602 + $0x18] sm:$0xff]
        %v1607 = vld [vmem:[%s1602 + $0x20] sm:$0xff]
        %v1608 = vld [vmem:[%s1602 + $0x28] sm:$0xff]
        %v1609 = vld [vmem:[%s1602 + $0x30] sm:$0xff]
        %v1610 = vld [vmem:[%s1602 + $0x38] sm:$0xff]
        %v1611 = vld [vmem:[%s1602 + $0x40] sm:$0xff]
        %v1612 = vld [vmem:[%s1602 + $0x48] sm:$0xff]
        %v1613 = vld [vmem:[%s1602 + $0x50] sm:$0xff]
        %v1614 = vld [vmem:[%s1602 + $0x58] sm:$0xff]
        %1616 = vset.pattern.permute.xlu0 0
        %1617 = vperm.xlu0 %1616, %v1603
        %v1618 = vpop.permute.xlu0 %1617
        %1621 = vset.pattern.permute.xlu0 0
        %1622 = vperm.xlu0 %1621, %v1604
        %v1623 = vpop.permute.xlu0 %1622
        %1626 = vset.pattern.permute.xlu0 0
        %1627 = vperm.xlu0 %1626, %v1605
        %v1628 = vpop.permute.xlu0 %1627
        %1631 = vset.pattern.permute.xlu0 0
        %1632 = vperm.xlu0 %1631, %v1606
        %v1633 = vpop.permute.xlu0 %1632
        %1636 = vset.pattern.permute.xlu0 0
        %1637 = vperm.xlu0 %1636, %v1607
        %v1638 = vpop.permute.xlu0 %1637
        %1641 = vset.pattern.permute.xlu0 0
        %1642 = vperm.xlu0 %1641, %v1608
        %v1643 = vpop.permute.xlu0 %1642
        %1646 = vset.pattern.permute.xlu0 0
        %1647 = vperm.xlu0 %1646, %v1609
        %v1648 = vpop.permute.xlu0 %1647
        %1651 = vset.pattern.permute.xlu0 0
        %1652 = vperm.xlu0 %1651, %v1610
        %v1653 = vpop.permute.xlu0 %1652
        %1656 = vset.pattern.permute.xlu0 0
        %1657 = vperm.xlu0 %1656, %v1611
        %v1658 = vpop.permute.xlu0 %1657
        %1661 = vset.pattern.permute.xlu0 0
        %1662 = vperm.xlu0 %1661, %v1612
        %v1663 = vpop.permute.xlu0 %1662
        %1666 = vset.pattern.permute.xlu0 0
        %1667 = vperm.xlu0 %1666, %v1613
        %v1668 = vpop.permute.xlu0 %1667
        %1671 = vset.pattern.permute.xlu0 0
        %1672 = vperm.xlu0 %1671, %v1614
        %v1673 = vpop.permute.xlu0 %1672
        %v1687 = vunpack.c.l.b16 %v1585
        %v1688 = vunpack.c.l.b16 %v1586
        %v1689 = vunpack.c.l.b16 %v1587
        %v1690 = vunpack.c.l.b16 %v1588
        %v1691 = vunpack.c.l.b16 %v1589
        %v1692 = vunpack.c.l.b16 %v1590
        %v1693 = vunpack.c.l.b16 %v1591
        %v1694 = vunpack.c.l.b16 %v1592
        %v1695 = vunpack.c.l.b16 %v1593
        %v1696 = vunpack.c.l.b16 %v1594
        %v1697 = vunpack.c.l.b16 %v1595
        %v1698 = vunpack.c.l.b16 %v1596
        %v1699 = vpack.c.b16 %v1688, %v1687
        %v1700 = vpack.c.b16 %v1690, %v1689
        %v1701 = vpack.c.b16 %v1692, %v1691
        %v1702 = vpack.c.b16 %v1694, %v1693
        %v1703 = vpack.c.b16 %v1696, %v1695
        %v1704 = vpack.c.b16 %v1698, %v1697
        %v1706 = vsel %vm385, %v1699, 0
        %v1709 = vsel %vm385, %v1700, 0
        %v1712 = vsel %vm385, %v1701, 0
        %v1715 = vsel %vm385, %v1702, 0
        %v1718 = vsel %vm385, %v1703, 0
        %v1721 = vsel %vm385, %v1704, 0
        %v1724 = vsel %vm385, %v1601, 0
        %1726 = vmatprep.subr.bf16.mxu0 0
        %1727 = vmatpush1.bf16.xpose.msra.mxu0 %v1724
        %1728 = vmatprep.subr.bf16.mxu0 0
        %1729 = vmatpush1.bf16.xpose.msra.mxu0 0
        %1730 = vmatprep.subr.bf16.mxu0 0
        %1731 = vmatpush1.bf16.xpose.msra.mxu0 0
        %1732 = vmatprep.subr.bf16.mxu0 0
        %1733 = vmatpush1.bf16.xpose.msra.mxu0 0
        %1734 = vmatprep.subr.bf16.mxu0 0
        %1735 = vmatpush1.bf16.xpose.msra.mxu0 0
        %1736 = vmatprep.subr.bf16.mxu0 0
        %1737 = vmatpush1.bf16.xpose.msra.mxu0 0
        %1738 = vmatprep.subr.bf16.mxu0 0
        %1739 = vmatpush1.bf16.xpose.msra.mxu0 0
        %1740 = vmatprep.subr.bf16.mxu0 0
        %1741 = vmatpush1.bf16.xpose.msra.mxu0 0
        %1742 = vmatprep.subr.bf16.mxu0 0
        %1743 = vmatpush1.bf16.xpose.msra.mxu0 0
        %1744 = vmatprep.subr.bf16.mxu0 0
        %1745 = vmatpush1.bf16.xpose.msra.mxu0 0
        %1746 = vmatprep.subr.bf16.mxu0 0
        %1747 = vmatpush1.bf16.xpose.msra.mxu0 0
        %1748 = vmatprep.subr.bf16.mxu0 0
        %1749 = vmatpush1.bf16.xpose.msra.mxu0 0
        %1750 = vmatprep.subr.bf16.mxu0 0
        %1751 = vmatpush1.bf16.xpose.msra.mxu0 0
        %1752 = vmatprep.subr.bf16.mxu0 0
        %1753 = vmatpush1.bf16.xpose.msra.mxu0 0
        %1754 = vmatprep.subr.bf16.mxu0 0
        %1755 = vmatpush1.bf16.xpose.msra.mxu0 0
        %1756 = vmatprep.subr.bf16.mxu0 0
        %1757 = vmatpush1.bf16.xpose.msra.mxu0 0
        %1758 = vmatprep.mubr.bf16.mxu0 0
        %1759 = vmatmul.mubr.bf16.gmra.mrb[0].mxu0 %v1706
        %v1760 = vpop.f32.mrb[0].mxu0
        %v1761 = vadd.f32 %v1618, %v1760
        %v1762 = vpop.f32.mrb[0].mxu0
        %v1763 = vpop.f32.mrb[0].mxu0
        %v1764 = vadd.f32 %v1623, %v1763
        %v1765 = vpop.f32.mrb[0].mxu0
        %1766 = vmatprep.mubr.bf16.mxu0 0
        %1767 = vmatmul.mubr.bf16.gmra.mrb[0].mxu0 %v1709
        %v1768 = vpop.f32.mrb[0].mxu0
        %v1769 = vadd.f32 %v1628, %v1768
        %v1770 = vpop.f32.mrb[0].mxu0
        %v1771 = vpop.f32.mrb[0].mxu0
        %v1772 = vadd.f32 %v1633, %v1771
        %v1773 = vpop.f32.mrb[0].mxu0
        %1774 = vmatprep.mubr.bf16.mxu0 0
        %1775 = vmatmul.mubr.bf16.gmra.mrb[0].mxu0 %v1712
        %v1776 = vpop.f32.mrb[0].mxu0
        %v1777 = vadd.f32 %v1638, %v1776
        %v1778 = vpop.f32.mrb[0].mxu0
        %v1779 = vpop.f32.mrb[0].mxu0
        %v1780 = vadd.f32 %v1643, %v1779
        %v1781 = vpop.f32.mrb[0].mxu0
        %1782 = vmatprep.mubr.bf16.mxu0 0
        %1783 = vmatmul.mubr.bf16.gmra.mrb[0].mxu0 %v1715
        %v1784 = vpop.f32.mrb[0].mxu0
        %v1785 = vadd.f32 %v1648, %v1784
        %v1786 = vpop.f32.mrb[0].mxu0
        %v1787 = vpop.f32.mrb[0].mxu0
        %v1788 = vadd.f32 %v1653, %v1787
        %v1789 = vpop.f32.mrb[0].mxu0
        %1790 = vmatprep.mubr.bf16.mxu0 0
        %1791 = vmatmul.mubr.bf16.gmra.mrb[0].mxu0 %v1718
        %v1792 = vpop.f32.mrb[0].mxu0
        %v1793 = vadd.f32 %v1658, %v1792
        %v1794 = vpop.f32.mrb[0].mxu0
        %v1795 = vpop.f32.mrb[0].mxu0
        %v1796 = vadd.f32 %v1663, %v1795
        %v1797 = vpop.f32.mrb[0].mxu0
        %1798 = vmatprep.mubr.bf16.mxu0 0
        %1799 = vmatmul.mubr.bf16.gmra.mrb[0].mxu0 %v1721
        %v1800 = vpop.f32.mrb[0].mxu0
        %v1801 = vadd.f32 %v1668, %v1800
        %v1802 = vpop.f32.mrb[0].mxu0
        %v1803 = vpop.f32.mrb[0].mxu0
        %v1804 = vadd.f32 %v1673, %v1803
        %v1805 = vpop.f32.mrb[0].mxu0
        %1806 = vdwg.mxu0
        %1807 = vxpose.xlu0.b32.start [1/16] %v1761, 128
        %1808 = vxpose.xlu0.b32.cont [2/16] 0.0, 128
        %1809 = vxpose.xlu0.b32.cont [3/16] 0.0, 128
        %1810 = vxpose.xlu0.b32.cont [4/16] 0.0, 128
        %1811 = vxpose.xlu0.b32.cont [5/16] 0.0, 128
        %1812 = vxpose.xlu0.b32.cont [6/16] 0.0, 128
        %1813 = vxpose.xlu0.b32.cont [7/16] 0.0, 128
        %1814 = vxpose.xlu0.b32.cont [8/16] 0.0, 128
        %1815 = vxpose.xlu0.b32.cont [9/16] 0.0, 128
        %1816 = vxpose.xlu0.b32.cont [10/16] 0.0, 128
        %1817 = vxpose.xlu0.b32.cont [11/16] 0.0, 128
        %1818 = vxpose.xlu0.b32.cont [12/16] 0.0, 128
        %1819 = vxpose.xlu0.b32.cont [13/16] 0.0, 128
        %1820 = vxpose.xlu0.b32.cont [14/16] 0.0, 128
        %1821 = vxpose.xlu0.b32.cont [15/16] 0.0, 128
        %1822 = vxpose.xlu0.b32.end [16/16] 0.0, 128
        %v1823 = vpop.trf.xlu0
        %v1824 = vpop.trf.xlu0
        %v1825 = vpop.trf.xlu0
        %v1826 = vpop.trf.xlu0
        %v1827 = vpop.trf.xlu0
        %v1828 = vpop.trf.xlu0
        %v1829 = vpop.trf.xlu0
        %v1830 = vpop.trf.xlu0
        %v1831 = vpop.trf.xlu0
        %v1832 = vpop.trf.xlu0
        %v1833 = vpop.trf.xlu0
        %v1834 = vpop.trf.xlu0
        %v1835 = vpop.trf.xlu0
        %v1836 = vpop.trf.xlu0
        %v1837 = vpop.trf.xlu0
        %v1838 = vpop.trf.xlu0
        %v1839 = vpack.c.bf16 %v1824, %v1823
        %v1840 = vpack.c.bf16 %v1777, %v1777
        %v1842 = vsel %vm680, %v1839, 0
        %v1845 = vsel %vm684, %v1840, 0
        %1847 = vmatprep.subr.bf16.mxu0 0
        %1848 = vmatpush1.bf16.msra.mxu0 %v1845
        %1849 = vmatprep.subr.bf16.mxu0 0
        %1850 = vmatpush1.bf16.msra.mxu0 0
        %1851 = vmatprep.subr.bf16.mxu0 0
        %1852 = vmatpush1.bf16.msra.mxu0 0
        %1853 = vmatprep.subr.bf16.mxu0 0
        %1854 = vmatpush1.bf16.msra.mxu0 0
        %1855 = vmatprep.subr.bf16.mxu0 0
        %1856 = vmatpush1.bf16.msra.mxu0 0
        %1857 = vmatprep.subr.bf16.mxu0 0
        %1858 = vmatpush1.bf16.msra.mxu0 0
        %1859 = vmatprep.subr.bf16.mxu0 0
        %1860 = vmatpush1.bf16.msra.mxu0 0
        %1861 = vmatprep.subr.bf16.mxu0 0
        %1862 = vmatpush1.bf16.msra.mxu0 0
        %1863 = vmatprep.subr.bf16.mxu0 0
        %1864 = vmatpush1.bf16.msra.mxu0 0
        %1865 = vmatprep.subr.bf16.mxu0 0
        %1866 = vmatpush1.bf16.msra.mxu0 0
        %1867 = vmatprep.subr.bf16.mxu0 0
        %1868 = vmatpush1.bf16.msra.mxu0 0
        %1869 = vmatprep.subr.bf16.mxu0 0
        %1870 = vmatpush1.bf16.msra.mxu0 0
        %1871 = vmatprep.subr.bf16.mxu0 0
        %1872 = vmatpush1.bf16.msra.mxu0 0
        %1873 = vmatprep.subr.bf16.mxu0 0
        %1874 = vmatpush1.bf16.msra.mxu0 0
        %1875 = vmatprep.subr.bf16.mxu0 0
        %1876 = vmatpush1.bf16.msra.mxu0 0
        %1877 = vmatprep.subr.bf16.mxu0 0
        %1878 = vmatpush1.bf16.msra.mxu0 0
        %1879 = vmatprep.mubr.bf16.mxu0 0
        %1880 = vmatmul.mubr.bf16.gmra.mrb[0].mxu0 %v1842
        %v1881 = vpop.f32.mrb[0].mxu0
        %v1882 = vadd.f32 0.0, %v1881
        %v1883 = vpop.f32.mrb[0].mxu0
        %v1884 = vpop.f32.mrb[0].mxu0
        %v1885 = vadd.f32 0.0, %v1884
        %v1886 = vpop.f32.mrb[0].mxu0
        %1887 = vdwg.mxu0
        %v1888 = vsel %vm729, %v1882, -inf
        %1889 = vmax.xlane.f32.xlu0 %v1888
        %v1890 = vpop.xlane.xlu0 %1889
        %v1891 = vsel %vm729, %v1885, -inf
        %1892 = vmax.xlane.f32.xlu0 %v1891
        %v1893 = vpop.xlane.xlu0 %1892
        %v1894 = vsub.f32 %v1882, %v1890
        %v1895 = vsub.f32 %v1885, %v1893
        %v1896 = vmul.f32 %v1894, 1.442695
        %v1897 = vpow.pop %v1896
        %v1898 = vmul.f32 %v1895, 1.442695
        %v1899 = vpow.pop %v1898
        %v1900 = vsel %vm729, %v1897, 0.0
        %1901 = vadd.xlane.f32.xlu0 %v1900
        %v1902 = vpop.xlane.xlu0 %1901
        %v1903 = vsel %vm729, %v1899, 0.0
        %1904 = vadd.xlane.f32.xlu0 %v1903
        %v1905 = vpop.xlane.xlu0 %1904
        %v1906 = vrcp.pop %v1902
        %v1907 = vrcp.pop %v1905
        %v1908 = vmul.f32 %v1897, %v1906
        %v1909 = vmul.f32 %v1899, %v1907
        %v1910 = vpack.c.bf16 %v1793, %v1793
        %v1911 = vpack.c.bf16 %v1909, %v1908
        %v1913 = vsel %vm729, %v1910, 0
        %v1916 = vsel %vm729, %v1911, 0
        %1918 = vmatprep.subr.bf16.mxu0 0
        %1919 = vmatpush1.bf16.xpose.msra.mxu0 %v1916
        %1920 = vmatprep.subr.bf16.mxu0 0
        %1921 = vmatpush1.bf16.xpose.msra.mxu0 0
        %1922 = vmatprep.subr.bf16.mxu0 0
        %1923 = vmatpush1.bf16.xpose.msra.mxu0 0
        %1924 = vmatprep.subr.bf16.mxu0 0
        %1925 = vmatpush1.bf16.xpose.msra.mxu0 0
        %1926 = vmatprep.subr.bf16.mxu0 0
        %1927 = vmatpush1.bf16.xpose.msra.mxu0 0
        %1928 = vmatprep.subr.bf16.mxu0 0
        %1929 = vmatpush1.bf16.xpose.msra.mxu0 0
        %1930 = vmatprep.subr.bf16.mxu0 0
        %1931 = vmatpush1.bf16.xpose.msra.mxu0 0
        %1932 = vmatprep.subr.bf16.mxu0 0
        %1933 = vmatpush1.bf16.xpose.msra.mxu0 0
        %1934 = vmatprep.subr.bf16.mxu0 0
        %1935 = vmatpush1.bf16.xpose.msra.mxu0 0
        %1936 = vmatprep.subr.bf16.mxu0 0
        %1937 = vmatpush1.bf16.xpose.msra.mxu0 0
        %1938 = vmatprep.subr.bf16.mxu0 0
        %1939 = vmatpush1.bf16.xpose.msra.mxu0 0
        %1940 = vmatprep.subr.bf16.mxu0 0
        %1941 = vmatpush1.bf16.xpose.msra.mxu0 0
        %1942 = vmatprep.subr.bf16.mxu0 0
        %1943 = vmatpush1.bf16.xpose.msra.mxu0 0
        %1944 = vmatprep.subr.bf16.mxu0 0
        %1945 = vmatpush1.bf16.xpose.msra.mxu0 0
        %1946 = vmatprep.subr.bf16.mxu0 0
        %1947 = vmatpush1.bf16.xpose.msra.mxu0 0
        %1948 = vmatprep.subr.bf16.mxu0 0
        %1949 = vmatpush1.bf16.xpose.msra.mxu0 0
        %1950 = vmatprep.mubr.bf16.mxu0 0
        %1951 = vmatmul.mubr.bf16.gmra.mrb[0].mxu0 %v1913
        %v1952 = vpop.f32.mrb[0].mxu0
        %v1953 = vadd.f32 0.0, %v1952
        %v1954 = vpop.f32.mrb[0].mxu0
        %v1955 = vpop.f32.mrb[0].mxu0
        %v1956 = vpop.f32.mrb[0].mxu0
        %1957 = vdwg.mxu0
        %1958 = vxpose.xlu0.b32.start [1/16] %v1764, 128
        %1959 = vxpose.xlu0.b32.cont [2/16] 0.0, 128
        %1960 = vxpose.xlu0.b32.cont [3/16] 0.0, 128
        %1961 = vxpose.xlu0.b32.cont [4/16] 0.0, 128
        %1962 = vxpose.xlu0.b32.cont [5/16] 0.0, 128
        %1963 = vxpose.xlu0.b32.cont [6/16] 0.0, 128
        %1964 = vxpose.xlu0.b32.cont [7/16] 0.0, 128
        %1965 = vxpose.xlu0.b32.cont [8/16] 0.0, 128
        %1966 = vxpose.xlu0.b32.cont [9/16] 0.0, 128
        %1967 = vxpose.xlu0.b32.cont [10/16] 0.0, 128
        %1968 = vxpose.xlu0.b32.cont [11/16] 0.0, 128
        %1969 = vxpose.xlu0.b32.cont [12/16] 0.0, 128
        %1970 = vxpose.xlu0.b32.cont [13/16] 0.0, 128
        %1971 = vxpose.xlu0.b32.cont [14/16] 0.0, 128
        %1972 = vxpose.xlu0.b32.cont [15/16] 0.0, 128
        %1973 = vxpose.xlu0.b32.end [16/16] 0.0, 128
        %v1974 = vpop.trf.xlu0
        %v1975 = vpop.trf.xlu0
        %v1976 = vpop.trf.xlu0
        %v1977 = vpop.trf.xlu0
        %v1978 = vpop.trf.xlu0
        %v1979 = vpop.trf.xlu0
        %v1980 = vpop.trf.xlu0
        %v1981 = vpop.trf.xlu0
        %v1982 = vpop.trf.xlu0
        %v1983 = vpop.trf.xlu0
        %v1984 = vpop.trf.xlu0
        %v1985 = vpop.trf.xlu0
        %v1986 = vpop.trf.xlu0
        %v1987 = vpop.trf.xlu0
        %v1988 = vpop.trf.xlu0
        %v1989 = vpop.trf.xlu0
        %v1990 = vpack.c.bf16 %v1975, %v1974
        %v1991 = vpack.c.bf16 %v1780, %v1780
        %v1993 = vsel %vm680, %v1990, 0
        %v1996 = vsel %vm684, %v1991, 0
        %1998 = vmatprep.subr.bf16.mxu0 0
        %1999 = vmatpush1.bf16.msra.mxu0 %v1996
        %2000 = vmatprep.subr.bf16.mxu0 0
        %2001 = vmatpush1.bf16.msra.mxu0 0
        %2002 = vmatprep.subr.bf16.mxu0 0
        %2003 = vmatpush1.bf16.msra.mxu0 0
        %2004 = vmatprep.subr.bf16.mxu0 0
        %2005 = vmatpush1.bf16.msra.mxu0 0
        %2006 = vmatprep.subr.bf16.mxu0 0
        %2007 = vmatpush1.bf16.msra.mxu0 0
        %2008 = vmatprep.subr.bf16.mxu0 0
        %2009 = vmatpush1.bf16.msra.mxu0 0
        %2010 = vmatprep.subr.bf16.mxu0 0
        %2011 = vmatpush1.bf16.msra.mxu0 0
        %2012 = vmatprep.subr.bf16.mxu0 0
        %2013 = vmatpush1.bf16.msra.mxu0 0
        %2014 = vmatprep.subr.bf16.mxu0 0
        %2015 = vmatpush1.bf16.msra.mxu0 0
        %2016 = vmatprep.subr.bf16.mxu0 0
        %2017 = vmatpush1.bf16.msra.mxu0 0
        %2018 = vmatprep.subr.bf16.mxu0 0
        %2019 = vmatpush1.bf16.msra.mxu0 0
        %2020 = vmatprep.subr.bf16.mxu0 0
        %2021 = vmatpush1.bf16.msra.mxu0 0
        %2022 = vmatprep.subr.bf16.mxu0 0
        %2023 = vmatpush1.bf16.msra.mxu0 0
        %2024 = vmatprep.subr.bf16.mxu0 0
        %2025 = vmatpush1.bf16.msra.mxu0 0
        %2026 = vmatprep.subr.bf16.mxu0 0
        %2027 = vmatpush1.bf16.msra.mxu0 0
        %2028 = vmatprep.subr.bf16.mxu0 0
        %2029 = vmatpush1.bf16.msra.mxu0 0
        %2030 = vmatprep.mubr.bf16.mxu0 0
        %2031 = vmatmul.mubr.bf16.gmra.mrb[0].mxu0 %v1993
        %v2032 = vpop.f32.mrb[0].mxu0
        %v2033 = vadd.f32 0.0, %v2032
        %v2034 = vpop.f32.mrb[0].mxu0
        %v2035 = vpop.f32.mrb[0].mxu0
        %v2036 = vadd.f32 0.0, %v2035
        %v2037 = vpop.f32.mrb[0].mxu0
        %2038 = vdwg.mxu0
        %v2039 = vsel %vm729, %v2033, -inf
        %2040 = vmax.xlane.f32.xlu0 %v2039
        %v2041 = vpop.xlane.xlu0 %2040
        %v2042 = vsel %vm729, %v2036, -inf
        %2043 = vmax.xlane.f32.xlu0 %v2042
        %v2044 = vpop.xlane.xlu0 %2043
        %v2045 = vsub.f32 %v2033, %v2041
        %v2046 = vsub.f32 %v2036, %v2044
        %v2047 = vmul.f32 %v2045, 1.442695
        %v2048 = vpow.pop %v2047
        %v2049 = vmul.f32 %v2046, 1.442695
        %v2050 = vpow.pop %v2049
        %v2051 = vsel %vm729, %v2048, 0.0
        %2052 = vadd.xlane.f32.xlu0 %v2051
        %v2053 = vpop.xlane.xlu0 %2052
        %v2054 = vsel %vm729, %v2050, 0.0
        %2055 = vadd.xlane.f32.xlu0 %v2054
        %v2056 = vpop.xlane.xlu0 %2055
        %v2057 = vrcp.pop %v2053
        %v2058 = vrcp.pop %v2056
        %v2059 = vmul.f32 %v2048, %v2057
        %v2060 = vmul.f32 %v2050, %v2058
        %v2061 = vpack.c.bf16 %v1796, %v1796
        %v2062 = vpack.c.bf16 %v2060, %v2059
        %v2064 = vsel %vm729, %v2061, 0
        %v2067 = vsel %vm729, %v2062, 0
        %2069 = vmatprep.subr.bf16.mxu0 0
        %2070 = vmatpush1.bf16.xpose.msra.mxu0 %v2067
        %2071 = vmatprep.subr.bf16.mxu0 0
        %2072 = vmatpush1.bf16.xpose.msra.mxu0 0
        %2073 = vmatprep.subr.bf16.mxu0 0
        %2074 = vmatpush1.bf16.xpose.msra.mxu0 0
        %2075 = vmatprep.subr.bf16.mxu0 0
        %2076 = vmatpush1.bf16.xpose.msra.mxu0 0
        %2077 = vmatprep.subr.bf16.mxu0 0
        %2078 = vmatpush1.bf16.xpose.msra.mxu0 0
        %2079 = vmatprep.subr.bf16.mxu0 0
        %2080 = vmatpush1.bf16.xpose.msra.mxu0 0
        %2081 = vmatprep.subr.bf16.mxu0 0
        %2082 = vmatpush1.bf16.xpose.msra.mxu0 0
        %2083 = vmatprep.subr.bf16.mxu0 0
        %2084 = vmatpush1.bf16.xpose.msra.mxu0 0
        %2085 = vmatprep.subr.bf16.mxu0 0
        %2086 = vmatpush1.bf16.xpose.msra.mxu0 0
        %2087 = vmatprep.subr.bf16.mxu0 0
        %2088 = vmatpush1.bf16.xpose.msra.mxu0 0
        %2089 = vmatprep.subr.bf16.mxu0 0
        %2090 = vmatpush1.bf16.xpose.msra.mxu0 0
        %2091 = vmatprep.subr.bf16.mxu0 0
        %2092 = vmatpush1.bf16.xpose.msra.mxu0 0
        %2093 = vmatprep.subr.bf16.mxu0 0
        %2094 = vmatpush1.bf16.xpose.msra.mxu0 0
        %2095 = vmatprep.subr.bf16.mxu0 0
        %2096 = vmatpush1.bf16.xpose.msra.mxu0 0
        %2097 = vmatprep.subr.bf16.mxu0 0
        %2098 = vmatpush1.bf16.xpose.msra.mxu0 0
        %2099 = vmatprep.subr.bf16.mxu0 0
        %2100 = vmatpush1.bf16.xpose.msra.mxu0 0
        %2101 = vmatprep.mubr.bf16.mxu0 0
        %2102 = vmatmul.mubr.bf16.gmra.mrb[0].mxu0 %v2064
        %v2103 = vpop.f32.mrb[0].mxu0
        %v2104 = vadd.f32 0.0, %v2103
        %v2105 = vpop.f32.mrb[0].mxu0
        %v2106 = vpop.f32.mrb[0].mxu0
        %v2107 = vpop.f32.mrb[0].mxu0
        %2108 = vdwg.mxu0
        %2109 = vxpose.xlu0.b32.start [1/16] %v1769, 128
        %2110 = vxpose.xlu0.b32.cont [2/16] 0.0, 128
        %2111 = vxpose.xlu0.b32.cont [3/16] 0.0, 128
        %2112 = vxpose.xlu0.b32.cont [4/16] 0.0, 128
        %2113 = vxpose.xlu0.b32.cont [5/16] 0.0, 128
        %2114 = vxpose.xlu0.b32.cont [6/16] 0.0, 128
        %2115 = vxpose.xlu0.b32.cont [7/16] 0.0, 128
        %2116 = vxpose.xlu0.b32.cont [8/16] 0.0, 128
        %2117 = vxpose.xlu0.b32.cont [9/16] 0.0, 128
        %2118 = vxpose.xlu0.b32.cont [10/16] 0.0, 128
        %2119 = vxpose.xlu0.b32.cont [11/16] 0.0, 128
        %2120 = vxpose.xlu0.b32.cont [12/16] 0.0, 128
        %2121 = vxpose.xlu0.b32.cont [13/16] 0.0, 128
        %2122 = vxpose.xlu0.b32.cont [14/16] 0.0, 128
        %2123 = vxpose.xlu0.b32.cont [15/16] 0.0, 128
        %2124 = vxpose.xlu0.b32.end [16/16] 0.0, 128
        %v2125 = vpop.trf.xlu0
        %v2126 = vpop.trf.xlu0
        %v2127 = vpop.trf.xlu0
        %v2128 = vpop.trf.xlu0
        %v2129 = vpop.trf.xlu0
        %v2130 = vpop.trf.xlu0
        %v2131 = vpop.trf.xlu0
        %v2132 = vpop.trf.xlu0
        %v2133 = vpop.trf.xlu0
        %v2134 = vpop.trf.xlu0
        %v2135 = vpop.trf.xlu0
        %v2136 = vpop.trf.xlu0
        %v2137 = vpop.trf.xlu0
        %v2138 = vpop.trf.xlu0
        %v2139 = vpop.trf.xlu0
        %v2140 = vpop.trf.xlu0
        %v2141 = vpack.c.bf16 %v2126, %v2125
        %v2142 = vpack.c.bf16 %v1785, %v1785
        %v2144 = vsel %vm680, %v2141, 0
        %v2147 = vsel %vm684, %v2142, 0
        %2149 = vmatprep.subr.bf16.mxu0 0
        %2150 = vmatpush1.bf16.msra.mxu0 %v2147
        %2151 = vmatprep.subr.bf16.mxu0 0
        %2152 = vmatpush1.bf16.msra.mxu0 0
        %2153 = vmatprep.subr.bf16.mxu0 0
        %2154 = vmatpush1.bf16.msra.mxu0 0
        %2155 = vmatprep.subr.bf16.mxu0 0
        %2156 = vmatpush1.bf16.msra.mxu0 0
        %2157 = vmatprep.subr.bf16.mxu0 0
        %2158 = vmatpush1.bf16.msra.mxu0 0
        %2159 = vmatprep.subr.bf16.mxu0 0
        %2160 = vmatpush1.bf16.msra.mxu0 0
        %2161 = vmatprep.subr.bf16.mxu0 0
        %2162 = vmatpush1.bf16.msra.mxu0 0
        %2163 = vmatprep.subr.bf16.mxu0 0
        %2164 = vmatpush1.bf16.msra.mxu0 0
        %2165 = vmatprep.subr.bf16.mxu0 0
        %2166 = vmatpush1.bf16.msra.mxu0 0
        %2167 = vmatprep.subr.bf16.mxu0 0
        %2168 = vmatpush1.bf16.msra.mxu0 0
        %2169 = vmatprep.subr.bf16.mxu0 0
        %2170 = vmatpush1.bf16.msra.mxu0 0
        %2171 = vmatprep.subr.bf16.mxu0 0
        %2172 = vmatpush1.bf16.msra.mxu0 0
        %2173 = vmatprep.subr.bf16.mxu0 0
        %2174 = vmatpush1.bf16.msra.mxu0 0
        %2175 = vmatprep.subr.bf16.mxu0 0
        %2176 = vmatpush1.bf16.msra.mxu0 0
        %2177 = vmatprep.subr.bf16.mxu0 0
        %2178 = vmatpush1.bf16.msra.mxu0 0
        %2179 = vmatprep.subr.bf16.mxu0 0
        %2180 = vmatpush1.bf16.msra.mxu0 0
        %2181 = vmatprep.mubr.bf16.mxu0 0
        %2182 = vmatmul.mubr.bf16.gmra.mrb[0].mxu0 %v2144
        %v2183 = vpop.f32.mrb[0].mxu0
        %v2184 = vadd.f32 0.0, %v2183
        %v2185 = vpop.f32.mrb[0].mxu0
        %v2186 = vpop.f32.mrb[0].mxu0
        %v2187 = vadd.f32 0.0, %v2186
        %v2188 = vpop.f32.mrb[0].mxu0
        %2189 = vdwg.mxu0
        %v2190 = vsel %vm729, %v2184, -inf
        %2191 = vmax.xlane.f32.xlu0 %v2190
        %v2192 = vpop.xlane.xlu0 %2191
        %v2193 = vsel %vm729, %v2187, -inf
        %2194 = vmax.xlane.f32.xlu0 %v2193
        %v2195 = vpop.xlane.xlu0 %2194
        %v2196 = vsub.f32 %v2184, %v2192
        %v2197 = vsub.f32 %v2187, %v2195
        %v2198 = vmul.f32 %v2196, 1.442695
        %v2199 = vpow.pop %v2198
        %v2200 = vmul.f32 %v2197, 1.442695
        %v2201 = vpow.pop %v2200
        %v2202 = vsel %vm729, %v2199, 0.0
        %2203 = vadd.xlane.f32.xlu0 %v2202
        %v2204 = vpop.xlane.xlu0 %2203
        %v2205 = vsel %vm729, %v2201, 0.0
        %2206 = vadd.xlane.f32.xlu0 %v2205
        %v2207 = vpop.xlane.xlu0 %2206
        %v2208 = vrcp.pop %v2204
        %v2209 = vrcp.pop %v2207
        %v2210 = vmul.f32 %v2199, %v2208
        %v2211 = vmul.f32 %v2201, %v2209
        %v2212 = vpack.c.bf16 %v1801, %v1801
        %v2213 = vpack.c.bf16 %v2211, %v2210
        %v2215 = vsel %vm729, %v2212, 0
        %v2218 = vsel %vm729, %v2213, 0
        %2220 = vmatprep.subr.bf16.mxu0 0
        %2221 = vmatpush1.bf16.xpose.msra.mxu0 %v2218
        %2222 = vmatprep.subr.bf16.mxu0 0
        %2223 = vmatpush1.bf16.xpose.msra.mxu0 0
        %2224 = vmatprep.subr.bf16.mxu0 0
        %2225 = vmatpush1.bf16.xpose.msra.mxu0 0
        %2226 = vmatprep.subr.bf16.mxu0 0
        %2227 = vmatpush1.bf16.xpose.msra.mxu0 0
        %2228 = vmatprep.subr.bf16.mxu0 0
        %2229 = vmatpush1.bf16.xpose.msra.mxu0 0
        %2230 = vmatprep.subr.bf16.mxu0 0
        %2231 = vmatpush1.bf16.xpose.msra.mxu0 0
        %2232 = vmatprep.subr.bf16.mxu0 0
        %2233 = vmatpush1.bf16.xpose.msra.mxu0 0
        %2234 = vmatprep.subr.bf16.mxu0 0
        %2235 = vmatpush1.bf16.xpose.msra.mxu0 0
        %2236 = vmatprep.subr.bf16.mxu0 0
        %2237 = vmatpush1.bf16.xpose.msra.mxu0 0
        %2238 = vmatprep.subr.bf16.mxu0 0
        %2239 = vmatpush1.bf16.xpose.msra.mxu0 0
        %2240 = vmatprep.subr.bf16.mxu0 0
        %2241 = vmatpush1.bf16.xpose.msra.mxu0 0
        %2242 = vmatprep.subr.bf16.mxu0 0
        %2243 = vmatpush1.bf16.xpose.msra.mxu0 0
        %2244 = vmatprep.subr.bf16.mxu0 0
        %2245 = vmatpush1.bf16.xpose.msra.mxu0 0
        %2246 = vmatprep.subr.bf16.mxu0 0
        %2247 = vmatpush1.bf16.xpose.msra.mxu0 0
        %2248 = vmatprep.subr.bf16.mxu0 0
        %2249 = vmatpush1.bf16.xpose.msra.mxu0 0
        %2250 = vmatprep.subr.bf16.mxu0 0
        %2251 = vmatpush1.bf16.xpose.msra.mxu0 0
        %2252 = vmatprep.mubr.bf16.mxu0 0
        %2253 = vmatmul.mubr.bf16.gmra.mrb[0].mxu0 %v2215
        %v2254 = vpop.f32.mrb[0].mxu0
        %v2255 = vadd.f32 0.0, %v2254
        %v2256 = vpop.f32.mrb[0].mxu0
        %v2257 = vpop.f32.mrb[0].mxu0
        %v2258 = vpop.f32.mrb[0].mxu0
        %2259 = vdwg.mxu0
        %2260 = vxpose.xlu0.b32.start [1/16] %v1772, 128
        %2261 = vxpose.xlu0.b32.cont [2/16] 0.0, 128
        %2262 = vxpose.xlu0.b32.cont [3/16] 0.0, 128
        %2263 = vxpose.xlu0.b32.cont [4/16] 0.0, 128
        %2264 = vxpose.xlu0.b32.cont [5/16] 0.0, 128
        %2265 = vxpose.xlu0.b32.cont [6/16] 0.0, 128
        %2266 = vxpose.xlu0.b32.cont [7/16] 0.0, 128
        %2267 = vxpose.xlu0.b32.cont [8/16] 0.0, 128
        %2268 = vxpose.xlu0.b32.cont [9/16] 0.0, 128
        %2269 = vxpose.xlu0.b32.cont [10/16] 0.0, 128
        %2270 = vxpose.xlu0.b32.cont [11/16] 0.0, 128
        %2271 = vxpose.xlu0.b32.cont [12/16] 0.0, 128
        %2272 = vxpose.xlu0.b32.cont [13/16] 0.0, 128
        %2273 = vxpose.xlu0.b32.cont [14/16] 0.0, 128
        %2274 = vxpose.xlu0.b32.cont [15/16] 0.0, 128
        %2275 = vxpose.xlu0.b32.end [16/16] 0.0, 128
        %v2276 = vpop.trf.xlu0
        %v2277 = vpop.trf.xlu0
        %v2278 = vpop.trf.xlu0
        %v2279 = vpop.trf.xlu0
        %v2280 = vpop.trf.xlu0
        %v2281 = vpop.trf.xlu0
        %v2282 = vpop.trf.xlu0
        %v2283 = vpop.trf.xlu0
        %v2284 = vpop.trf.xlu0
        %v2285 = vpop.trf.xlu0
        %v2286 = vpop.trf.xlu0
        %v2287 = vpop.trf.xlu0
        %v2288 = vpop.trf.xlu0
        %v2289 = vpop.trf.xlu0
        %v2290 = vpop.trf.xlu0
        %v2291 = vpop.trf.xlu0
        %v2292 = vpack.c.bf16 %v2277, %v2276
        %v2293 = vpack.c.bf16 %v1788, %v1788
        %v2295 = vsel %vm680, %v2292, 0
        %v2298 = vsel %vm684, %v2293, 0
        %2300 = vmatprep.subr.bf16.mxu0 0
        %2301 = vmatpush1.bf16.msra.mxu0 %v2298
        %2302 = vmatprep.subr.bf16.mxu0 0
        %2303 = vmatpush1.bf16.msra.mxu0 0
        %2304 = vmatprep.subr.bf16.mxu0 0
        %2305 = vmatpush1.bf16.msra.mxu0 0
        %2306 = vmatprep.subr.bf16.mxu0 0
        %2307 = vmatpush1.bf16.msra.mxu0 0
        %2308 = vmatprep.subr.bf16.mxu0 0
        %2309 = vmatpush1.bf16.msra.mxu0 0
        %2310 = vmatprep.subr.bf16.mxu0 0
        %2311 = vmatpush1.bf16.msra.mxu0 0
        %2312 = vmatprep.subr.bf16.mxu0 0
        %2313 = vmatpush1.bf16.msra.mxu0 0
        %2314 = vmatprep.subr.bf16.mxu0 0
        %2315 = vmatpush1.bf16.msra.mxu0 0
        %2316 = vmatprep.subr.bf16.mxu0 0
        %2317 = vmatpush1.bf16.msra.mxu0 0
        %2318 = vmatprep.subr.bf16.mxu0 0
        %2319 = vmatpush1.bf16.msra.mxu0 0
        %2320 = vmatprep.subr.bf16.mxu0 0
        %2321 = vmatpush1.bf16.msra.mxu0 0
        %2322 = vmatprep.subr.bf16.mxu0 0
        %2323 = vmatpush1.bf16.msra.mxu0 0
        %2324 = vmatprep.subr.bf16.mxu0 0
        %2325 = vmatpush1.bf16.msra.mxu0 0
        %2326 = vmatprep.subr.bf16.mxu0 0
        %2327 = vmatpush1.bf16.msra.mxu0 0
        %2328 = vmatprep.subr.bf16.mxu0 0
        %2329 = vmatpush1.bf16.msra.mxu0 0
        %2330 = vmatprep.subr.bf16.mxu0 0
        %2331 = vmatpush1.bf16.msra.mxu0 0
        %2332 = vmatprep.mubr.bf16.mxu0 0
        %2333 = vmatmul.mubr.bf16.gmra.mrb[0].mxu0 %v2295
        %v2334 = vpop.f32.mrb[0].mxu0
        %v2335 = vadd.f32 0.0, %v2334
        %v2336 = vpop.f32.mrb[0].mxu0
        %v2337 = vpop.f32.mrb[0].mxu0
        %v2338 = vadd.f32 0.0, %v2337
        %v2339 = vpop.f32.mrb[0].mxu0
        %2340 = vdwg.mxu0
        %v2341 = vsel %vm729, %v2335, -inf
        %2342 = vmax.xlane.f32.xlu0 %v2341
        %v2343 = vpop.xlane.xlu0 %2342
        %v2344 = vsel %vm729, %v2338, -inf
        %2345 = vmax.xlane.f32.xlu0 %v2344
        %v2346 = vpop.xlane.xlu0 %2345
        %v2347 = vsub.f32 %v2335, %v2343
        %v2348 = vsub.f32 %v2338, %v2346
        %v2349 = vmul.f32 %v2347, 1.442695
        %v2350 = vpow.pop %v2349
        %v2351 = vmul.f32 %v2348, 1.442695
        %v2352 = vpow.pop %v2351
        %v2353 = vsel %vm729, %v2350, 0.0
        %2354 = vadd.xlane.f32.xlu0 %v2353
        %v2355 = vpop.xlane.xlu0 %2354
        %v2356 = vsel %vm729, %v2352, 0.0
        %2357 = vadd.xlane.f32.xlu0 %v2356
        %v2358 = vpop.xlane.xlu0 %2357
        %v2359 = vrcp.pop %v2355
        %v2360 = vrcp.pop %v2358
        %v2361 = vmul.f32 %v2350, %v2359
        %v2362 = vmul.f32 %v2352, %v2360
        %v2363 = vpack.c.bf16 %v1804, %v1804
        %v2364 = vpack.c.bf16 %v2362, %v2361
        %v2366 = vsel %vm729, %v2363, 0
        %v2369 = vsel %vm729, %v2364, 0
        %2371 = vmatprep.subr.bf16.mxu0 0
        %2372 = vmatpush1.bf16.xpose.msra.mxu0 %v2369
        %2373 = vmatprep.subr.bf16.mxu0 0
        %2374 = vmatpush1.bf16.xpose.msra.mxu0 0
        %2375 = vmatprep.subr.bf16.mxu0 0
        %2376 = vmatpush1.bf16.xpose.msra.mxu0 0
        %2377 = vmatprep.subr.bf16.mxu0 0
        %2378 = vmatpush1.bf16.xpose.msra.mxu0 0
        %2379 = vmatprep.subr.bf16.mxu0 0
        %2380 = vmatpush1.bf16.xpose.msra.mxu0 0
        %2381 = vmatprep.subr.bf16.mxu0 0
        %2382 = vmatpush1.bf16.xpose.msra.mxu0 0
        %2383 = vmatprep.subr.bf16.mxu0 0
        %2384 = vmatpush1.bf16.xpose.msra.mxu0 0
        %2385 = vmatprep.subr.bf16.mxu0 0
        %2386 = vmatpush1.bf16.xpose.msra.mxu0 0
        %2387 = vmatprep.subr.bf16.mxu0 0
        %2388 = vmatpush1.bf16.xpose.msra.mxu0 0
        %2389 = vmatprep.subr.bf16.mxu0 0
        %2390 = vmatpush1.bf16.xpose.msra.mxu0 0
        %2391 = vmatprep.subr.bf16.mxu0 0
        %2392 = vmatpush1.bf16.xpose.msra.mxu0 0
        %2393 = vmatprep.subr.bf16.mxu0 0
        %2394 = vmatpush1.bf16.xpose.msra.mxu0 0
        %2395 = vmatprep.subr.bf16.mxu0 0
        %2396 = vmatpush1.bf16.xpose.msra.mxu0 0
        %2397 = vmatprep.subr.bf16.mxu0 0
        %2398 = vmatpush1.bf16.xpose.msra.mxu0 0
        %2399 = vmatprep.subr.bf16.mxu0 0
        %2400 = vmatpush1.bf16.xpose.msra.mxu0 0
        %2401 = vmatprep.subr.bf16.mxu0 0
        %2402 = vmatpush1.bf16.xpose.msra.mxu0 0
        %2403 = vmatprep.mubr.bf16.mxu0 0
        %2404 = vmatmul.mubr.bf16.gmra.mrb[0].mxu0 %v2366
        %v2405 = vpop.f32.mrb[0].mxu0
        %v2406 = vadd.f32 0.0, %v2405
        %v2407 = vpop.f32.mrb[0].mxu0
        %v2408 = vpop.f32.mrb[0].mxu0
        %v2409 = vpop.f32.mrb[0].mxu0
        %2410 = vdwg.mxu0
        %2411 = vxpose.xlu0.b32.start [1/16] %v1953, 128
        %2412 = vxpose.xlu0.b32.cont [2/16] %v2104, 128
        %2413 = vxpose.xlu0.b32.cont [3/16] %v2255, 128
        %2414 = vxpose.xlu0.b32.cont [4/16] %v2406, 128
        %2415 = vxpose.xlu0.b32.cont [5/16] 0.0, 128
        %2416 = vxpose.xlu0.b32.cont [6/16] 0.0, 128
        %2417 = vxpose.xlu0.b32.cont [7/16] 0.0, 128
        %2418 = vxpose.xlu0.b32.cont [8/16] 0.0, 128
        %2419 = vxpose.xlu0.b32.cont [9/16] 0.0, 128
        %2420 = vxpose.xlu0.b32.cont [10/16] 0.0, 128
        %2421 = vxpose.xlu0.b32.cont [11/16] 0.0, 128
        %2422 = vxpose.xlu0.b32.cont [12/16] 0.0, 128
        %2423 = vxpose.xlu0.b32.cont [13/16] 0.0, 128
        %2424 = vxpose.xlu0.b32.cont [14/16] 0.0, 128
        %2425 = vxpose.xlu0.b32.cont [15/16] 0.0, 128
        %2426 = vxpose.xlu0.b32.end [16/16] 0.0, 128
        %v2427 = vpop.trf.xlu0
        %v2428 = vpop.trf.xlu0
        %v2429 = vpop.trf.xlu0
        %v2430 = vpop.trf.xlu0
        %v2431 = vpop.trf.xlu0
        %v2432 = vpop.trf.xlu0
        %v2433 = vpop.trf.xlu0
        %v2434 = vpop.trf.xlu0
        %v2435 = vpop.trf.xlu0
        %v2436 = vpop.trf.xlu0
        %v2437 = vpop.trf.xlu0
        %v2438 = vpop.trf.xlu0
        %v2439 = vpop.trf.xlu0
        %v2440 = vpop.trf.xlu0
        %v2441 = vpop.trf.xlu0
        %v2442 = vpop.trf.xlu0
        %v2443 = vpack.c.bf16 %v2428, %v2427
        %v2448 = vunpack.c.l.b16 %v1597
        %v2449 = vunpack.c.l.b16 %v1598
        %v2450 = vunpack.c.l.b16 %v1599
        %v2451 = vunpack.c.l.b16 %v1600
        %v2452 = vpack.c.b16 %v2449, %v2448
        %v2453 = vpack.c.b16 %v2451, %v2450
        %v2457 = vsel %vm385, %v2443, 0
        %2459 = vmatprep.subr.bf16.mxu0 0
        %2460 = vmatpush1.bf16.msra.mxu0 %v2452
        %2461 = vmatprep.subr.bf16.mxu0 0
        %2462 = vmatpush1.bf16.msra.mxu0 %v2453
        %2463 = vmatprep.subr.bf16.mxu0 0
        %2464 = vmatpush1.bf16.msra.mxu0 0
        %2465 = vmatprep.subr.bf16.mxu0 0
        %2466 = vmatpush1.bf16.msra.mxu0 0
        %2467 = vmatprep.subr.bf16.mxu0 0
        %2468 = vmatpush1.bf16.msra.mxu0 0
        %2469 = vmatprep.subr.bf16.mxu0 0
        %2470 = vmatpush1.bf16.msra.mxu0 0
        %2471 = vmatprep.subr.bf16.mxu0 0
        %2472 = vmatpush1.bf16.msra.mxu0 0
        %2473 = vmatprep.subr.bf16.mxu0 0
        %2474 = vmatpush1.bf16.msra.mxu0 0
        %2475 = vmatprep.subr.bf16.mxu0 0
        %2476 = vmatpush1.bf16.msra.mxu0 0
        %2477 = vmatprep.subr.bf16.mxu0 0
        %2478 = vmatpush1.bf16.msra.mxu0 0
        %2479 = vmatprep.subr.bf16.mxu0 0
        %2480 = vmatpush1.bf16.msra.mxu0 0
        %2481 = vmatprep.subr.bf16.mxu0 0
        %2482 = vmatpush1.bf16.msra.mxu0 0
        %2483 = vmatprep.subr.bf16.mxu0 0
        %2484 = vmatpush1.bf16.msra.mxu0 0
        %2485 = vmatprep.subr.bf16.mxu0 0
        %2486 = vmatpush1.bf16.msra.mxu0 0
        %2487 = vmatprep.subr.bf16.mxu0 0
        %2488 = vmatpush1.bf16.msra.mxu0 0
        %2489 = vmatprep.subr.bf16.mxu0 0
        %2490 = vmatpush1.bf16.msra.mxu0 0
        %2491 = vmatprep.mubr.bf16.mxu0 0
        %2492 = vmatmul.mubr.bf16.gmra.mrb[0].mxu0 %v2457
        %v2493 = vpop.f32.mrb[0].mxu0
        %v2494 = vadd.f32 0.0, %v2493
        %v2495 = vpop.f32.mrb[0].mxu0
        %v2496 = vpop.f32.mrb[0].mxu0
        %v2497 = vadd.f32 0.0, %v2496
        %v2498 = vpop.f32.mrb[0].mxu0
        %2499 = vdwg.mxu0
        %v2500 = vadd.f32 %v1544, %v2494
        %v2501 = vadd.f32 %v1545, %v2497
        %v2502 = vlaneseq
        %v2503 = vshrl.u32 %v2502, 7
        %v2504 = vsub.s32 0, %v2503
        %v2505 = vrot.slane %v306, %v2504
        %v2506 = vadd.f32 %v2500, %v2505
        %v2507 = vadd.f32 %v2501, %v2505
        %v2508 = vsel %vm385, %v2506, 0.0
        %2509 = vadd.xlane.f32.xlu0 %v2508
        %v2510 = vpop.xlane.xlu0 %2509
        %v2511 = vsel %vm385, %v2507, 0.0
        %2512 = vadd.xlane.f32.xlu0 %v2511
        %v2513 = vpop.xlane.xlu0 %2512
        %v2514 = vmul.f32 %v2510, %v392
        %v2515 = vmul.f32 %v2513, %v392
        %v2516 = vsub.f32 %v2506, %v2514
        %v2517 = vsub.f32 %v2507, %v2515
        %v2518 = vmul.f32 %v2516, %v2516
        %v2519 = vmul.f32 %v2517, %v2517
        %v2520 = vsel %vm385, %v2518, 0.0
        %2521 = vadd.xlane.f32.xlu0 %v2520
        %v2522 = vpop.xlane.xlu0 %2521
        %v2523 = vsel %vm385, %v2519, 0.0
        %2524 = vadd.xlane.f32.xlu0 %v2523
        %v2525 = vpop.xlane.xlu0 %2524
        %v2526 = vmul.f32 %v2522, %v392
        %v2527 = vmul.f32 %v2525, %v392
        %v2528 = vadd.f32 %v2526, 1e-06
        %v2529 = vadd.f32 %v2527, 1e-06
        %v2530 = vrsqrt.pop %v2528
        %v2531 = vrsqrt.pop %v2529
        %v2532 = vmul.f32 %v2516, %v2530
        %v2533 = vmul.f32 %v2517, %v2531
        %v2534 = vlaneseq
        %v2535 = vshrl.u32 %v2534, 7
        %v2536 = vsub.s32 1, %v2535
        %v2537 = vrot.slane %v306, %v2536
        %v2538 = vmul.f32 %v2532, %v2537
        %v2539 = vmul.f32 %v2533, %v2537
        %v2540 = vlaneseq
        %v2541 = vshrl.u32 %v2540, 7
        %v2542 = vsub.s32 2, %v2541
        %v2543 = vrot.slane %v306, %v2542
        %v2544 = vadd.f32 %v2538, %v2543
        %v2545 = vadd.f32 %v2539, %v2543
        %s2546 = scalar_lea.vmem %s5, 32
        %v2547 = vld [vmem:[%s2546] sm:$0xf]
        %v2548 = vld [vmem:[%s2546 + $0x4] sm:$0xf]
        %v2549 = vld [vmem:[%s2546 + $0x8] sm:$0xf]
        %v2550 = vld [vmem:[%s2546 + $0xc] sm:$0xf]
        %v2551 = vld [vmem:[%s2546 + $0x10] sm:$0xf]
        %v2552 = vld [vmem:[%s2546 + $0x14] sm:$0xf]
        %v2553 = vld [vmem:[%s2546 + $0x18] sm:$0xf]
        %v2554 = vld [vmem:[%s2546 + $0x1c] sm:$0xf]
        %v2555 = vpack.c.bf16 %v2545, %v2544
        %s2556 = scalar_lea.vmem %s6, 1
        %v2557 = vld [vmem:[%s2556] sm:$0x1]
        %v2559 = vlaneseq
        %v2560 = vshrl.u32 %v2559, 7
        %v2561 = vsub.s32 0, %v2560
        %v2562 = vrot.slane %v2557, %v2561
        %v2568 = vunpack.c.l.b16 %v2547
        %v2569 = vunpack.c.l.b16 %v2548
        %v2570 = vunpack.c.l.b16 %v2549
        %v2571 = vunpack.c.l.b16 %v2550
        %v2572 = vpack.c.b16 %v2569, %v2568
        %v2573 = vpack.c.b16 %v2571, %v2570
        %v2577 = vsel %vm385, %v2555, 0
        %2579 = vmatprep.subr.bf16.mxu0 0
        %2580 = vmatpush1.bf16.msra.mxu0 %v2572
        %2581 = vmatprep.subr.bf16.mxu0 0
        %2582 = vmatpush1.bf16.msra.mxu0 %v2573
        %2583 = vmatprep.subr.bf16.mxu0 0
        %2584 = vmatpush1.bf16.msra.mxu0 0
        %2585 = vmatprep.subr.bf16.mxu0 0
        %2586 = vmatpush1.bf16.msra.mxu0 0
        %2587 = vmatprep.subr.bf16.mxu0 0
        %2588 = vmatpush1.bf16.msra.mxu0 0
        %2589 = vmatprep.subr.bf16.mxu0 0
        %2590 = vmatpush1.bf16.msra.mxu0 0
        %2591 = vmatprep.subr.bf16.mxu0 0
        %2592 = vmatpush1.bf16.msra.mxu0 0
        %2593 = vmatprep.subr.bf16.mxu0 0
        %2594 = vmatpush1.bf16.msra.mxu0 0
        %2595 = vmatprep.subr.bf16.mxu0 0
        %2596 = vmatpush1.bf16.msra.mxu0 0
        %2597 = vmatprep.subr.bf16.mxu0 0
        %2598 = vmatpush1.bf16.msra.mxu0 0
        %2599 = vmatprep.subr.bf16.mxu0 0
        %2600 = vmatpush1.bf16.msra.mxu0 0
        %2601 = vmatprep.subr.bf16.mxu0 0
        %2602 = vmatpush1.bf16.msra.mxu0 0
        %2603 = vmatprep.subr.bf16.mxu0 0
        %2604 = vmatpush1.bf16.msra.mxu0 0
        %2605 = vmatprep.subr.bf16.mxu0 0
        %2606 = vmatpush1.bf16.msra.mxu0 0
        %2607 = vmatprep.subr.bf16.mxu0 0
        %2608 = vmatpush1.bf16.msra.mxu0 0
        %2609 = vmatprep.subr.bf16.mxu0 0
        %2610 = vmatpush1.bf16.msra.mxu0 0
        %2611 = vmatprep.mubr.bf16.mxu0 0
        %2612 = vmatmul.mubr.bf16.gmra.mrb[0].mxu0 %v2577
        %v2613 = vpop.f32.mrb[0].mxu0
        %v2614 = vadd.f32 %v2562, %v2613
        %v2615 = vpop.f32.mrb[0].mxu0
        %v2616 = vpop.f32.mrb[0].mxu0
        %v2617 = vadd.f32 %v2562, %v2616
        %v2618 = vpop.f32.mrb[0].mxu0
        %2619 = vdwg.mxu0
        %v2620 = vmul.f32 %v2614, 0.5
        %v2621 = vmul.f32 %v2617, 0.5
        %v2622 = vmul.f32 %v2614, 0.044715
        %v2623 = vmul.f32 %v2617, 0.044715
        %v2624 = vmul.f32 %v2622, %v2614
        %v2625 = vmul.f32 %v2623, %v2617
        %v2626 = vmul.f32 %v2624, %v2614
        %v2627 = vmul.f32 %v2625, %v2617
        %v2628 = vadd.f32 %v2614, %v2626
        %v2629 = vadd.f32 %v2617, %v2627
        %v2630 = vmul.f32 %v2628, 0.7978846
        %v2631 = vmul.f32 %v2629, 0.7978846
        %v2632 = vtanh.pop %v2630
        %v2633 = vtanh.pop %v2631
        %v2634 = vadd.f32 %v2632, 1.0
        %v2635 = vadd.f32 %v2633, 1.0
        %v2636 = vmul.f32 %v2620, %v2634
        %v2637 = vmul.f32 %v2621, %v2635
        %v2638 = vpack.c.bf16 %v2637, %v2636
        %v2639 = vlaneseq
        %v2640 = vshrl.u32 %v2639, 7
        %v2641 = vsub.s32 3, %v2640
        %v2642 = vrot.slane %v306, %v2641
        %v2647 = vunpack.c.l.b16 %v2551
        %v2648 = vunpack.c.l.b16 %v2552
        %v2649 = vunpack.c.l.b16 %v2553
        %v2650 = vunpack.c.l.b16 %v2554
        %v2651 = vpack.c.b16 %v2648, %v2647
        %v2652 = vpack.c.b16 %v2650, %v2649
        %v2654 = vsel %vm1493, %v2638, 0
        %v2657 = vsel %vm1493, %v2651, 0
        %v2660 = vsel %vm1493, %v2652, 0
        %2662 = vmatprep.subr.bf16.mxu0 0
        %2663 = vmatpush1.bf16.xpose.msra.mxu0 %v2657
        %2664 = vmatprep.subr.bf16.mxu0 0
        %2665 = vmatpush1.bf16.xpose.msra.mxu0 %v2660
        %2666 = vmatprep.subr.bf16.mxu0 0
        %2667 = vmatpush1.bf16.xpose.msra.mxu0 0
        %2668 = vmatprep.subr.bf16.mxu0 0
        %2669 = vmatpush1.bf16.xpose.msra.mxu0 0
        %2670 = vmatprep.subr.bf16.mxu0 0
        %2671 = vmatpush1.bf16.xpose.msra.mxu0 0
        %2672 = vmatprep.subr.bf16.mxu0 0
        %2673 = vmatpush1.bf16.xpose.msra.mxu0 0
        %2674 = vmatprep.subr.bf16.mxu0 0
        %2675 = vmatpush1.bf16.xpose.msra.mxu0 0
        %2676 = vmatprep.subr.bf16.mxu0 0
        %2677 = vmatpush1.bf16.xpose.msra.mxu0 0
        %2678 = vmatprep.subr.bf16.mxu0 0
        %2679 = vmatpush1.bf16.xpose.msra.mxu0 0
        %2680 = vmatprep.subr.bf16.mxu0 0
        %2681 = vmatpush1.bf16.xpose.msra.mxu0 0
        %2682 = vmatprep.subr.bf16.mxu0 0
        %2683 = vmatpush1.bf16.xpose.msra.mxu0 0
        %2684 = vmatprep.subr.bf16.mxu0 0
        %2685 = vmatpush1.bf16.xpose.msra.mxu0 0
        %2686 = vmatprep.subr.bf16.mxu0 0
        %2687 = vmatpush1.bf16.xpose.msra.mxu0 0
        %2688 = vmatprep.subr.bf16.mxu0 0
        %2689 = vmatpush1.bf16.xpose.msra.mxu0 0
        %2690 = vmatprep.subr.bf16.mxu0 0
        %2691 = vmatpush1.bf16.xpose.msra.mxu0 0
        %2692 = vmatprep.subr.bf16.mxu0 0
        %2693 = vmatpush1.bf16.xpose.msra.mxu0 0
        %2694 = vmatprep.mubr.bf16.mxu0 0
        %2695 = vmatmul.mubr.bf16.gmra.mrb[0].mxu0 %v2654
        %v2696 = vpop.f32.mrb[0].mxu0
        %v2697 = vadd.f32 %v2642, %v2696
        %v2698 = vpop.f32.mrb[0].mxu0
        %v2699 = vpop.f32.mrb[0].mxu0
        %v2700 = vadd.f32 %v2642, %v2699
        %v2701 = vpop.f32.mrb[0].mxu0
        %2702 = vdwg.mxu0
        %v2703 = vadd.f32 %v2506, %v2697
        %v2704 = vadd.f32 %v2507, %v2700
        %v2705 = vsel %vm385, %v2703, 0.0
        %2706 = vadd.xlane.f32.xlu0 %v2705
        %v2707 = vpop.xlane.xlu0 %2706
        %v2708 = vsel %vm385, %v2704, 0.0
        %2709 = vadd.xlane.f32.xlu0 %v2708
        %v2710 = vpop.xlane.xlu0 %2709
        %v2711 = vmul.f32 %v2707, %v392
        %v2712 = vmul.f32 %v2710, %v392
        %v2713 = vsub.f32 %v2703, %v2711
        %v2714 = vsub.f32 %v2704, %v2712
        %v2715 = vmul.f32 %v2713, %v2713
        %v2716 = vmul.f32 %v2714, %v2714
        %v2717 = vsel %vm385, %v2715, 0.0
        %2718 = vadd.xlane.f32.xlu0 %v2717
        %v2719 = vpop.xlane.xlu0 %2718
        %v2720 = vsel %vm385, %v2716, 0.0
        %2721 = vadd.xlane.f32.xlu0 %v2720
        %v2722 = vpop.xlane.xlu0 %2721
        %v2723 = vmul.f32 %v2719, %v392
        %v2724 = vmul.f32 %v2722, %v392
        %v2725 = vadd.f32 %v2723, 1e-06
        %v2726 = vadd.f32 %v2724, 1e-06
        %v2727 = vrsqrt.pop %v2725
        %v2728 = vrsqrt.pop %v2726
        %v2729 = vmul.f32 %v2713, %v2727
        %v2730 = vmul.f32 %v2714, %v2728
        %v2731 = vlaneseq
        %v2732 = vshrl.u32 %v2731, 7
        %v2733 = vsub.s32 4, %v2732
        %v2734 = vrot.slane %v306, %v2733
        %v2735 = vmul.f32 %v2729, %v2734
        %v2736 = vmul.f32 %v2730, %v2734
        %v2737 = vlaneseq
        %v2738 = vshrl.u32 %v2737, 7
        %v2739 = vsub.s32 5, %v2738
        %v2740 = vrot.slane %v306, %v2739
        %v2741 = vadd.f32 %v2735, %v2740
        %v2742 = vadd.f32 %v2736, %v2740
        %2743 = vst.msk [vmem:[%s298] sm:$0xff] %vm385, %v2741
        %2744 = vst.msk [vmem:[%s298 + $0x8] sm:$0xff] %vm385, %v2742
        %s2745 = sand.u32 %s203, 1
        %s2746 = scalar_lea.sflag [#allocation3], %s2745
        %s2747 = sand.u32 %s203, 1
        %s2748 = smul.addr %s2747, 16
        %s2749 = scalar_lea.vmem [#allocation2], %s2748
        // Predicated region
        $region53: #{siglip_vision_transformer.1} parent=51 // pred_check
          %p2750 = pneg %p213
        $region54: #{siglip_vision_transformer.1} parent=51 // pred_check_branch
          %2752 = sbr.rel (%p2750) target = $region56
        $region55: #{siglip_vision_transformer.1} parent=51 // pred_region
          %s2754 = ssub.s32 256, 256
          %2755 = vsyncadd %s2746, %s2754
          %s2756 = smul.addr %s22, 2
          %s2757 = smul.addr %s2756, 128
          %s2758 = scalar_lea.hbm %s8, %s2757
          %s2759 = sshll.u32 %s2749, 4
          %s2760 = int_to_ptr.vmem [resolvable:$true] %s2759
          %2765 = dma.vmem_to_hbm [thread:$0]  %s2760, 256, %s2758, %s2746, 128, 128, 8
        $region56: #{siglip_vision_transformer.1} parent=51 // pred_fallthru
          _
      $region52: #{siglip_vision_transformer.1} parent=5 // pred_fallthru
        _
      %p2766 = scmp.le.s32.totalorder 2, %s17
      // Predicated region
      $region57: #{siglip_vision_transformer.1} parent=5 // pred_check
        %p2767 = pneg %p2766
      $region58: #{siglip_vision_transformer.1} parent=5 // pred_check_branch
        %2769 = sbr.rel (%p2767) target = $region60
      $region59: #{siglip_vision_transformer.1} parent=5 // pred_region
        %s2770 = ssub.s32 %s17, 2
        // Predicated region
        $region61: #{siglip_vision_transformer.1} parent=59 // pred_check
          %p2771 = pneg %p219
        $region62: #{siglip_vision_transformer.1} parent=59 // pred_check_branch
          %2773 = sbr.rel (%p2771) target = $region64
        $region63: #{siglip_vision_transformer.1} parent=59 // pred_region
          %s2774 = sand.u32 %s204, 1
          %s2775 = scalar_lea.sflag [#allocation3], %s2774
          %s2776 = sand.u32 %s204, 1
          %s2777 = smul.addr %s2776, 16
          %s2778 = scalar_lea.vmem [#allocation2], %s2777
          %2779 = dma.done %s2775, 256
        $region64: #{siglip_vision_transformer.1} parent=59 // pred_fallthru
          _
      $region60: #{siglip_vision_transformer.1} parent=5 // pred_fallthru
        _
    $region6: #{siglip_vision_transformer.1} parent=1 // loop_footer
      %s21 = sadd.s32 1, %s17
    $region7: #{siglip_vision_transformer.1} parent=1 // loop_footer_branch
      %16 = sbr.rel target = $region3
    $region8: #{siglip_vision_transformer.1} parent=1 // loop_exit
      _
    %2780 = vsyncpa [#allocation3], 1
    %s2781 = scalar_lea.sflag [#allocation3], 1
    %2782 = vsyncpa %s2781, 1

</llo_original>
